<compile_context>
chip_gen: v6e
topology: v6e:2x2x1
jax: 0.10.0
libtpu: 0.0.40
codegen_flags: <defaults>
</compile_context>

<pallas_src>
import functools

import jax
import jax.numpy as jnp
from jax import lax
from jax.experimental import pallas as pl
from jax.experimental.pallas import tpu as pltpu


# --------------------------------------------------------------------------- #
# In-kernel helpers
# --------------------------------------------------------------------------- #

def _im2col(x, out_h, out_w, *, col_off=0):
    """x: (>=out_h+2, >=out_w+col_off+2, c) -> (out_h*out_w, 9*c), tap-major (dy*3+dx)."""
    c = x.shape[-1]
    cols = []
    for dy in range(3):                                    # static unroll
        rows = x[dy:dy + out_h]                            # leading-dim slice: cheap
        for dx in range(3):
            cols.append(rows[:, col_off + dx:col_off + dx + out_w, :])  # (out_h, out_w, c)
    slab = jnp.concatenate(cols, axis=-1)                  # (out_h, out_w, 9*c)
    return slab.reshape(out_h * out_w, 9 * c)


def _unet_up_fused_kernel(x1_ref, x2_ref, w1a_ref, w1b_ref, b1_ref,
                          w2_ref, b2_ref, o_ref):
    # x1_ref : (1, th+4, W+4, C1) bf16   skip connection, 2-pixel zero halo
    # x2_ref : (1, th+4, W+4, C2) bf16   upsampled deep features, 2-pixel zero halo
    # w1a    : (9*C1, Cm) bf16, w1b: (9*C2, Cm) bf16, b1: (1, Cm) f32   (conv1, split)
    # w2     : (9*Cm, Cout) bf16, b2: (1, Cout) f32                     (conv2)
    # o_ref  : (1, th, W, Cout)
    _, th, w, cout = o_ref.shape
    cm = b1_ref.shape[-1]
    th1 = th + 2                                           # conv1 rows incl. conv2 halo

    # ---- conv1 + bias + ReLU on the (th+2, W) halo window; concat fused ----
    p1 = _im2col(x1_ref[0], th1, w, col_off=1)             # (th1*W, 9*C1)
    p2 = _im2col(x2_ref[0], th1, w, col_off=1)             # (th1*W, 9*C2)
    acc1 = jnp.dot(p1, w1a_ref[...], preferred_element_type=jnp.float32)
    acc1 = acc1 + jnp.dot(p2, w1b_ref[...], preferred_element_type=jnp.float32)
    y1 = jnp.maximum(acc1 + b1_ref[...], 0.0).reshape(th1, w, cm)

    # Zero the halo rows that fall outside the image (conv2 zero-pads there).
    row0 = pl.program_id(1) * th - 1                       # global row of local row 0
    h_img = pl.num_programs(1) * th
    rows = lax.broadcasted_iota(jnp.int32, (th1, 1, 1), 0) + row0
    y1 = jnp.where(jnp.logical_and(rows >= 0, rows < h_img), y1, 0.0)

    # Zero-pad one column per side (conv2 SAME padding); back to bf16 for the MXU.
    zcol = jnp.zeros((th1, 1, cm), jnp.float32)
    y1p = jnp.concatenate([zcol, y1, zcol], axis=1).astype(jnp.bfloat16)  # (th1, W+2, Cm)

    # ---- conv2 + bias + ReLU on the VMEM-resident intermediate ----
    p3 = _im2col(y1p, th, w)                               # (th*W, 9*Cm)
    acc2 = jnp.dot(p3, w2_ref[...], preferred_element_type=jnp.float32)
    acc2 = jnp.maximum(acc2 + b2_ref[...], 0.0)
    o_ref[...] = acc2.reshape(1, th, w, cout).astype(o_ref.dtype)


# --------------------------------------------------------------------------- #
# Wrappers
# --------------------------------------------------------------------------- #

_COMPILER_PARAMS = pltpu.CompilerParams(
    dimension_semantics=("parallel", "parallel"),   # batch x row-tiles (2 TCs on v7x)
    vmem_limit_bytes=32 * 1024 * 1024,
)


def _choose_tile_h(h, w, c_in, c_mid, c_out, out_bytes=4):
    """Largest divisor of h whose per-tile VMEM footprint fits ~8 MiB
    (double-buffered bf16 inputs + outputs + in-kernel im2col slabs + y1)."""
    budget = 8 * 1024 * 1024
    per_row = (2 * 2 * (w + 4) * c_in            # double-buffered bf16 input windows
               + 2 * out_bytes * w * c_out       # double-buffered output rows
               + 2 * 9 * w * c_in                # bf16 im2col slab (conv1)
               + (4 + 2) * (w + 2) * c_mid       # f32 y1 + bf16 copy
               + 2 * 9 * w * c_mid               # bf16 im2col slab (conv2)
               + 4 * w * (c_mid + c_out))        # f32 accumulators
    th = max(1, min(h, budget // max(per_row, 1) - 4))
    while h % th:
        th -= 1
    return th


def _halo_in_spec(th, h, w_pad, c):
    """Input window of th+4 rows (2-row halo) on a (N, h+4, w_pad, c) array."""
    if th == h:
        # One tile covers the full (padded) height -> plain blocked spec.
        return pl.BlockSpec((1, h + 4, w_pad, c), lambda ni, hi: (ni, 0, 0, 0))
    # Overlapping row windows: element-offset indexing along H.
    return pl.BlockSpec((1, pl.Element(th + 4), w_pad, c),
                        lambda ni, hi: (ni, hi * th, 0, 0))


def unet_up_fused(x1, x2, params, *, out_dtype=jnp.float32, tile_h=None):
    """relu(conv2(relu(conv1(concat([x1, x2], -1))))), one fused Pallas kernel.

    x1: (N, H, W, C1), x2: (N, H, W, C2)  (cast to bf16 for the MXU)
    params: PyTorch conv layouts w*: (Cout, Cin, 3, 3) f32, b*: (Cout,) f32.
    """
    n, h, w, c1 = x1.shape
    c2 = x2.shape[-1]
    w1, b1, w2, b2 = params["w1"], params["b1"], params["w2"], params["b2"]
    cm = w1.shape[0]                 # out_size (conv1 output channels)
    cout = w2.shape[0]
    th = _choose_tile_h(h, w, c1 + c2, cm, cout) if tile_h is None else tile_h
    assert h % th == 0, (h, th)

    # 2-pixel zero halo; the pad fuses with the NCHW->NHWC transpose + bf16 cast.
    # TODO(synk): zero-fill the halo inside the kernel (edge-tile masking) to drop
    # this extra HBM copy, and fuse the bilinear upsample of x2 in as well.
    x1p = jnp.pad(x1.astype(jnp.bfloat16), ((0, 0), (2, 2), (2, 2), (0, 0)))
    x2p = jnp.pad(x2.astype(jnp.bfloat16), ((0, 0), (2, 2), (2, 2), (0, 0)))

    # conv1 weights split along input channels (concat fusion) + im2col layout.
    w1_hwio = jnp.transpose(w1, (2, 3, 1, 0))              # (3, 3, C1+C2, Cm)
    w1a = w1_hwio[:, :, :c1, :].reshape(9 * c1, cm).astype(jnp.bfloat16)
    w1b = w1_hwio[:, :, c1:, :].reshape(9 * c2, cm).astype(jnp.bfloat16)
    b1r = b1.reshape(1, cm).astype(jnp.float32)
    w2k = jnp.transpose(w2, (2, 3, 1, 0)).reshape(9 * cm, cout).astype(jnp.bfloat16)
    b2r = b2.reshape(1, cout).astype(jnp.float32)

    return pl.pallas_call(
        _unet_up_fused_kernel,
        out_shape=jax.ShapeDtypeStruct((n, h, w, cout), out_dtype),
        grid=(n, h // th),
        in_specs=[
            _halo_in_spec(th, h, w + 4, c1),
            _halo_in_spec(th, h, w + 4, c2),
            pl.BlockSpec((9 * c1, cm), lambda ni, hi: (0, 0)),
            pl.BlockSpec((9 * c2, cm), lambda ni, hi: (0, 0)),
            pl.BlockSpec((1, cm), lambda ni, hi: (0, 0)),
            pl.BlockSpec((9 * cm, cout), lambda ni, hi: (0, 0)),
            pl.BlockSpec((1, cout), lambda ni, hi: (0, 0)),
        ],
        out_specs=pl.BlockSpec((1, th, w, cout), lambda ni, hi: (ni, hi, 0, 0)),
        compiler_params=_COMPILER_PARAMS,
    )(x1p, x2p, w1a, w1b, b1r, w2k, b2r)


def upsample_bilinear_x2_align_corners(x_nhwc):
    """nn.UpsamplingBilinear2d(scale_factor=2), i.e. align_corners=True (NHWC glue)."""
    n, h, w, c = x_nhwc.shape
    ho, wo = 2 * h, 2 * w

    def axis_coords(in_size, out_size):
        if in_size == 1:
            lo = jnp.zeros((out_size,), jnp.int32)
            return lo, lo, jnp.zeros((out_size,), jnp.float32)
        pos = jnp.arange(out_size, dtype=jnp.float32) * (in_size - 1) / (out_size - 1)
        lo = jnp.clip(jnp.floor(pos).astype(jnp.int32), 0, in_size - 2)
        return lo, lo + 1, pos - lo.astype(jnp.float32)

    y0, y1, fy = axis_coords(h, ho)
    x0, x1, fx = axis_coords(w, wo)
    fx_ = fx[None, None, :, None]
    fy_ = fy[None, :, None, None]
    row0 = x_nhwc[:, y0, :, :]
    row1 = x_nhwc[:, y1, :, :]
    top = row0[:, :, x0, :] * (1.0 - fx_) + row0[:, :, x1, :] * fx_
    bot = row1[:, :, x0, :] * (1.0 - fx_) + row1[:, :, x1, :] * fx_
    return top * (1.0 - fy_) + bot * fy_


def unet_up_forward(inputs1_nchw, inputs2_nchw, params, *, tile_h=None):
    """Pallas implementation of unetUp.forward (NCHW in / NCHW out)."""
    x1 = jnp.transpose(inputs1_nchw, (0, 2, 3, 1)).astype(jnp.float32)
    x2 = jnp.transpose(inputs2_nchw, (0, 2, 3, 1)).astype(jnp.float32)
    x2_up = upsample_bilinear_x2_align_corners(x2)          # XLA gather glue
    y = unet_up_fused(x1, x2_up, params, out_dtype=jnp.float32, tile_h=tile_h)
    return jnp.transpose(y, (0, 3, 1, 2))


def unet_up_reference(inputs1_nchw, inputs2_nchw, params):
    """Pure-JAX f32 reference (for correctness checking)."""
    x1 = jnp.transpose(inputs1_nchw, (0, 2, 3, 1)).astype(jnp.float32)
    x2 = jnp.transpose(inputs2_nchw, (0, 2, 3, 1)).astype(jnp.float32)
    x = jnp.concatenate([x1, upsample_bilinear_x2_align_corners(x2)], axis=-1)

    def conv(v, w, b):
        w_hwio = jnp.transpose(w, (2, 3, 1, 0))
        y = lax.conv_general_dilated(v, w_hwio, (1, 1), "SAME",
                                     dimension_numbers=("NHWC", "HWIO", "NHWC"))
        return jnp.maximum(y + b, 0.0)

    x = conv(x, params["w1"], params["b1"])
    x = conv(x, params["w2"], params["b2"])
    return jnp.transpose(x, (0, 3, 1, 2))


def init_params(key, in_size, out_size):
    # Deterministic synthetic weights (shapes match nn.Conv2d in the module).
    k1, k2, k3, k4 = jax.random.split(key, 4)
    return {
        "w1": 0.1 * jax.random.normal(k1, (out_size, in_size, 3, 3), jnp.float32),
        "b1": 0.1 * jax.random.normal(k2, (out_size,), jnp.float32),
        "w2": 0.1 * jax.random.normal(k3, (out_size, out_size, 3, 3), jnp.float32),
        "b2": 0.1 * jax.random.normal(k4, (out_size,), jnp.float32),
    }


if __name__ == "__main__":
    key = jax.random.PRNGKey(0)
    k_in1, k_in2, k_par = jax.random.split(key, 3)

    N, C1, C2, H, W = 2, 4, 4, 16, 16
    in_size, out_size = C1 + C2, 4

    inputs1 = jax.random.normal(k_in1, (N, C1, H, W), jnp.float32)            # skip
    inputs2 = jax.random.normal(k_in2, (N, C2, H // 2, W // 2), jnp.float32)  # deep
    params = init_params(k_par, in_size, out_size)

    # tile_h=8 -> 2 row-tiles per image: exercises the halo-window grid path.
    fwd = jax.jit(functools.partial(unet_up_forward, tile_h=8))
    try:
        out = jax.block_until_ready(fwd(inputs1, inputs2, params))
    except Exception:
        # Fallback: full-height tiles (plain Blocked specs only) in case the
        # element-offset halo windows are unsupported on this jax/libtpu combo.
        fwd = jax.jit(functools.partial(unet_up_forward, tile_h=H))
        out = jax.block_until_ready(fwd(inputs1, inputs2, params))

    assert out.shape == (N, out_size, H, W)
    assert bool(jnp.all(out >= 0.0))                      # ReLU output sanity check

    ref = jax.jit(unet_up_reference)(inputs1, inputs2, params)
    max_err = float(jnp.max(jnp.abs(out - ref)))
    assert max_err < 5e-2, f"kernel vs reference max abs error {max_err}"
    print("KERNEL_OK")
</pallas_src>

<mosaic_0001>
module attributes {stable_mosaic.version = 11 : i64} {
  func.func @_unet_up_fused_kernel(%arg0: i32, %arg1: i32, %arg2: memref<1x20x20x4xbf16, #tpu.memory_space<vmem>>, %arg3: memref<1x20x20x4xbf16, #tpu.memory_space<vmem>>, %arg4: memref<36x4xbf16, #tpu.memory_space<vmem>>, %arg5: memref<36x4xbf16, #tpu.memory_space<vmem>>, %arg6: memref<1x4xf32, #tpu.memory_space<vmem>>, %arg7: memref<36x4xbf16, #tpu.memory_space<vmem>>, %arg8: memref<1x4xf32, #tpu.memory_space<vmem>>, %arg9: memref<1x16x16x4xf32, #tpu.memory_space<vmem>>) attributes {dimension_semantics = [#tpu.dimension_semantics<parallel>, #tpu.dimension_semantics<parallel>], iteration_bounds = array<i64: 2, 1>, scalar_prefetch = 0 : i64, scratch_operands = 0 : i64, tpu.core_type = #tpu.core_type<tc>, window_params = [{transform_indices = @transform_0, window_bounds = array<i64: 1, 20, 20, 4>}, {transform_indices = @transform_1, window_bounds = array<i64: 1, 20, 20, 4>}, {pipeline_mode = #tpu.pipeline_mode<synchronous>, transform_indices = @transform_2, window_bounds = array<i64: 36, 4>}, {pipeline_mode = #tpu.pipeline_mode<synchronous>, transform_indices = @transform_3, window_bounds = array<i64: 36, 4>}, {pipeline_mode = #tpu.pipeline_mode<synchronous>, transform_indices = @transform_4, window_bounds = array<i64: 1, 4>}, {pipeline_mode = #tpu.pipeline_mode<synchronous>, transform_indices = @transform_5, window_bounds = array<i64: 36, 4>}, {pipeline_mode = #tpu.pipeline_mode<synchronous>, transform_indices = @transform_6, window_bounds = array<i64: 1, 4>}, {transform_indices = @transform_7, window_bounds = array<i64: 1, 16, 16, 4>}]} {
    %c0 = arith.constant 0 : index
    %c0_0 = arith.constant 0 : index
    %c0_1 = arith.constant 0 : index
    %c0_2 = arith.constant 0 : index
    %0 = vector.load %arg2[%c0, %c0_0, %c0_1, %c0_2] : memref<1x20x20x4xbf16, #tpu.memory_space<vmem>>, vector<1x20x20x4xbf16>
    %1 = vector.shape_cast %0 : vector<1x20x20x4xbf16> to vector<20x20x4xbf16>
    %2 = vector.extract_strided_slice %1 {offsets = [0, 0, 0], sizes = [18, 20, 4], strides = [1, 1, 1]} : vector<20x20x4xbf16> to vector<18x20x4xbf16>
    %3 = vector.extract_strided_slice %2 {offsets = [0, 1, 0], sizes = [18, 16, 4], strides = [1, 1, 1]} : vector<18x20x4xbf16> to vector<18x16x4xbf16>
    %4 = vector.extract_strided_slice %2 {offsets = [0, 2, 0], sizes = [18, 16, 4], strides = [1, 1, 1]} : vector<18x20x4xbf16> to vector<18x16x4xbf16>
    %5 = vector.extract_strided_slice %2 {offsets = [0, 3, 0], sizes = [18, 16, 4], strides = [1, 1, 1]} : vector<18x20x4xbf16> to vector<18x16x4xbf16>
    %6 = vector.extract_strided_slice %1 {offsets = [1, 0, 0], sizes = [18, 20, 4], strides = [1, 1, 1]} : vector<20x20x4xbf16> to vector<18x20x4xbf16>
    %7 = vector.extract_strided_slice %6 {offsets = [0, 1, 0], sizes = [18, 16, 4], strides = [1, 1, 1]} : vector<18x20x4xbf16> to vector<18x16x4xbf16>
    %8 = vector.extract_strided_slice %6 {offsets = [0, 2, 0], sizes = [18, 16, 4], strides = [1, 1, 1]} : vector<18x20x4xbf16> to vector<18x16x4xbf16>
    %9 = vector.extract_strided_slice %6 {offsets = [0, 3, 0], sizes = [18, 16, 4], strides = [1, 1, 1]} : vector<18x20x4xbf16> to vector<18x16x4xbf16>
    %10 = vector.extract_strided_slice %1 {offsets = [2, 0, 0], sizes = [18, 20, 4], strides = [1, 1, 1]} : vector<20x20x4xbf16> to vector<18x20x4xbf16>
    %11 = vector.extract_strided_slice %10 {offsets = [0, 1, 0], sizes = [18, 16, 4], strides = [1, 1, 1]} : vector<18x20x4xbf16> to vector<18x16x4xbf16>
    %12 = vector.extract_strided_slice %10 {offsets = [0, 2, 0], sizes = [18, 16, 4], strides = [1, 1, 1]} : vector<18x20x4xbf16> to vector<18x16x4xbf16>
    %13 = vector.extract_strided_slice %10 {offsets = [0, 3, 0], sizes = [18, 16, 4], strides = [1, 1, 1]} : vector<18x20x4xbf16> to vector<18x16x4xbf16>
    %14 = tpu.concatenate %3, %4, %5, %7, %8, %9, %11, %12, %13 in 2 : vector<18x16x4xbf16>, vector<18x16x4xbf16>, vector<18x16x4xbf16>, vector<18x16x4xbf16>, vector<18x16x4xbf16>, vector<18x16x4xbf16>, vector<18x16x4xbf16>, vector<18x16x4xbf16>, vector<18x16x4xbf16> -> vector<18x16x36xbf16>
    %15 = vector.shape_cast %14 : vector<18x16x36xbf16> to vector<288x36xbf16>
    %c0_3 = arith.constant 0 : index
    %c0_4 = arith.constant 0 : index
    %c0_5 = arith.constant 0 : index
    %c0_6 = arith.constant 0 : index
    %16 = vector.load %arg3[%c0_3, %c0_4, %c0_5, %c0_6] : memref<1x20x20x4xbf16, #tpu.memory_space<vmem>>, vector<1x20x20x4xbf16>
    %17 = vector.shape_cast %16 : vector<1x20x20x4xbf16> to vector<20x20x4xbf16>
    %18 = vector.extract_strided_slice %17 {offsets = [0, 0, 0], sizes = [18, 20, 4], strides = [1, 1, 1]} : vector<20x20x4xbf16> to vector<18x20x4xbf16>
    %19 = vector.extract_strided_slice %18 {offsets = [0, 1, 0], sizes = [18, 16, 4], strides = [1, 1, 1]} : vector<18x20x4xbf16> to vector<18x16x4xbf16>
    %20 = vector.extract_strided_slice %18 {offsets = [0, 2, 0], sizes = [18, 16, 4], strides = [1, 1, 1]} : vector<18x20x4xbf16> to vector<18x16x4xbf16>
    %21 = vector.extract_strided_slice %18 {offsets = [0, 3, 0], sizes = [18, 16, 4], strides = [1, 1, 1]} : vector<18x20x4xbf16> to vector<18x16x4xbf16>
    %22 = vector.extract_strided_slice %17 {offsets = [1, 0, 0], sizes = [18, 20, 4], strides = [1, 1, 1]} : vector<20x20x4xbf16> to vector<18x20x4xbf16>
    %23 = vector.extract_strided_slice %22 {offsets = [0, 1, 0], sizes = [18, 16, 4], strides = [1, 1, 1]} : vector<18x20x4xbf16> to vector<18x16x4xbf16>
    %24 = vector.extract_strided_slice %22 {offsets = [0, 2, 0], sizes = [18, 16, 4], strides = [1, 1, 1]} : vector<18x20x4xbf16> to vector<18x16x4xbf16>
    %25 = vector.extract_strided_slice %22 {offsets = [0, 3, 0], sizes = [18, 16, 4], strides = [1, 1, 1]} : vector<18x20x4xbf16> to vector<18x16x4xbf16>
    %26 = vector.extract_strided_slice %17 {offsets = [2, 0, 0], sizes = [18, 20, 4], strides = [1, 1, 1]} : vector<20x20x4xbf16> to vector<18x20x4xbf16>
    %27 = vector.extract_strided_slice %26 {offsets = [0, 1, 0], sizes = [18, 16, 4], strides = [1, 1, 1]} : vector<18x20x4xbf16> to vector<18x16x4xbf16>
    %28 = vector.extract_strided_slice %26 {offsets = [0, 2, 0], sizes = [18, 16, 4], strides = [1, 1, 1]} : vector<18x20x4xbf16> to vector<18x16x4xbf16>
    %29 = vector.extract_strided_slice %26 {offsets = [0, 3, 0], sizes = [18, 16, 4], strides = [1, 1, 1]} : vector<18x20x4xbf16> to vector<18x16x4xbf16>
    %30 = tpu.concatenate %19, %20, %21, %23, %24, %25, %27, %28, %29 in 2 : vector<18x16x4xbf16>, vector<18x16x4xbf16>, vector<18x16x4xbf16>, vector<18x16x4xbf16>, vector<18x16x4xbf16>, vector<18x16x4xbf16>, vector<18x16x4xbf16>, vector<18x16x4xbf16>, vector<18x16x4xbf16> -> vector<18x16x36xbf16>
    %31 = vector.shape_cast %30 : vector<18x16x36xbf16> to vector<288x36xbf16>
    %c0_7 = arith.constant 0 : index
    %c0_8 = arith.constant 0 : index
    %32 = vector.load %arg4[%c0_7, %c0_8] : memref<36x4xbf16, #tpu.memory_space<vmem>>, vector<36x4xbf16>
    %cst = arith.constant dense<0.000000e+00> : vector<288x4xf32>
    %33 = tpu.matmul %15, %32, %cst {dimension_numbers = #tpu.dot_dimension_numbers<[1], [0], [0], [1], [0, 0, 1, 1], [], []>} : vector<288x36xbf16>, vector<36x4xbf16>, vector<288x4xf32> -> vector<288x4xf32>
    %c0_9 = arith.constant 0 : index
    %c0_10 = arith.constant 0 : index
    %34 = vector.load %arg5[%c0_9, %c0_10] : memref<36x4xbf16, #tpu.memory_space<vmem>>, vector<36x4xbf16>
    %cst_11 = arith.constant dense<0.000000e+00> : vector<288x4xf32>
    %35 = tpu.matmul %31, %34, %cst_11 {dimension_numbers = #tpu.dot_dimension_numbers<[1], [0], [0], [1], [0, 0, 1, 1], [], []>} : vector<288x36xbf16>, vector<36x4xbf16>, vector<288x4xf32> -> vector<288x4xf32>
    %36 = arith.addf %33, %35 : vector<288x4xf32>
    %c0_12 = arith.constant 0 : index
    %c0_13 = arith.constant 0 : index
    %37 = vector.load %arg6[%c0_12, %c0_13] : memref<1x4xf32, #tpu.memory_space<vmem>>, vector<1x4xf32>
    %38 = vector.broadcast %37 : vector<1x4xf32> to vector<288x4xf32>
    %39 = arith.addf %36, %38 : vector<288x4xf32>
    %cst_14 = arith.constant 0.000000e+00 : f32
    %40 = vector.broadcast %cst_14 : f32 to vector<288x4xf32>
    %41 = arith.maximumf %39, %40 : vector<288x4xf32>
    %42 = vector.shape_cast %41 : vector<288x4xf32> to vector<18x16x4xf32>
    %c16_i32 = arith.constant 16 : i32
    %43 = arith.muli %arg1, %c16_i32 : i32
    %c1_i32 = arith.constant 1 : i32
    %44 = arith.subi %43, %c1_i32 : i32
    %45 = tpu.iota {dimensions = array<i32: 0>} : vector<18x1x1xi32>
    %46 = vector.broadcast %44 : i32 to vector<18x1x1xi32>
    %47 = arith.addi %45, %46 : vector<18x1x1xi32>
    %c0_i32 = arith.constant 0 : i32
    %48 = vector.broadcast %c0_i32 : i32 to vector<18x1x1xi32>
    %49 = arith.cmpi sge, %47, %48 : vector<18x1x1xi32>
    %c16_i32_15 = arith.constant 16 : i32
    %50 = vector.broadcast %c16_i32_15 : i32 to vector<18x1x1xi32>
    %51 = arith.cmpi slt, %47, %50 : vector<18x1x1xi32>
    %52 = arith.andi %49, %51 : vector<18x1x1xi1>
    %cst_16 = arith.constant 0.000000e+00 : f32
    %53 = vector.shape_cast %52 : vector<18x1x1xi1> to vector<18x1x1xi1>
    %54 = vector.broadcast %53 : vector<18x1x1xi1> to vector<18x16x4xi1>
    %55 = vector.broadcast %cst_16 : f32 to vector<18x16x4xf32>
    %56 = arith.select %54, %42, %55 : vector<18x16x4xi1>, vector<18x16x4xf32>
    %cst_17 = arith.constant 0.000000e+00 : f32
    %57 = vector.broadcast %cst_17 : f32 to vector<18x1x4xf32>
    %58 = tpu.concatenate %57, %56, %57 in 1 : vector<18x1x4xf32>, vector<18x16x4xf32>, vector<18x1x4xf32> -> vector<18x18x4xf32>
    %59 = arith.truncf %58 : vector<18x18x4xf32> to vector<18x18x4xbf16>
    %60 = vector.extract_strided_slice %59 {offsets = [0, 0, 0], sizes = [16, 18, 4], strides = [1, 1, 1]} : vector<18x18x4xbf16> to vector<16x18x4xbf16>
    %61 = vector.extract_strided_slice %60 {offsets = [0, 0, 0], sizes = [16, 16, 4], strides = [1, 1, 1]} : vector<16x18x4xbf16> to vector<16x16x4xbf16>
    %62 = vector.extract_strided_slice %60 {offsets = [0, 1, 0], sizes = [16, 16, 4], strides = [1, 1, 1]} : vector<16x18x4xbf16> to vector<16x16x4xbf16>
    %63 = vector.extract_strided_slice %60 {offsets = [0, 2, 0], sizes = [16, 16, 4], strides = [1, 1, 1]} : vector<16x18x4xbf16> to vector<16x16x4xbf16>
    %64 = vector.extract_strided_slice %59 {offsets = [1, 0, 0], sizes = [16, 18, 4], strides = [1, 1, 1]} : vector<18x18x4xbf16> to vector<16x18x4xbf16>
    %65 = vector.extract_strided_slice %64 {offsets = [0, 0, 0], sizes = [16, 16, 4], strides = [1, 1, 1]} : vector<16x18x4xbf16> to vector<16x16x4xbf16>
    %66 = vector.extract_strided_slice %64 {offsets = [0, 1, 0], sizes = [16, 16, 4], strides = [1, 1, 1]} : vector<16x18x4xbf16> to vector<16x16x4xbf16>
    %67 = vector.extract_strided_slice %64 {offsets = [0, 2, 0], sizes = [16, 16, 4], strides = [1, 1, 1]} : vector<16x18x4xbf16> to vector<16x16x4xbf16>
    %68 = vector.extract_strided_slice %59 {offsets = [2, 0, 0], sizes = [16, 18, 4], strides = [1, 1, 1]} : vector<18x18x4xbf16> to vector<16x18x4xbf16>
    %69 = vector.extract_strided_slice %68 {offsets = [0, 0, 0], sizes = [16, 16, 4], strides = [1, 1, 1]} : vector<16x18x4xbf16> to vector<16x16x4xbf16>
    %70 = vector.extract_strided_slice %68 {offsets = [0, 1, 0], sizes = [16, 16, 4], strides = [1, 1, 1]} : vector<16x18x4xbf16> to vector<16x16x4xbf16>
    %71 = vector.extract_strided_slice %68 {offsets = [0, 2, 0], sizes = [16, 16, 4], strides = [1, 1, 1]} : vector<16x18x4xbf16> to vector<16x16x4xbf16>
    %72 = tpu.concatenate %61, %62, %63, %65, %66, %67, %69, %70, %71 in 2 : vector<16x16x4xbf16>, vector<16x16x4xbf16>, vector<16x16x4xbf16>, vector<16x16x4xbf16>, vector<16x16x4xbf16>, vector<16x16x4xbf16>, vector<16x16x4xbf16>, vector<16x16x4xbf16>, vector<16x16x4xbf16> -> vector<16x16x36xbf16>
    %73 = vector.shape_cast %72 : vector<16x16x36xbf16> to vector<256x36xbf16>
    %c0_18 = arith.constant 0 : index
    %c0_19 = arith.constant 0 : index
    %74 = vector.load %arg7[%c0_18, %c0_19] : memref<36x4xbf16, #tpu.memory_space<vmem>>, vector<36x4xbf16>
    %cst_20 = arith.constant dense<0.000000e+00> : vector<256x4xf32>
    %75 = tpu.matmul %73, %74, %cst_20 {dimension_numbers = #tpu.dot_dimension_numbers<[1], [0], [0], [1], [0, 0, 1, 1], [], []>} : vector<256x36xbf16>, vector<36x4xbf16>, vector<256x4xf32> -> vector<256x4xf32>
    %c0_21 = arith.constant 0 : index
    %c0_22 = arith.constant 0 : index
    %76 = vector.load %arg8[%c0_21, %c0_22] : memref<1x4xf32, #tpu.memory_space<vmem>>, vector<1x4xf32>
    %77 = vector.broadcast %76 : vector<1x4xf32> to vector<256x4xf32>
    %78 = arith.addf %75, %77 : vector<256x4xf32>
    %cst_23 = arith.constant 0.000000e+00 : f32
    %79 = vector.broadcast %cst_23 : f32 to vector<256x4xf32>
    %80 = arith.maximumf %78, %79 : vector<256x4xf32>
    %81 = vector.shape_cast %80 : vector<256x4xf32> to vector<1x16x16x4xf32>
    %c0_24 = arith.constant 0 : index
    %c0_25 = arith.constant 0 : index
    %c0_26 = arith.constant 0 : index
    %c0_27 = arith.constant 0 : index
    %82 = vector.load %arg9[%c0_24, %c0_25, %c0_26, %c0_27] : memref<1x16x16x4xf32, #tpu.memory_space<vmem>>, vector<1x16x16x4xf32>
    tpu.vector_store %arg9[%c0_24, %c0_25, %c0_26, %c0_27], %81 {strides = array<i32>} : memref<1x16x16x4xf32, #tpu.memory_space<vmem>>, vector<1x16x16x4xf32>,
    return
  }
  func.func @transform_0(%arg0: i32, %arg1: i32) -> (i32, i32, i32, i32) {
    %c0_i32 = arith.constant 0 : i32
    %c0_i32_0 = arith.constant 0 : i32
    %c0_i32_1 = arith.constant 0 : i32
    %c0_i32_2 = arith.constant 0 : i32
    return %arg0, %c0_i32, %c0_i32_0, %c0_i32_1 : i32, i32, i32, i32
  }
  func.func @transform_1(%arg0: i32, %arg1: i32) -> (i32, i32, i32, i32) {
    %c0_i32 = arith.constant 0 : i32
    %c0_i32_0 = arith.constant 0 : i32
    %c0_i32_1 = arith.constant 0 : i32
    %c0_i32_2 = arith.constant 0 : i32
    return %arg0, %c0_i32, %c0_i32_0, %c0_i32_1 : i32, i32, i32, i32
  }
  func.func @transform_2(%arg0: i32, %arg1: i32) -> (i32, i32) {
    %c0_i32 = arith.constant 0 : i32
    %c0_i32_0 = arith.constant 0 : i32
    %c0_i32_1 = arith.constant 0 : i32
    return %c0_i32, %c0_i32_0 : i32, i32
  }
  func.func @transform_3(%arg0: i32, %arg1: i32) -> (i32, i32) {
    %c0_i32 = arith.constant 0 : i32
    %c0_i32_0 = arith.constant 0 : i32
    %c0_i32_1 = arith.constant 0 : i32
    return %c0_i32, %c0_i32_0 : i32, i32
  }
  func.func @transform_4(%arg0: i32, %arg1: i32) -> (i32, i32) {
    %c0_i32 = arith.constant 0 : i32
    %c0_i32_0 = arith.constant 0 : i32
    %c0_i32_1 = arith.constant 0 : i32
    return %c0_i32, %c0_i32_0 : i32, i32
  }
  func.func @transform_5(%arg0: i32, %arg1: i32) -> (i32, i32) {
    %c0_i32 = arith.constant 0 : i32
    %c0_i32_0 = arith.constant 0 : i32
    %c0_i32_1 = arith.constant 0 : i32
    return %c0_i32, %c0_i32_0 : i32, i32
  }
  func.func @transform_6(%arg0: i32, %arg1: i32) -> (i32, i32) {
    %c0_i32 = arith.constant 0 : i32
    %c0_i32_0 = arith.constant 0 : i32
    %c0_i32_1 = arith.constant 0 : i32
    return %c0_i32, %c0_i32_0 : i32, i32
  }
  func.func @transform_7(%arg0: i32, %arg1: i32) -> (i32, i32, i32, i32) {
    %c0_i32 = arith.constant 0 : i32
    %c0_i32_0 = arith.constant 0 : i32
    %c0_i32_1 = arith.constant 0 : i32
    return %arg0, %arg1, %c0_i32, %c0_i32_0 : i32, i32, i32, i32
  }
}

</mosaic_0001>

<llo_original>
// kernel: unet_up_forward.1
$region0: #{unet_up_forward.1}
  #allocation0 [shape = 'u32[]', space=smem, size = 0x4, offset = 0x4, fixed_abs, tag = 'smem constant byte address 0x4 - core index']
  #allocation1 [shape = 'u32[144,128]{1,0:T(1,128)}', space=vmem, size = 0x12000, scoped, tag = 'internal scratch']
  %s0 = inlined_call_operand.vmem [shape: bf16[2,20,20,4], index: 0, kind: input, shape index: {}]
  %s1 = inlined_call_operand.vmem [shape: bf16[2,20,20,4], index: 1, kind: input, shape index: {}]
  %s2 = inlined_call_operand.vmem [shape: bf16[36,4], index: 2, kind: input, shape index: {}]
  %s3 = inlined_call_operand.vmem [shape: bf16[36,4], index: 3, kind: input, shape index: {}]
  %s4 = inlined_call_operand.vmem [shape: f32[1,4], index: 4, kind: input, shape index: {}]
  %s5 = inlined_call_operand.vmem [shape: bf16[36,4], index: 5, kind: input, shape index: {}]
  %s6 = inlined_call_operand.vmem [shape: f32[1,4], index: 6, kind: input, shape index: {}]
  %s7 = inlined_call_operand.vmem [shape: f32[2,16,16,4], index: 7, kind: output, shape index: {}]
  %s8 = sld [smem:[#allocation0]]
  $region61: #{unet_up_forward.1} parent=0
    _
  %s10 = ssub.s32 1, %s8
  %s11 = scalar_select 0, %s10, %s8
  loop: start=0, step=1, limit=4
  $region2: #{unet_up_forward.1} parent=0 // loop_pre_header
    _
  $region3: #{unet_up_forward.1} parent=0 // loop_header
    %s13 = sphi 0, %s17
    %p14 = scmp.ge.s32.totalorder %s13, 4
    %s20 = sphi 0, %s32
    %s21 = sphi 0, %s28
    %s22 = sphi 0, %s20
    %s23 = sphi 0, %s21
    %s24 = sphi 0, %s22
    %s25 = sphi 0, %s23
    %s35 = sphi 0, %s37
    %s38 = sphi 0, %s35
    %s39 = sphi 0, %s38
    %s55 = sphi 0, %s39
    %s61 = sphi 0, %s63
    %s64 = sphi 0, %s61
    %s65 = sphi 0, %s64
    %s81 = sphi 0, %s65
    %s85 = sphi 0, %s85
    %s87 = sphi 0, %s85
    %s88 = sphi 0, %s87
    %s102 = sphi 0, %s88
    %s106 = sphi 0, %s106
    %s108 = sphi 0, %s106
    %s109 = sphi 0, %s108
    %s123 = sphi 0, %s109
    %s127 = sphi 0, %s127
    %s129 = sphi 0, %s127
    %s130 = sphi 0, %s129
    %s144 = sphi 0, %s130
    %s148 = sphi 0, %s148
    %s150 = sphi 0, %s148
    %s151 = sphi 0, %s150
    %s165 = sphi 0, %s151
    %s169 = sphi 0, %s169
    %s171 = sphi 0, %s169
    %s172 = sphi 0, %s171
    %s186 = sphi 0, %s172
    %s194 = sphi 0, %s196
    %s197 = sphi 0, %s194
    %s198 = sphi 0, %s197
    %s214 = sphi 0, %s198
  $region4: #{unet_up_forward.1} parent=0 // loop_header_branch
    %16 = sbr.rel (%p14) target = $region8
  $region5: #{unet_up_forward.1} parent=0 // loop_body
    %s18 = ssub.s32 %s13, 1
    %s19 = ssub.s32 %s13, 2
    %s26 = sadd.s32 1, %s21
    %p27 = scmp.ge.s32.totalorder %s26, 1
    %s28 = scalar_select %p27, 0, %s26
    %s29 = sadd.s32 1, %s20
    %s30 = scalar_select %p27, %s29, %s20
    %p31 = scmp.ge.s32.totalorder %s30, 2
    %s32 = scalar_select %p31, 0, %s30
    %s33 = ssub.s32 %s20, %s32
    %p34 = scmp.eq.s32.totalorder %s33, 0
    %s36 = sadd.s32 %s35, 1
    %s37 = scalar_select %p34, %s35, %s36
    %p40 = pneg %p34
    %p41 = scmp.eq.s32.totalorder %s13, 1
    %p42 = por %p40, %p41
    %p43 = scmp.ne.s32.totalorder %s35, %s38
    %p44 = scmp.eq.s32.totalorder %s13, 0
    %p45 = por %p43, %p44
    %p46 = scmp.ne.s32.totalorder %s35, %s38
    %p47 = scmp.eq.s32.totalorder %s18, 1
    %p48 = por %p46, %p47
    %p49 = scmp.ne.s32.totalorder %s38, %s39
    %p50 = scmp.eq.s32.totalorder %s18, 0
    %p51 = por %p49, %p50
    %p52 = scmp.ne.s32.totalorder %s38, %s39
    %p53 = scmp.eq.s32.totalorder %s19, 1
    %p54 = por %p52, %p53
    %p56 = scmp.ne.s32.totalorder %s39, %s55
    %p57 = scmp.eq.s32.totalorder %s19, 0
    %p58 = por %p56, %p57
    %s59 = ssub.s32 %s20, %s32
    %p60 = scmp.eq.s32.totalorder %s59, 0
    %s62 = sadd.s32 %s61, 1
    %s63 = scalar_select %p60, %s61, %s62
    %p66 = pneg %p60
    %p67 = scmp.eq.s32.totalorder %s13, 1
    %p68 = por %p66, %p67
    %p69 = scmp.ne.s32.totalorder %s61, %s64
    %p70 = scmp.eq.s32.totalorder %s13, 0
    %p71 = por %p69, %p70
    %p72 = scmp.ne.s32.totalorder %s61, %s64
    %p73 = scmp.eq.s32.totalorder %s18, 1
    %p74 = por %p72, %p73
    %p75 = scmp.ne.s32.totalorder %s64, %s65
    %p76 = scmp.eq.s32.totalorder %s18, 0
    %p77 = por %p75, %p76
    %p78 = scmp.ne.s32.totalorder %s64, %s65
    %p79 = scmp.eq.s32.totalorder %s19, 1
    %p80 = por %p78, %p79
    %p82 = scmp.ne.s32.totalorder %s65, %s81
    %p83 = scmp.eq.s32.totalorder %s19, 0
    %p84 = por %p82, %p83
    %s86 = sadd.s32 %s85, 1
    %p89 = scmp.eq.s32.totalorder %s13, 1
    %p90 = scmp.ne.s32.totalorder %s85, %s87
    %p91 = scmp.eq.s32.totalorder %s13, 0
    %p92 = por %p90, %p91
    %p93 = scmp.ne.s32.totalorder %s85, %s87
    %p94 = scmp.eq.s32.totalorder %s18, 1
    %p95 = por %p93, %p94
    %p96 = scmp.ne.s32.totalorder %s87, %s88
    %p97 = scmp.eq.s32.totalorder %s18, 0
    %p98 = por %p96, %p97
    %p99 = scmp.ne.s32.totalorder %s87, %s88
    %p100 = scmp.eq.s32.totalorder %s19, 1
    %p101 = por %p99, %p100
    %p103 = scmp.ne.s32.totalorder %s88, %s102
    %p104 = scmp.eq.s32.totalorder %s19, 0
    %p105 = por %p103, %p104
    %s107 = sadd.s32 %s106, 1
    %p110 = scmp.eq.s32.totalorder %s13, 1
    %p111 = scmp.ne.s32.totalorder %s106, %s108
    %p112 = scmp.eq.s32.totalorder %s13, 0
    %p113 = por %p111, %p112
    %p114 = scmp.ne.s32.totalorder %s106, %s108
    %p115 = scmp.eq.s32.totalorder %s18, 1
    %p116 = por %p114, %p115
    %p117 = scmp.ne.s32.totalorder %s108, %s109
    %p118 = scmp.eq.s32.totalorder %s18, 0
    %p119 = por %p117, %p118
    %p120 = scmp.ne.s32.totalorder %s108, %s109
    %p121 = scmp.eq.s32.totalorder %s19, 1
    %p122 = por %p120, %p121
    %p124 = scmp.ne.s32.totalorder %s109, %s123
    %p125 = scmp.eq.s32.totalorder %s19, 0
    %p126 = por %p124, %p125
    %s128 = sadd.s32 %s127, 1
    %p131 = scmp.eq.s32.totalorder %s13, 1
    %p132 = scmp.ne.s32.totalorder %s127, %s129
    %p133 = scmp.eq.s32.totalorder %s13, 0
    %p134 = por %p132, %p133
    %p135 = scmp.ne.s32.totalorder %s127, %s129
    %p136 = scmp.eq.s32.totalorder %s18, 1
    %p137 = por %p135, %p136
    %p138 = scmp.ne.s32.totalorder %s129, %s130
    %p139 = scmp.eq.s32.totalorder %s18, 0
    %p140 = por %p138, %p139
    %p141 = scmp.ne.s32.totalorder %s129, %s130
    %p142 = scmp.eq.s32.totalorder %s19, 1
    %p143 = por %p141, %p142
    %p145 = scmp.ne.s32.totalorder %s130, %s144
    %p146 = scmp.eq.s32.totalorder %s19, 0
    %p147 = por %p145, %p146
    %s149 = sadd.s32 %s148, 1
    %p152 = scmp.eq.s32.totalorder %s13, 1
    %p153 = scmp.ne.s32.totalorder %s148, %s150
    %p154 = scmp.eq.s32.totalorder %s13, 0
    %p155 = por %p153, %p154
    %p156 = scmp.ne.s32.totalorder %s148, %s150
    %p157 = scmp.eq.s32.totalorder %s18, 1
    %p158 = por %p156, %p157
    %p159 = scmp.ne.s32.totalorder %s150, %s151
    %p160 = scmp.eq.s32.totalorder %s18, 0
    %p161 = por %p159, %p160
    %p162 = scmp.ne.s32.totalorder %s150, %s151
    %p163 = scmp.eq.s32.totalorder %s19, 1
    %p164 = por %p162, %p163
    %p166 = scmp.ne.s32.totalorder %s151, %s165
    %p167 = scmp.eq.s32.totalorder %s19, 0
    %p168 = por %p166, %p167
    %s170 = sadd.s32 %s169, 1
    %p173 = scmp.eq.s32.totalorder %s13, 1
    %p174 = scmp.ne.s32.totalorder %s169, %s171
    %p175 = scmp.eq.s32.totalorder %s13, 0
    %p176 = por %p174, %p175
    %p177 = scmp.ne.s32.totalorder %s169, %s171
    %p178 = scmp.eq.s32.totalorder %s18, 1
    %p179 = por %p177, %p178
    %p180 = scmp.ne.s32.totalorder %s171, %s172
    %p181 = scmp.eq.s32.totalorder %s18, 0
    %p182 = por %p180, %p181
    %p183 = scmp.ne.s32.totalorder %s171, %s172
    %p184 = scmp.eq.s32.totalorder %s19, 1
    %p185 = por %p183, %p184
    %p187 = scmp.ne.s32.totalorder %s172, %s186
    %p188 = scmp.eq.s32.totalorder %s19, 0
    %p189 = por %p187, %p188
    %s190 = ssub.s32 %s20, %s32
    %s191 = ssub.s32 %s21, %s28
    %s192 = sor.u32 %s190, %s191
    %p193 = scmp.eq.s32.totalorder %s192, 0
    %s195 = sadd.s32 %s194, 1
    %s196 = scalar_select %p193, %s194, %s195
    %p199 = pneg %p193
    %p200 = scmp.eq.s32.totalorder %s13, 1
    %p201 = por %p199, %p200
    %p202 = scmp.ne.s32.totalorder %s194, %s197
    %p203 = scmp.eq.s32.totalorder %s13, 0
    %p204 = por %p202, %p203
    %p205 = scmp.ne.s32.totalorder %s194, %s197
    %p206 = scmp.eq.s32.totalorder %s18, 1
    %p207 = por %p205, %p206
    %p208 = scmp.ne.s32.totalorder %s197, %s198
    %p209 = scmp.eq.s32.totalorder %s18, 0
    %p210 = por %p208, %p209
    %p211 = scmp.ne.s32.totalorder %s197, %s198
    %p212 = scmp.eq.s32.totalorder %s19, 1
    %p213 = por %p211, %p212
    %p215 = scmp.ne.s32.totalorder %s198, %s214
    %p216 = scmp.eq.s32.totalorder %s19, 0
    %p217 = por %p215, %p216
    %p218 = scmp.le.s32.totalorder 1, %s13
    %p219 = scmp.lt.s32.totalorder %s13, 3
    %p220 = pnand %p218, %p219
    %p221 = pneg %p220
    // Predicated region
    $region9: #{unet_up_forward.1} parent=5 // pred_check
      _
    $region10: #{unet_up_forward.1} parent=5 // pred_check_branch
      %223 = sbr.rel (%p220) target = $region12
    $region11: #{unet_up_forward.1} parent=5 // pred_region
      %s224 = ssub.s32 %s13, 1
      // Predicated region
      $region13: #{unet_up_forward.1} parent=11 // pred_check
        %p225 = pneg %p98
      $region14: #{unet_up_forward.1} parent=11 // pred_check_branch
        %227 = sbr.rel (%p225) target = $region16
      $region15: #{unet_up_forward.1} parent=11 // pred_region
        _
      $region16: #{unet_up_forward.1} parent=11 // pred_fallthru
        _
      // Predicated region
      $region17: #{unet_up_forward.1} parent=11 // pred_check
        %p228 = pneg %p119
      $region18: #{unet_up_forward.1} parent=11 // pred_check_branch
        %230 = sbr.rel (%p228) target = $region20
      $region19: #{unet_up_forward.1} parent=11 // pred_region
        _
      $region20: #{unet_up_forward.1} parent=11 // pred_fallthru
        _
      // Predicated region
      $region21: #{unet_up_forward.1} parent=11 // pred_check
        %p231 = pneg %p140
      $region22: #{unet_up_forward.1} parent=11 // pred_check_branch
        %233 = sbr.rel (%p231) target = $region24
      $region23: #{unet_up_forward.1} parent=11 // pred_region
        _
      $region24: #{unet_up_forward.1} parent=11 // pred_fallthru
        _
      // Predicated region
      $region25: #{unet_up_forward.1} parent=11 // pred_check
        %p234 = pneg %p161
      $region26: #{unet_up_forward.1} parent=11 // pred_check_branch
        %236 = sbr.rel (%p234) target = $region28
      $region27: #{unet_up_forward.1} parent=11 // pred_region
        _
      $region28: #{unet_up_forward.1} parent=11 // pred_fallthru
        _
      // Predicated region
      $region29: #{unet_up_forward.1} parent=11 // pred_check
        %p237 = pneg %p182
      $region30: #{unet_up_forward.1} parent=11 // pred_check_branch
        %239 = sbr.rel (%p237) target = $region32
      $region31: #{unet_up_forward.1} parent=11 // pred_region
        _
      $region32: #{unet_up_forward.1} parent=11 // pred_fallthru
        _
    $region12: #{unet_up_forward.1} parent=5 // pred_fallthru
      _
    %p240 = scmp.lt.s32.totalorder %s13, 2
    // Predicated region
    $region33: #{unet_up_forward.1} parent=5 // pred_check
      %p241 = pneg %p240
    $region34: #{unet_up_forward.1} parent=5 // pred_check_branch
      %243 = sbr.rel (%p241) target = $region36
    $region35: #{unet_up_forward.1} parent=5 // pred_region
      // Predicated region
      $region37: #{unet_up_forward.1} parent=35 // pred_check
        %p244 = pneg %p45
      $region38: #{unet_up_forward.1} parent=35 // pred_check_branch
        %246 = sbr.rel (%p244) target = $region40
      $region39: #{unet_up_forward.1} parent=35 // pred_region
        %p247 = scmp.lt.s32.totalorder %s20, 1
        %s248 = scalar_select %p247, %s20, 1
        %s249 = smul.addr %s248, 60
        %s250 = smul.addr %s249, 4
        %s251 = scalar_lea.vmem %s0, %s250
      $region40: #{unet_up_forward.1} parent=35 // pred_fallthru
        _
      // Predicated region
      $region41: #{unet_up_forward.1} parent=35 // pred_check
        %p252 = pneg %p71
      $region42: #{unet_up_forward.1} parent=35 // pred_check_branch
        %254 = sbr.rel (%p252) target = $region44
      $region43: #{unet_up_forward.1} parent=35 // pred_region
        %p255 = scmp.lt.s32.totalorder %s20, 1
        %s256 = scalar_select %p255, %s20, 1
        %s257 = smul.addr %s256, 60
        %s258 = smul.addr %s257, 4
        %s259 = scalar_lea.vmem %s1, %s258
      $region44: #{unet_up_forward.1} parent=35 // pred_fallthru
        _
    $region36: #{unet_up_forward.1} parent=5 // pred_fallthru
      _
    %p260 = scmp.le.s32.totalorder 1, %s13
    %p261 = scmp.lt.s32.totalorder %s13, 3
    %p262 = pnand %p260, %p261
    %p263 = pneg %p262
    // Predicated region
    $region45: #{unet_up_forward.1} parent=5 // pred_check
      _
    $region46: #{unet_up_forward.1} parent=5 // pred_check_branch
      %265 = sbr.rel (%p262) target = $region48
    $region47: #{unet_up_forward.1} parent=5 // pred_region
      %s266 = ssub.s32 %s13, 1
      %p267 = scmp.lt.s32.totalorder %s22, 1
      %s268 = scalar_select %p267, %s22, 1
      %s269 = smul.addr %s268, 60
      %s270 = smul.addr %s269, 4
      %s271 = scalar_lea.vmem %s0, %s270
      %p272 = pneg %p51
      %p273 = pneg %p48
      %p274 = scmp.lt.s32.totalorder %s22, 1
      %s275 = scalar_select %p274, %s22, 1
      %s276 = smul.addr %s275, 60
      %s277 = smul.addr %s276, 4
      %s278 = scalar_lea.vmem %s1, %s277
      %p279 = pneg %p77
      %p280 = pneg %p74
      %p281 = pneg %p98
      %p282 = pneg %p95
      %p283 = pneg %p119
      %p284 = pneg %p116
      %p285 = pneg %p140
      %p286 = pneg %p137
      %p287 = pneg %p161
      %p288 = pneg %p158
      %p289 = pneg %p182
      %p290 = pneg %p179
      %p291 = pneg %p210
      %p292 = pneg %p207
      %s293 = smul.u32 16, %s23
      %p294 = scmp.lt.s32.totalorder %s22, 1
      %s295 = scalar_select %p294, %s22, 1
      %p296 = scmp.lt.s32.totalorder %s293, 15
      %s297 = scalar_select %p296, %s293, 15
      %s298 = smul.addr %s297, 2
      %s299 = smul.addr %s295, 32
      %s300 = sadd.s32 %s298, %s299
      %s301 = smul.addr %s300, 8
      %s302 = scalar_lea.vmem %s7, %s301
      %p303 = scmp.lt.s32.totalorder %s22, 1
      %s304 = scalar_select %p303, %s22, 1
      %s305 = smul.addr %s304, 60
      %s306 = smul.addr %s305, 4
      %s307 = scalar_lea.vmem %s0, %s306
      %p308 = scmp.lt.s32.totalorder %s22, 1
      %s309 = scalar_select %p308, %s22, 1
      %s310 = smul.addr %s309, 60
      %s311 = smul.addr %s310, 4
      %s312 = scalar_lea.vmem %s1, %s311
      %s313 = smul.u32 16, %s23
      %p314 = scmp.lt.s32.totalorder %s22, 1
      %s315 = scalar_select %p314, %s22, 1
      %p316 = scmp.lt.s32.totalorder %s313, 15
      %s317 = scalar_select %p316, %s313, 15
      %s318 = smul.addr %s317, 2
      %s319 = smul.addr %s315, 32
      %s320 = sadd.s32 %s318, %s319
      %s321 = smul.addr %s320, 8
      %s322 = scalar_lea.vmem %s7, %s321
      %s323 = smul.u32 16, %s23
      %v325 = vld [vmem:[%s307] sm:$0xf]
      %v326 = vld [vmem:[%s307 + $0x4] sm:$0xf]
      %v327 = vld [vmem:[%s307 + $0x8] sm:$0x3]
      %v328 = vld [vmem:[%s307 + $0xc] sm:$0xf]
      %v329 = vld [vmem:[%s307 + $0x10] sm:$0xf]
      %v330 = vld [vmem:[%s307 + $0x14] sm:$0x3]
      %v331 = vld [vmem:[%s307 + $0x18] sm:$0xf]
      %v332 = vld [vmem:[%s307 + $0x1c] sm:$0xf]
      %v333 = vld [vmem:[%s307 + $0x20] sm:$0x3]
      %v334 = vld [vmem:[%s307 + $0x24] sm:$0xf]
      %v335 = vld [vmem:[%s307 + $0x28] sm:$0xf]
      %v336 = vld [vmem:[%s307 + $0x2c] sm:$0x3]
      %v337 = vld [vmem:[%s307 + $0x30] sm:$0xf]
      %v338 = vld [vmem:[%s307 + $0x34] sm:$0xf]
      %v339 = vld [vmem:[%s307 + $0x38] sm:$0x3]
      %v340 = vld [vmem:[%s307 + $0x3c] sm:$0xf]
      %v341 = vld [vmem:[%s307 + $0x40] sm:$0xf]
      %v342 = vld [vmem:[%s307 + $0x44] sm:$0x3]
      %v343 = vld [vmem:[%s307 + $0x48] sm:$0xf]
      %v344 = vld [vmem:[%s307 + $0x4c] sm:$0xf]
      %v345 = vld [vmem:[%s307 + $0x50] sm:$0x3]
      %v346 = vld [vmem:[%s307 + $0x54] sm:$0xf]
      %v347 = vld [vmem:[%s307 + $0x58] sm:$0xf]
      %v348 = vld [vmem:[%s307 + $0x5c] sm:$0x3]
      %v349 = vld [vmem:[%s307 + $0x60] sm:$0xf]
      %v350 = vld [vmem:[%s307 + $0x64] sm:$0xf]
      %v351 = vld [vmem:[%s307 + $0x68] sm:$0x3]
      %v352 = vld [vmem:[%s307 + $0x6c] sm:$0xf]
      %v353 = vld [vmem:[%s307 + $0x70] sm:$0xf]
      %v354 = vld [vmem:[%s307 + $0x74] sm:$0x3]
      %v355 = vld [vmem:[%s307 + $0x78] sm:$0xf]
      %v356 = vld [vmem:[%s307 + $0x7c] sm:$0xf]
      %v357 = vld [vmem:[%s307 + $0x80] sm:$0x3]
      %v358 = vld [vmem:[%s307 + $0x84] sm:$0xf]
      %v359 = vld [vmem:[%s307 + $0x88] sm:$0xf]
      %v360 = vld [vmem:[%s307 + $0x8c] sm:$0x3]
      %v361 = vld [vmem:[%s307 + $0x90] sm:$0xf]
      %v362 = vld [vmem:[%s307 + $0x94] sm:$0xf]
      %v363 = vld [vmem:[%s307 + $0x98] sm:$0x3]
      %v364 = vld [vmem:[%s307 + $0x9c] sm:$0xf]
      %v365 = vld [vmem:[%s307 + $0xa0] sm:$0xf]
      %v366 = vld [vmem:[%s307 + $0xa4] sm:$0x3]
      %v367 = vld [vmem:[%s307 + $0xa8] sm:$0xf]
      %v368 = vld [vmem:[%s307 + $0xac] sm:$0xf]
      %v369 = vld [vmem:[%s307 + $0xb0] sm:$0x3]
      %v370 = vld [vmem:[%s307 + $0xb4] sm:$0xf]
      %v371 = vld [vmem:[%s307 + $0xb8] sm:$0xf]
      %v372 = vld [vmem:[%s307 + $0xbc] sm:$0x3]
      %v373 = vld [vmem:[%s307 + $0xc0] sm:$0xf]
      %v374 = vld [vmem:[%s307 + $0xc4] sm:$0xf]
      %v375 = vld [vmem:[%s307 + $0xc8] sm:$0x3]
      %v376 = vld [vmem:[%s307 + $0xcc] sm:$0xf]
      %v377 = vld [vmem:[%s307 + $0xd0] sm:$0xf]
      %v378 = vld [vmem:[%s307 + $0xd4] sm:$0x3]
      %v379 = vld [vmem:[%s307 + $0xd8] sm:$0xf]
      %v380 = vld [vmem:[%s307 + $0xdc] sm:$0xf]
      %v381 = vld [vmem:[%s307 + $0xe0] sm:$0x3]
      %v382 = vld [vmem:[%s307 + $0xe4] sm:$0xf]
      %v383 = vld [vmem:[%s307 + $0xe8] sm:$0xf]
      %v384 = vld [vmem:[%s307 + $0xec] sm:$0x3]
      %v439 = vunpack.c.l.b16 %v325
      %v440 = vunpack.c.l.b16 %v326
      %v441 = vunpack.c.l.b16 %v327
      %v442 = vunpack.c.l.b16 %v328
      %v443 = vunpack.c.l.b16 %v329
      %v444 = vunpack.c.l.b16 %v330
      %v445 = vunpack.c.l.b16 %v331
      %v446 = vunpack.c.l.b16 %v332
      %v447 = vunpack.c.l.b16 %v333
      %v448 = vunpack.c.l.b16 %v334
      %v449 = vunpack.c.l.b16 %v335
      %v450 = vunpack.c.l.b16 %v336
      %v451 = vunpack.c.l.b16 %v337
      %v452 = vunpack.c.l.b16 %v338
      %v453 = vunpack.c.l.b16 %v339
      %v454 = vunpack.c.l.b16 %v340
      %v455 = vunpack.c.l.b16 %v341
      %v456 = vunpack.c.l.b16 %v342
      %v457 = vunpack.c.l.b16 %v343
      %v458 = vunpack.c.l.b16 %v344
      %v459 = vunpack.c.l.b16 %v345
      %v460 = vunpack.c.l.b16 %v346
      %v461 = vunpack.c.l.b16 %v347
      %v462 = vunpack.c.l.b16 %v348
      %v463 = vunpack.c.l.b16 %v349
      %v464 = vunpack.c.l.b16 %v350
      %v465 = vunpack.c.l.b16 %v351
      %v466 = vunpack.c.l.b16 %v352
      %v467 = vunpack.c.l.b16 %v353
      %v468 = vunpack.c.l.b16 %v354
      %v469 = vunpack.c.l.b16 %v355
      %v470 = vunpack.c.l.b16 %v356
      %v471 = vunpack.c.l.b16 %v357
      %v472 = vunpack.c.l.b16 %v358
      %v473 = vunpack.c.l.b16 %v359
      %v474 = vunpack.c.l.b16 %v360
      %v475 = vunpack.c.l.b16 %v361
      %v476 = vunpack.c.l.b16 %v362
      %v477 = vunpack.c.l.b16 %v363
      %v478 = vunpack.c.l.b16 %v364
      %v479 = vunpack.c.l.b16 %v365
      %v480 = vunpack.c.l.b16 %v366
      %v481 = vunpack.c.l.b16 %v367
      %v482 = vunpack.c.l.b16 %v368
      %v483 = vunpack.c.l.b16 %v369
      %v484 = vunpack.c.l.b16 %v370
      %v485 = vunpack.c.l.b16 %v371
      %v486 = vunpack.c.l.b16 %v372
      %v487 = vunpack.c.l.b16 %v373
      %v488 = vunpack.c.l.b16 %v374
      %v489 = vunpack.c.l.b16 %v375
      %v490 = vunpack.c.l.b16 %v376
      %v491 = vunpack.c.l.b16 %v377
      %v492 = vunpack.c.l.b16 %v378
      %v493 = vpack.c.b16 %v440, %v439
      %v494 = vpack.c.b16 %v441, %v441
      %v495 = vpack.c.b16 %v443, %v442
      %v496 = vpack.c.b16 %v444, %v444
      %v497 = vpack.c.b16 %v446, %v445
      %v498 = vpack.c.b16 %v447, %v447
      %v499 = vpack.c.b16 %v449, %v448
      %v500 = vpack.c.b16 %v450, %v450
      %v501 = vpack.c.b16 %v452, %v451
      %v502 = vpack.c.b16 %v453, %v453
      %v503 = vpack.c.b16 %v455, %v454
      %v504 = vpack.c.b16 %v456, %v456
      %v505 = vpack.c.b16 %v458, %v457
      %v506 = vpack.c.b16 %v459, %v459
      %v507 = vpack.c.b16 %v461, %v460
      %v508 = vpack.c.b16 %v462, %v462
      %v509 = vpack.c.b16 %v464, %v463
      %v510 = vpack.c.b16 %v465, %v465
      %v511 = vpack.c.b16 %v467, %v466
      %v512 = vpack.c.b16 %v468, %v468
      %v513 = vpack.c.b16 %v470, %v469
      %v514 = vpack.c.b16 %v471, %v471
      %v515 = vpack.c.b16 %v473, %v472
      %v516 = vpack.c.b16 %v474, %v474
      %v517 = vpack.c.b16 %v476, %v475
      %v518 = vpack.c.b16 %v477, %v477
      %v519 = vpack.c.b16 %v479, %v478
      %v520 = vpack.c.b16 %v480, %v480
      %v521 = vpack.c.b16 %v482, %v481
      %v522 = vpack.c.b16 %v483, %v483
      %v523 = vpack.c.b16 %v485, %v484
      %v524 = vpack.c.b16 %v486, %v486
      %v525 = vpack.c.b16 %v488, %v487
      %v526 = vpack.c.b16 %v489, %v489
      %v527 = vpack.c.b16 %v491, %v490
      %v528 = vpack.c.b16 %v492, %v492
      %vm529 = vsmask.f32 7424
      %v531 = vshrl.u32 %v493, 16
      %v533 = vshll.u32 %v493, 16
      %v535 = vrot.slane %v533, 1
      %v536 = vor.u32 %v531, %v535
      %v538 = vshll.u32 %v494, 16
      %v540 = vrot.slane %v538, 1
      %v541 = vsel %vm529, %v536, %v540
      %v542 = vshrl.u32 %v494, 16
      %v545 = vshrl.u32 %v495, 16
      %v547 = vshll.u32 %v495, 16
      %v549 = vrot.slane %v547, 1
      %v550 = vor.u32 %v545, %v549
      %v552 = vshll.u32 %v496, 16
      %v554 = vrot.slane %v552, 1
      %v555 = vsel %vm529, %v550, %v554
      %v556 = vshrl.u32 %v496, 16
      %v559 = vshrl.u32 %v497, 16
      %v561 = vshll.u32 %v497, 16
      %v563 = vrot.slane %v561, 1
      %v564 = vor.u32 %v559, %v563
      %v566 = vshll.u32 %v498, 16
      %v568 = vrot.slane %v566, 1
      %v569 = vsel %vm529, %v564, %v568
      %v570 = vshrl.u32 %v498, 16
      %v573 = vshrl.u32 %v499, 16
      %v575 = vshll.u32 %v499, 16
      %v577 = vrot.slane %v575, 1
      %v578 = vor.u32 %v573, %v577
      %v580 = vshll.u32 %v500, 16
      %v582 = vrot.slane %v580, 1
      %v583 = vsel %vm529, %v578, %v582
      %v584 = vshrl.u32 %v500, 16
      %v587 = vshrl.u32 %v501, 16
      %v589 = vshll.u32 %v501, 16
      %v591 = vrot.slane %v589, 1
      %v592 = vor.u32 %v587, %v591
      %v594 = vshll.u32 %v502, 16
      %v596 = vrot.slane %v594, 1
      %v597 = vsel %vm529, %v592, %v596
      %v598 = vshrl.u32 %v502, 16
      %v601 = vshrl.u32 %v503, 16
      %v603 = vshll.u32 %v503, 16
      %v605 = vrot.slane %v603, 1
      %v606 = vor.u32 %v601, %v605
      %v608 = vshll.u32 %v504, 16
      %v610 = vrot.slane %v608, 1
      %v611 = vsel %vm529, %v606, %v610
      %v612 = vshrl.u32 %v504, 16
      %v615 = vshrl.u32 %v505, 16
      %v617 = vshll.u32 %v505, 16
      %v619 = vrot.slane %v617, 1
      %v620 = vor.u32 %v615, %v619
      %v622 = vshll.u32 %v506, 16
      %v624 = vrot.slane %v622, 1
      %v625 = vsel %vm529, %v620, %v624
      %v626 = vshrl.u32 %v506, 16
      %v629 = vshrl.u32 %v507, 16
      %v631 = vshll.u32 %v507, 16
      %v633 = vrot.slane %v631, 1
      %v634 = vor.u32 %v629, %v633
      %v636 = vshll.u32 %v508, 16
      %v638 = vrot.slane %v636, 1
      %v639 = vsel %vm529, %v634, %v638
      %v640 = vshrl.u32 %v508, 16
      %v643 = vshrl.u32 %v509, 16
      %v645 = vshll.u32 %v509, 16
      %v647 = vrot.slane %v645, 1
      %v648 = vor.u32 %v643, %v647
      %v650 = vshll.u32 %v510, 16
      %v652 = vrot.slane %v650, 1
      %v653 = vsel %vm529, %v648, %v652
      %v654 = vshrl.u32 %v510, 16
      %v657 = vshrl.u32 %v511, 16
      %v659 = vshll.u32 %v511, 16
      %v661 = vrot.slane %v659, 1
      %v662 = vor.u32 %v657, %v661
      %v664 = vshll.u32 %v512, 16
      %v666 = vrot.slane %v664, 1
      %v667 = vsel %vm529, %v662, %v666
      %v668 = vshrl.u32 %v512, 16
      %v671 = vshrl.u32 %v513, 16
      %v673 = vshll.u32 %v513, 16
      %v675 = vrot.slane %v673, 1
      %v676 = vor.u32 %v671, %v675
      %v678 = vshll.u32 %v514, 16
      %v680 = vrot.slane %v678, 1
      %v681 = vsel %vm529, %v676, %v680
      %v682 = vshrl.u32 %v514, 16
      %v685 = vshrl.u32 %v515, 16
      %v687 = vshll.u32 %v515, 16
      %v689 = vrot.slane %v687, 1
      %v690 = vor.u32 %v685, %v689
      %v692 = vshll.u32 %v516, 16
      %v694 = vrot.slane %v692, 1
      %v695 = vsel %vm529, %v690, %v694
      %v696 = vshrl.u32 %v516, 16
      %v699 = vshrl.u32 %v517, 16
      %v701 = vshll.u32 %v517, 16
      %v703 = vrot.slane %v701, 1
      %v704 = vor.u32 %v699, %v703
      %v706 = vshll.u32 %v518, 16
      %v708 = vrot.slane %v706, 1
      %v709 = vsel %vm529, %v704, %v708
      %v710 = vshrl.u32 %v518, 16
      %v713 = vshrl.u32 %v519, 16
      %v715 = vshll.u32 %v519, 16
      %v717 = vrot.slane %v715, 1
      %v718 = vor.u32 %v713, %v717
      %v720 = vshll.u32 %v520, 16
      %v722 = vrot.slane %v720, 1
      %v723 = vsel %vm529, %v718, %v722
      %v724 = vshrl.u32 %v520, 16
      %v727 = vshrl.u32 %v521, 16
      %v729 = vshll.u32 %v521, 16
      %v731 = vrot.slane %v729, 1
      %v732 = vor.u32 %v727, %v731
      %v734 = vshll.u32 %v522, 16
      %v736 = vrot.slane %v734, 1
      %v737 = vsel %vm529, %v732, %v736
      %v738 = vshrl.u32 %v522, 16
      %v741 = vshrl.u32 %v523, 16
      %v743 = vshll.u32 %v523, 16
      %v745 = vrot.slane %v743, 1
      %v746 = vor.u32 %v741, %v745
      %v748 = vshll.u32 %v524, 16
      %v750 = vrot.slane %v748, 1
      %v751 = vsel %vm529, %v746, %v750
      %v752 = vshrl.u32 %v524, 16
      %v755 = vshrl.u32 %v525, 16
      %v757 = vshll.u32 %v525, 16
      %v759 = vrot.slane %v757, 1
      %v760 = vor.u32 %v755, %v759
      %v762 = vshll.u32 %v526, 16
      %v764 = vrot.slane %v762, 1
      %v765 = vsel %vm529, %v760, %v764
      %v766 = vshrl.u32 %v526, 16
      %v769 = vshrl.u32 %v527, 16
      %v771 = vshll.u32 %v527, 16
      %v773 = vrot.slane %v771, 1
      %v774 = vor.u32 %v769, %v773
      %v776 = vshll.u32 %v528, 16
      %v778 = vrot.slane %v776, 1
      %v779 = vsel %vm529, %v774, %v778
      %v780 = vshrl.u32 %v528, 16
      %782 = vrot.lane.b32.xlu0 %v541, 4
      %v783 = vpop.permute.xlu0 %782
      %784 = vrot.lane.b32.xlu0 %v542, 4
      %v785 = vpop.permute.xlu0 %784
      %786 = vrot.lane.b32.xlu0 %v555, 4
      %v787 = vpop.permute.xlu0 %786
      %788 = vrot.lane.b32.xlu0 %v556, 4
      %v789 = vpop.permute.xlu0 %788
      %790 = vrot.lane.b32.xlu0 %v569, 4
      %v791 = vpop.permute.xlu0 %790
      %792 = vrot.lane.b32.xlu0 %v570, 4
      %v793 = vpop.permute.xlu0 %792
      %794 = vrot.lane.b32.xlu0 %v583, 4
      %v795 = vpop.permute.xlu0 %794
      %796 = vrot.lane.b32.xlu0 %v584, 4
      %v797 = vpop.permute.xlu0 %796
      %798 = vrot.lane.b32.xlu0 %v597, 4
      %v799 = vpop.permute.xlu0 %798
      %800 = vrot.lane.b32.xlu0 %v598, 4
      %v801 = vpop.permute.xlu0 %800
      %802 = vrot.lane.b32.xlu0 %v611, 4
      %v803 = vpop.permute.xlu0 %802
      %804 = vrot.lane.b32.xlu0 %v612, 4
      %v805 = vpop.permute.xlu0 %804
      %806 = vrot.lane.b32.xlu0 %v625, 4
      %v807 = vpop.permute.xlu0 %806
      %808 = vrot.lane.b32.xlu0 %v626, 4
      %v809 = vpop.permute.xlu0 %808
      %810 = vrot.lane.b32.xlu0 %v639, 4
      %v811 = vpop.permute.xlu0 %810
      %812 = vrot.lane.b32.xlu0 %v640, 4
      %v813 = vpop.permute.xlu0 %812
      %814 = vrot.lane.b32.xlu0 %v653, 4
      %v815 = vpop.permute.xlu0 %814
      %816 = vrot.lane.b32.xlu0 %v654, 4
      %v817 = vpop.permute.xlu0 %816
      %818 = vrot.lane.b32.xlu0 %v667, 4
      %v819 = vpop.permute.xlu0 %818
      %820 = vrot.lane.b32.xlu0 %v668, 4
      %v821 = vpop.permute.xlu0 %820
      %822 = vrot.lane.b32.xlu0 %v681, 4
      %v823 = vpop.permute.xlu0 %822
      %824 = vrot.lane.b32.xlu0 %v682, 4
      %v825 = vpop.permute.xlu0 %824
      %826 = vrot.lane.b32.xlu0 %v695, 4
      %v827 = vpop.permute.xlu0 %826
      %828 = vrot.lane.b32.xlu0 %v696, 4
      %v829 = vpop.permute.xlu0 %828
      %830 = vrot.lane.b32.xlu0 %v709, 4
      %v831 = vpop.permute.xlu0 %830
      %832 = vrot.lane.b32.xlu0 %v710, 4
      %v833 = vpop.permute.xlu0 %832
      %834 = vrot.lane.b32.xlu0 %v723, 4
      %v835 = vpop.permute.xlu0 %834
      %836 = vrot.lane.b32.xlu0 %v724, 4
      %v837 = vpop.permute.xlu0 %836
      %838 = vrot.lane.b32.xlu0 %v737, 4
      %v839 = vpop.permute.xlu0 %838
      %840 = vrot.lane.b32.xlu0 %v738, 4
      %v841 = vpop.permute.xlu0 %840
      %842 = vrot.lane.b32.xlu0 %v751, 4
      %v843 = vpop.permute.xlu0 %842
      %844 = vrot.lane.b32.xlu0 %v752, 4
      %v845 = vpop.permute.xlu0 %844
      %846 = vrot.lane.b32.xlu0 %v765, 4
      %v847 = vpop.permute.xlu0 %846
      %848 = vrot.lane.b32.xlu0 %v766, 4
      %v849 = vpop.permute.xlu0 %848
      %850 = vrot.lane.b32.xlu0 %v779, 4
      %v851 = vpop.permute.xlu0 %850
      %852 = vrot.lane.b32.xlu0 %v780, 4
      %v853 = vpop.permute.xlu0 %852
      %vm854 = vcmask 1046528
      %v855 = vrot.slane %v493, 1
      %v856 = vrot.slane %v494, 1
      %v857 = vsel %vm854, %v855, %v856
      %v858 = vrot.slane %v495, 1
      %v859 = vrot.slane %v496, 1
      %v860 = vsel %vm854, %v858, %v859
      %v861 = vrot.slane %v497, 1
      %v862 = vrot.slane %v498, 1
      %v863 = vsel %vm854, %v861, %v862
      %v864 = vrot.slane %v499, 1
      %v865 = vrot.slane %v500, 1
      %v866 = vsel %vm854, %v864, %v865
      %v867 = vrot.slane %v501, 1
      %v868 = vrot.slane %v502, 1
      %v869 = vsel %vm854, %v867, %v868
      %v870 = vrot.slane %v503, 1
      %v871 = vrot.slane %v504, 1
      %v872 = vsel %vm854, %v870, %v871
      %v873 = vrot.slane %v505, 1
      %v874 = vrot.slane %v506, 1
      %v875 = vsel %vm854, %v873, %v874
      %v876 = vrot.slane %v507, 1
      %v877 = vrot.slane %v508, 1
      %v878 = vsel %vm854, %v876, %v877
      %v879 = vrot.slane %v509, 1
      %v880 = vrot.slane %v510, 1
      %v881 = vsel %vm854, %v879, %v880
      %v882 = vrot.slane %v511, 1
      %v883 = vrot.slane %v512, 1
      %v884 = vsel %vm854, %v882, %v883
      %v885 = vrot.slane %v513, 1
      %v886 = vrot.slane %v514, 1
      %v887 = vsel %vm854, %v885, %v886
      %v888 = vrot.slane %v515, 1
      %v889 = vrot.slane %v516, 1
      %v890 = vsel %vm854, %v888, %v889
      %v891 = vrot.slane %v517, 1
      %v892 = vrot.slane %v518, 1
      %v893 = vsel %vm854, %v891, %v892
      %v894 = vrot.slane %v519, 1
      %v895 = vrot.slane %v520, 1
      %v896 = vsel %vm854, %v894, %v895
      %v897 = vrot.slane %v521, 1
      %v898 = vrot.slane %v522, 1
      %v899 = vsel %vm854, %v897, %v898
      %v900 = vrot.slane %v523, 1
      %v901 = vrot.slane %v524, 1
      %v902 = vsel %vm854, %v900, %v901
      %v903 = vrot.slane %v525, 1
      %v904 = vrot.slane %v526, 1
      %v905 = vsel %vm854, %v903, %v904
      %v906 = vrot.slane %v527, 1
      %v907 = vrot.slane %v528, 1
      %v908 = vsel %vm854, %v906, %v907
      %909 = vrot.lane.b32.xlu0 %v857, 8
      %v910 = vpop.permute.xlu0 %909
      %911 = vrot.lane.b32.xlu0 %v856, 8
      %v912 = vpop.permute.xlu0 %911
      %913 = vrot.lane.b32.xlu0 %v860, 8
      %v914 = vpop.permute.xlu0 %913
      %915 = vrot.lane.b32.xlu0 %v859, 8
      %v916 = vpop.permute.xlu0 %915
      %917 = vrot.lane.b32.xlu0 %v863, 8
      %v918 = vpop.permute.xlu0 %917
      %919 = vrot.lane.b32.xlu0 %v862, 8
      %v920 = vpop.permute.xlu0 %919
      %921 = vrot.lane.b32.xlu0 %v866, 8
      %v922 = vpop.permute.xlu0 %921
      %923 = vrot.lane.b32.xlu0 %v865, 8
      %v924 = vpop.permute.xlu0 %923
      %925 = vrot.lane.b32.xlu0 %v869, 8
      %v926 = vpop.permute.xlu0 %925
      %927 = vrot.lane.b32.xlu0 %v868, 8
      %v928 = vpop.permute.xlu0 %927
      %929 = vrot.lane.b32.xlu0 %v872, 8
      %v930 = vpop.permute.xlu0 %929
      %931 = vrot.lane.b32.xlu0 %v871, 8
      %v932 = vpop.permute.xlu0 %931
      %933 = vrot.lane.b32.xlu0 %v875, 8
      %v934 = vpop.permute.xlu0 %933
      %935 = vrot.lane.b32.xlu0 %v874, 8
      %v936 = vpop.permute.xlu0 %935
      %937 = vrot.lane.b32.xlu0 %v878, 8
      %v938 = vpop.permute.xlu0 %937
      %939 = vrot.lane.b32.xlu0 %v877, 8
      %v940 = vpop.permute.xlu0 %939
      %941 = vrot.lane.b32.xlu0 %v881, 8
      %v942 = vpop.permute.xlu0 %941
      %943 = vrot.lane.b32.xlu0 %v880, 8
      %v944 = vpop.permute.xlu0 %943
      %945 = vrot.lane.b32.xlu0 %v884, 8
      %v946 = vpop.permute.xlu0 %945
      %947 = vrot.lane.b32.xlu0 %v883, 8
      %v948 = vpop.permute.xlu0 %947
      %949 = vrot.lane.b32.xlu0 %v887, 8
      %v950 = vpop.permute.xlu0 %949
      %951 = vrot.lane.b32.xlu0 %v886, 8
      %v952 = vpop.permute.xlu0 %951
      %953 = vrot.lane.b32.xlu0 %v890, 8
      %v954 = vpop.permute.xlu0 %953
      %955 = vrot.lane.b32.xlu0 %v889, 8
      %v956 = vpop.permute.xlu0 %955
      %957 = vrot.lane.b32.xlu0 %v893, 8
      %v958 = vpop.permute.xlu0 %957
      %959 = vrot.lane.b32.xlu0 %v892, 8
      %v960 = vpop.permute.xlu0 %959
      %961 = vrot.lane.b32.xlu0 %v896, 8
      %v962 = vpop.permute.xlu0 %961
      %963 = vrot.lane.b32.xlu0 %v895, 8
      %v964 = vpop.permute.xlu0 %963
      %965 = vrot.lane.b32.xlu0 %v899, 8
      %v966 = vpop.permute.xlu0 %965
      %967 = vrot.lane.b32.xlu0 %v898, 8
      %v968 = vpop.permute.xlu0 %967
      %969 = vrot.lane.b32.xlu0 %v902, 8
      %v970 = vpop.permute.xlu0 %969
      %971 = vrot.lane.b32.xlu0 %v901, 8
      %v972 = vpop.permute.xlu0 %971
      %973 = vrot.lane.b32.xlu0 %v905, 8
      %v974 = vpop.permute.xlu0 %973
      %975 = vrot.lane.b32.xlu0 %v904, 8
      %v976 = vpop.permute.xlu0 %975
      %977 = vrot.lane.b32.xlu0 %v908, 8
      %v978 = vpop.permute.xlu0 %977
      %979 = vrot.lane.b32.xlu0 %v907, 8
      %v980 = vpop.permute.xlu0 %979
      %v984 = vunpack.c.l.b16 %v379
      %v985 = vunpack.c.l.b16 %v380
      %v986 = vunpack.c.l.b16 %v381
      %v987 = vpack.c.b16 %v985, %v984
      %v988 = vpack.c.b16 %v986, %v986
      %989 = vrot.lane.b32.xlu0 %v495, 12
      %v990 = vpop.permute.xlu0 %989
      %991 = vrot.lane.b32.xlu0 %v496, 12
      %v992 = vpop.permute.xlu0 %991
      %993 = vrot.lane.b32.xlu0 %v497, 12
      %v994 = vpop.permute.xlu0 %993
      %995 = vrot.lane.b32.xlu0 %v498, 12
      %v996 = vpop.permute.xlu0 %995
      %997 = vrot.lane.b32.xlu0 %v499, 12
      %v998 = vpop.permute.xlu0 %997
      %999 = vrot.lane.b32.xlu0 %v500, 12
      %v1000 = vpop.permute.xlu0 %999
      %1001 = vrot.lane.b32.xlu0 %v501, 12
      %v1002 = vpop.permute.xlu0 %1001
      %1003 = vrot.lane.b32.xlu0 %v502, 12
      %v1004 = vpop.permute.xlu0 %1003
      %1005 = vrot.lane.b32.xlu0 %v503, 12
      %v1006 = vpop.permute.xlu0 %1005
      %1007 = vrot.lane.b32.xlu0 %v504, 12
      %v1008 = vpop.permute.xlu0 %1007
      %1009 = vrot.lane.b32.xlu0 %v505, 12
      %v1010 = vpop.permute.xlu0 %1009
      %1011 = vrot.lane.b32.xlu0 %v506, 12
      %v1012 = vpop.permute.xlu0 %1011
      %1013 = vrot.lane.b32.xlu0 %v507, 12
      %v1014 = vpop.permute.xlu0 %1013
      %1015 = vrot.lane.b32.xlu0 %v508, 12
      %v1016 = vpop.permute.xlu0 %1015
      %1017 = vrot.lane.b32.xlu0 %v509, 12
      %v1018 = vpop.permute.xlu0 %1017
      %1019 = vrot.lane.b32.xlu0 %v510, 12
      %v1020 = vpop.permute.xlu0 %1019
      %1021 = vrot.lane.b32.xlu0 %v511, 12
      %v1022 = vpop.permute.xlu0 %1021
      %1023 = vrot.lane.b32.xlu0 %v512, 12
      %v1024 = vpop.permute.xlu0 %1023
      %1025 = vrot.lane.b32.xlu0 %v513, 12
      %v1026 = vpop.permute.xlu0 %1025
      %1027 = vrot.lane.b32.xlu0 %v514, 12
      %v1028 = vpop.permute.xlu0 %1027
      %1029 = vrot.lane.b32.xlu0 %v515, 12
      %v1030 = vpop.permute.xlu0 %1029
      %1031 = vrot.lane.b32.xlu0 %v516, 12
      %v1032 = vpop.permute.xlu0 %1031
      %1033 = vrot.lane.b32.xlu0 %v517, 12
      %v1034 = vpop.permute.xlu0 %1033
      %1035 = vrot.lane.b32.xlu0 %v518, 12
      %v1036 = vpop.permute.xlu0 %1035
      %1037 = vrot.lane.b32.xlu0 %v519, 12
      %v1038 = vpop.permute.xlu0 %1037
      %1039 = vrot.lane.b32.xlu0 %v520, 12
      %v1040 = vpop.permute.xlu0 %1039
      %1041 = vrot.lane.b32.xlu0 %v521, 12
      %v1042 = vpop.permute.xlu0 %1041
      %1043 = vrot.lane.b32.xlu0 %v522, 12
      %v1044 = vpop.permute.xlu0 %1043
      %1045 = vrot.lane.b32.xlu0 %v523, 12
      %v1046 = vpop.permute.xlu0 %1045
      %1047 = vrot.lane.b32.xlu0 %v524, 12
      %v1048 = vpop.permute.xlu0 %1047
      %1049 = vrot.lane.b32.xlu0 %v525, 12
      %v1050 = vpop.permute.xlu0 %1049
      %1051 = vrot.lane.b32.xlu0 %v526, 12
      %v1052 = vpop.permute.xlu0 %1051
      %1053 = vrot.lane.b32.xlu0 %v527, 12
      %v1054 = vpop.permute.xlu0 %1053
      %1055 = vrot.lane.b32.xlu0 %v528, 12
      %v1056 = vpop.permute.xlu0 %1055
      %1057 = vrot.lane.b32.xlu0 %v987, 12
      %v1058 = vpop.permute.xlu0 %1057
      %1059 = vrot.lane.b32.xlu0 %v988, 12
      %v1060 = vpop.permute.xlu0 %1059
      %v1062 = vshrl.u32 %v987, 16
      %v1064 = vshll.u32 %v987, 16
      %v1066 = vrot.slane %v1064, 1
      %v1067 = vor.u32 %v1062, %v1066
      %v1069 = vshll.u32 %v988, 16
      %v1071 = vrot.slane %v1069, 1
      %v1072 = vsel %vm529, %v1067, %v1071
      %v1073 = vshrl.u32 %v988, 16
      %1075 = vrot.lane.b32.xlu0 %v555, 16
      %v1076 = vpop.permute.xlu0 %1075
      %1077 = vrot.lane.b32.xlu0 %v556, 16
      %v1078 = vpop.permute.xlu0 %1077
      %1079 = vrot.lane.b32.xlu0 %v569, 16
      %v1080 = vpop.permute.xlu0 %1079
      %1081 = vrot.lane.b32.xlu0 %v570, 16
      %v1082 = vpop.permute.xlu0 %1081
      %1083 = vrot.lane.b32.xlu0 %v583, 16
      %v1084 = vpop.permute.xlu0 %1083
      %1085 = vrot.lane.b32.xlu0 %v584, 16
      %v1086 = vpop.permute.xlu0 %1085
      %1087 = vrot.lane.b32.xlu0 %v597, 16
      %v1088 = vpop.permute.xlu0 %1087
      %1089 = vrot.lane.b32.xlu0 %v598, 16
      %v1090 = vpop.permute.xlu0 %1089
      %1091 = vrot.lane.b32.xlu0 %v611, 16
      %v1092 = vpop.permute.xlu0 %1091
      %1093 = vrot.lane.b32.xlu0 %v612, 16
      %v1094 = vpop.permute.xlu0 %1093
      %1095 = vrot.lane.b32.xlu0 %v625, 16
      %v1096 = vpop.permute.xlu0 %1095
      %1097 = vrot.lane.b32.xlu0 %v626, 16
      %v1098 = vpop.permute.xlu0 %1097
      %1099 = vrot.lane.b32.xlu0 %v639, 16
      %v1100 = vpop.permute.xlu0 %1099
      %1101 = vrot.lane.b32.xlu0 %v640, 16
      %v1102 = vpop.permute.xlu0 %1101
      %1103 = vrot.lane.b32.xlu0 %v653, 16
      %v1104 = vpop.permute.xlu0 %1103
      %1105 = vrot.lane.b32.xlu0 %v654, 16
      %v1106 = vpop.permute.xlu0 %1105
      %1107 = vrot.lane.b32.xlu0 %v667, 16
      %v1108 = vpop.permute.xlu0 %1107
      %1109 = vrot.lane.b32.xlu0 %v668, 16
      %v1110 = vpop.permute.xlu0 %1109
      %1111 = vrot.lane.b32.xlu0 %v681, 16
      %v1112 = vpop.permute.xlu0 %1111
      %1113 = vrot.lane.b32.xlu0 %v682, 16
      %v1114 = vpop.permute.xlu0 %1113
      %1115 = vrot.lane.b32.xlu0 %v695, 16
      %v1116 = vpop.permute.xlu0 %1115
      %1117 = vrot.lane.b32.xlu0 %v696, 16
      %v1118 = vpop.permute.xlu0 %1117
      %1119 = vrot.lane.b32.xlu0 %v709, 16
      %v1120 = vpop.permute.xlu0 %1119
      %1121 = vrot.lane.b32.xlu0 %v710, 16
      %v1122 = vpop.permute.xlu0 %1121
      %1123 = vrot.lane.b32.xlu0 %v723, 16
      %v1124 = vpop.permute.xlu0 %1123
      %1125 = vrot.lane.b32.xlu0 %v724, 16
      %v1126 = vpop.permute.xlu0 %1125
      %1127 = vrot.lane.b32.xlu0 %v737, 16
      %v1128 = vpop.permute.xlu0 %1127
      %1129 = vrot.lane.b32.xlu0 %v738, 16
      %v1130 = vpop.permute.xlu0 %1129
      %1131 = vrot.lane.b32.xlu0 %v751, 16
      %v1132 = vpop.permute.xlu0 %1131
      %1133 = vrot.lane.b32.xlu0 %v752, 16
      %v1134 = vpop.permute.xlu0 %1133
      %1135 = vrot.lane.b32.xlu0 %v765, 16
      %v1136 = vpop.permute.xlu0 %1135
      %1137 = vrot.lane.b32.xlu0 %v766, 16
      %v1138 = vpop.permute.xlu0 %1137
      %1139 = vrot.lane.b32.xlu0 %v779, 16
      %v1140 = vpop.permute.xlu0 %1139
      %1141 = vrot.lane.b32.xlu0 %v780, 16
      %v1142 = vpop.permute.xlu0 %1141
      %1143 = vrot.lane.b32.xlu0 %v1072, 16
      %v1144 = vpop.permute.xlu0 %1143
      %1145 = vrot.lane.b32.xlu0 %v1073, 16
      %v1146 = vpop.permute.xlu0 %1145
      %v1147 = vrot.slane %v987, 1
      %v1148 = vrot.slane %v988, 1
      %v1149 = vsel %vm854, %v1147, %v1148
      %1150 = vrot.lane.b32.xlu0 %v860, 20
      %v1151 = vpop.permute.xlu0 %1150
      %1152 = vrot.lane.b32.xlu0 %v859, 20
      %v1153 = vpop.permute.xlu0 %1152
      %1154 = vrot.lane.b32.xlu0 %v863, 20
      %v1155 = vpop.permute.xlu0 %1154
      %1156 = vrot.lane.b32.xlu0 %v862, 20
      %v1157 = vpop.permute.xlu0 %1156
      %1158 = vrot.lane.b32.xlu0 %v866, 20
      %v1159 = vpop.permute.xlu0 %1158
      %1160 = vrot.lane.b32.xlu0 %v865, 20
      %v1161 = vpop.permute.xlu0 %1160
      %1162 = vrot.lane.b32.xlu0 %v869, 20
      %v1163 = vpop.permute.xlu0 %1162
      %1164 = vrot.lane.b32.xlu0 %v868, 20
      %v1165 = vpop.permute.xlu0 %1164
      %1166 = vrot.lane.b32.xlu0 %v872, 20
      %v1167 = vpop.permute.xlu0 %1166
      %1168 = vrot.lane.b32.xlu0 %v871, 20
      %v1169 = vpop.permute.xlu0 %1168
      %1170 = vrot.lane.b32.xlu0 %v875, 20
      %v1171 = vpop.permute.xlu0 %1170
      %1172 = vrot.lane.b32.xlu0 %v874, 20
      %v1173 = vpop.permute.xlu0 %1172
      %1174 = vrot.lane.b32.xlu0 %v878, 20
      %v1175 = vpop.permute.xlu0 %1174
      %1176 = vrot.lane.b32.xlu0 %v877, 20
      %v1177 = vpop.permute.xlu0 %1176
      %1178 = vrot.lane.b32.xlu0 %v881, 20
      %v1179 = vpop.permute.xlu0 %1178
      %1180 = vrot.lane.b32.xlu0 %v880, 20
      %v1181 = vpop.permute.xlu0 %1180
      %1182 = vrot.lane.b32.xlu0 %v884, 20
      %v1183 = vpop.permute.xlu0 %1182
      %1184 = vrot.lane.b32.xlu0 %v883, 20
      %v1185 = vpop.permute.xlu0 %1184
      %1186 = vrot.lane.b32.xlu0 %v887, 20
      %v1187 = vpop.permute.xlu0 %1186
      %1188 = vrot.lane.b32.xlu0 %v886, 20
      %v1189 = vpop.permute.xlu0 %1188
      %1190 = vrot.lane.b32.xlu0 %v890, 20
      %v1191 = vpop.permute.xlu0 %1190
      %1192 = vrot.lane.b32.xlu0 %v889, 20
      %v1193 = vpop.permute.xlu0 %1192
      %1194 = vrot.lane.b32.xlu0 %v893, 20
      %v1195 = vpop.permute.xlu0 %1194
      %1196 = vrot.lane.b32.xlu0 %v892, 20
      %v1197 = vpop.permute.xlu0 %1196
      %1198 = vrot.lane.b32.xlu0 %v896, 20
      %v1199 = vpop.permute.xlu0 %1198
      %1200 = vrot.lane.b32.xlu0 %v895, 20
      %v1201 = vpop.permute.xlu0 %1200
      %1202 = vrot.lane.b32.xlu0 %v899, 20
      %v1203 = vpop.permute.xlu0 %1202
      %1204 = vrot.lane.b32.xlu0 %v898, 20
      %v1205 = vpop.permute.xlu0 %1204
      %1206 = vrot.lane.b32.xlu0 %v902, 20
      %v1207 = vpop.permute.xlu0 %1206
      %1208 = vrot.lane.b32.xlu0 %v901, 20
      %v1209 = vpop.permute.xlu0 %1208
      %1210 = vrot.lane.b32.xlu0 %v905, 20
      %v1211 = vpop.permute.xlu0 %1210
      %1212 = vrot.lane.b32.xlu0 %v904, 20
      %v1213 = vpop.permute.xlu0 %1212
      %1214 = vrot.lane.b32.xlu0 %v908, 20
      %v1215 = vpop.permute.xlu0 %1214
      %1216 = vrot.lane.b32.xlu0 %v907, 20
      %v1217 = vpop.permute.xlu0 %1216
      %1218 = vrot.lane.b32.xlu0 %v1149, 20
      %v1219 = vpop.permute.xlu0 %1218
      %1220 = vrot.lane.b32.xlu0 %v1148, 20
      %v1221 = vpop.permute.xlu0 %1220
      %v1225 = vunpack.c.l.b16 %v382
      %v1226 = vunpack.c.l.b16 %v383
      %v1227 = vunpack.c.l.b16 %v384
      %v1228 = vpack.c.b16 %v1226, %v1225
      %v1229 = vpack.c.b16 %v1227, %v1227
      %1230 = vrot.lane.b32.xlu0 %v497, 24
      %v1231 = vpop.permute.xlu0 %1230
      %1232 = vrot.lane.b32.xlu0 %v498, 24
      %v1233 = vpop.permute.xlu0 %1232
      %1234 = vrot.lane.b32.xlu0 %v499, 24
      %v1235 = vpop.permute.xlu0 %1234
      %1236 = vrot.lane.b32.xlu0 %v500, 24
      %v1237 = vpop.permute.xlu0 %1236
      %1238 = vrot.lane.b32.xlu0 %v501, 24
      %v1239 = vpop.permute.xlu0 %1238
      %1240 = vrot.lane.b32.xlu0 %v502, 24
      %v1241 = vpop.permute.xlu0 %1240
      %1242 = vrot.lane.b32.xlu0 %v503, 24
      %v1243 = vpop.permute.xlu0 %1242
      %1244 = vrot.lane.b32.xlu0 %v504, 24
      %v1245 = vpop.permute.xlu0 %1244
      %1246 = vrot.lane.b32.xlu0 %v505, 24
      %v1247 = vpop.permute.xlu0 %1246
      %1248 = vrot.lane.b32.xlu0 %v506, 24
      %v1249 = vpop.permute.xlu0 %1248
      %1250 = vrot.lane.b32.xlu0 %v507, 24
      %v1251 = vpop.permute.xlu0 %1250
      %1252 = vrot.lane.b32.xlu0 %v508, 24
      %v1253 = vpop.permute.xlu0 %1252
      %1254 = vrot.lane.b32.xlu0 %v509, 24
      %v1255 = vpop.permute.xlu0 %1254
      %1256 = vrot.lane.b32.xlu0 %v510, 24
      %v1257 = vpop.permute.xlu0 %1256
      %1258 = vrot.lane.b32.xlu0 %v511, 24
      %v1259 = vpop.permute.xlu0 %1258
      %1260 = vrot.lane.b32.xlu0 %v512, 24
      %v1261 = vpop.permute.xlu0 %1260
      %1262 = vrot.lane.b32.xlu0 %v513, 24
      %v1263 = vpop.permute.xlu0 %1262
      %1264 = vrot.lane.b32.xlu0 %v514, 24
      %v1265 = vpop.permute.xlu0 %1264
      %1266 = vrot.lane.b32.xlu0 %v515, 24
      %v1267 = vpop.permute.xlu0 %1266
      %1268 = vrot.lane.b32.xlu0 %v516, 24
      %v1269 = vpop.permute.xlu0 %1268
      %1270 = vrot.lane.b32.xlu0 %v517, 24
      %v1271 = vpop.permute.xlu0 %1270
      %1272 = vrot.lane.b32.xlu0 %v518, 24
      %v1273 = vpop.permute.xlu0 %1272
      %1274 = vrot.lane.b32.xlu0 %v519, 24
      %v1275 = vpop.permute.xlu0 %1274
      %1276 = vrot.lane.b32.xlu0 %v520, 24
      %v1277 = vpop.permute.xlu0 %1276
      %1278 = vrot.lane.b32.xlu0 %v521, 24
      %v1279 = vpop.permute.xlu0 %1278
      %1280 = vrot.lane.b32.xlu0 %v522, 24
      %v1281 = vpop.permute.xlu0 %1280
      %1282 = vrot.lane.b32.xlu0 %v523, 24
      %v1283 = vpop.permute.xlu0 %1282
      %1284 = vrot.lane.b32.xlu0 %v524, 24
      %v1285 = vpop.permute.xlu0 %1284
      %1286 = vrot.lane.b32.xlu0 %v525, 24
      %v1287 = vpop.permute.xlu0 %1286
      %1288 = vrot.lane.b32.xlu0 %v526, 24
      %v1289 = vpop.permute.xlu0 %1288
      %1290 = vrot.lane.b32.xlu0 %v527, 24
      %v1291 = vpop.permute.xlu0 %1290
      %1292 = vrot.lane.b32.xlu0 %v528, 24
      %v1293 = vpop.permute.xlu0 %1292
      %1294 = vrot.lane.b32.xlu0 %v987, 24
      %v1295 = vpop.permute.xlu0 %1294
      %1296 = vrot.lane.b32.xlu0 %v988, 24
      %v1297 = vpop.permute.xlu0 %1296
      %1298 = vrot.lane.b32.xlu0 %v1228, 24
      %v1299 = vpop.permute.xlu0 %1298
      %1300 = vrot.lane.b32.xlu0 %v1229, 24
      %v1301 = vpop.permute.xlu0 %1300
      %v1303 = vshrl.u32 %v1228, 16
      %v1305 = vshll.u32 %v1228, 16
      %v1307 = vrot.slane %v1305, 1
      %v1308 = vor.u32 %v1303, %v1307
      %v1310 = vshll.u32 %v1229, 16
      %v1312 = vrot.slane %v1310, 1
      %v1313 = vsel %vm529, %v1308, %v1312
      %v1314 = vshrl.u32 %v1229, 16
      %1316 = vrot.lane.b32.xlu0 %v569, 28
      %v1317 = vpop.permute.xlu0 %1316
      %1318 = vrot.lane.b32.xlu0 %v570, 28
      %v1319 = vpop.permute.xlu0 %1318
      %1320 = vrot.lane.b32.xlu0 %v583, 28
      %v1321 = vpop.permute.xlu0 %1320
      %1322 = vrot.lane.b32.xlu0 %v584, 28
      %v1323 = vpop.permute.xlu0 %1322
      %1324 = vrot.lane.b32.xlu0 %v597, 28
      %v1325 = vpop.permute.xlu0 %1324
      %1326 = vrot.lane.b32.xlu0 %v598, 28
      %v1327 = vpop.permute.xlu0 %1326
      %1328 = vrot.lane.b32.xlu0 %v611, 28
      %v1329 = vpop.permute.xlu0 %1328
      %1330 = vrot.lane.b32.xlu0 %v612, 28
      %v1331 = vpop.permute.xlu0 %1330
      %1332 = vrot.lane.b32.xlu0 %v625, 28
      %v1333 = vpop.permute.xlu0 %1332
      %1334 = vrot.lane.b32.xlu0 %v626, 28
      %v1335 = vpop.permute.xlu0 %1334
      %1336 = vrot.lane.b32.xlu0 %v639, 28
      %v1337 = vpop.permute.xlu0 %1336
      %1338 = vrot.lane.b32.xlu0 %v640, 28
      %v1339 = vpop.permute.xlu0 %1338
      %1340 = vrot.lane.b32.xlu0 %v653, 28
      %v1341 = vpop.permute.xlu0 %1340
      %1342 = vrot.lane.b32.xlu0 %v654, 28
      %v1343 = vpop.permute.xlu0 %1342
      %1344 = vrot.lane.b32.xlu0 %v667, 28
      %v1345 = vpop.permute.xlu0 %1344
      %1346 = vrot.lane.b32.xlu0 %v668, 28
      %v1347 = vpop.permute.xlu0 %1346
      %1348 = vrot.lane.b32.xlu0 %v681, 28
      %v1349 = vpop.permute.xlu0 %1348
      %1350 = vrot.lane.b32.xlu0 %v682, 28
      %v1351 = vpop.permute.xlu0 %1350
      %1352 = vrot.lane.b32.xlu0 %v695, 28
      %v1353 = vpop.permute.xlu0 %1352
      %1354 = vrot.lane.b32.xlu0 %v696, 28
      %v1355 = vpop.permute.xlu0 %1354
      %1356 = vrot.lane.b32.xlu0 %v709, 28
      %v1357 = vpop.permute.xlu0 %1356
      %1358 = vrot.lane.b32.xlu0 %v710, 28
      %v1359 = vpop.permute.xlu0 %1358
      %1360 = vrot.lane.b32.xlu0 %v723, 28
      %v1361 = vpop.permute.xlu0 %1360
      %1362 = vrot.lane.b32.xlu0 %v724, 28
      %v1363 = vpop.permute.xlu0 %1362
      %1364 = vrot.lane.b32.xlu0 %v737, 28
      %v1365 = vpop.permute.xlu0 %1364
      %1366 = vrot.lane.b32.xlu0 %v738, 28
      %v1367 = vpop.permute.xlu0 %1366
      %1368 = vrot.lane.b32.xlu0 %v751, 28
      %v1369 = vpop.permute.xlu0 %1368
      %1370 = vrot.lane.b32.xlu0 %v752, 28
      %v1371 = vpop.permute.xlu0 %1370
      %1372 = vrot.lane.b32.xlu0 %v765, 28
      %v1373 = vpop.permute.xlu0 %1372
      %1374 = vrot.lane.b32.xlu0 %v766, 28
      %v1375 = vpop.permute.xlu0 %1374
      %1376 = vrot.lane.b32.xlu0 %v779, 28
      %v1377 = vpop.permute.xlu0 %1376
      %1378 = vrot.lane.b32.xlu0 %v780, 28
      %v1379 = vpop.permute.xlu0 %1378
      %1380 = vrot.lane.b32.xlu0 %v1072, 28
      %v1381 = vpop.permute.xlu0 %1380
      %1382 = vrot.lane.b32.xlu0 %v1073, 28
      %v1383 = vpop.permute.xlu0 %1382
      %1384 = vrot.lane.b32.xlu0 %v1313, 28
      %v1385 = vpop.permute.xlu0 %1384
      %1386 = vrot.lane.b32.xlu0 %v1314, 28
      %v1387 = vpop.permute.xlu0 %1386
      %v1388 = vrot.slane %v1228, 1
      %v1389 = vrot.slane %v1229, 1
      %v1390 = vsel %vm854, %v1388, %v1389
      %1391 = vrot.lane.b32.xlu0 %v863, 32
      %v1392 = vpop.permute.xlu0 %1391
      %1393 = vrot.lane.b32.xlu0 %v862, 32
      %v1394 = vpop.permute.xlu0 %1393
      %1395 = vrot.lane.b32.xlu0 %v866, 32
      %v1396 = vpop.permute.xlu0 %1395
      %1397 = vrot.lane.b32.xlu0 %v865, 32
      %v1398 = vpop.permute.xlu0 %1397
      %1399 = vrot.lane.b32.xlu0 %v869, 32
      %v1400 = vpop.permute.xlu0 %1399
      %1401 = vrot.lane.b32.xlu0 %v868, 32
      %v1402 = vpop.permute.xlu0 %1401
      %1403 = vrot.lane.b32.xlu0 %v872, 32
      %v1404 = vpop.permute.xlu0 %1403
      %1405 = vrot.lane.b32.xlu0 %v871, 32
      %v1406 = vpop.permute.xlu0 %1405
      %1407 = vrot.lane.b32.xlu0 %v875, 32
      %v1408 = vpop.permute.xlu0 %1407
      %1409 = vrot.lane.b32.xlu0 %v874, 32
      %v1410 = vpop.permute.xlu0 %1409
      %1411 = vrot.lane.b32.xlu0 %v878, 32
      %v1412 = vpop.permute.xlu0 %1411
      %1413 = vrot.lane.b32.xlu0 %v877, 32
      %v1414 = vpop.permute.xlu0 %1413
      %1415 = vrot.lane.b32.xlu0 %v881, 32
      %v1416 = vpop.permute.xlu0 %1415
      %1417 = vrot.lane.b32.xlu0 %v880, 32
      %v1418 = vpop.permute.xlu0 %1417
      %1419 = vrot.lane.b32.xlu0 %v884, 32
      %v1420 = vpop.permute.xlu0 %1419
      %1421 = vrot.lane.b32.xlu0 %v883, 32
      %v1422 = vpop.permute.xlu0 %1421
      %1423 = vrot.lane.b32.xlu0 %v887, 32
      %v1424 = vpop.permute.xlu0 %1423
      %1425 = vrot.lane.b32.xlu0 %v886, 32
      %v1426 = vpop.permute.xlu0 %1425
      %1427 = vrot.lane.b32.xlu0 %v890, 32
      %v1428 = vpop.permute.xlu0 %1427
      %1429 = vrot.lane.b32.xlu0 %v889, 32
      %v1430 = vpop.permute.xlu0 %1429
      %1431 = vrot.lane.b32.xlu0 %v893, 32
      %v1432 = vpop.permute.xlu0 %1431
      %1433 = vrot.lane.b32.xlu0 %v892, 32
      %v1434 = vpop.permute.xlu0 %1433
      %1435 = vrot.lane.b32.xlu0 %v896, 32
      %v1436 = vpop.permute.xlu0 %1435
      %1437 = vrot.lane.b32.xlu0 %v895, 32
      %v1438 = vpop.permute.xlu0 %1437
      %1439 = vrot.lane.b32.xlu0 %v899, 32
      %v1440 = vpop.permute.xlu0 %1439
      %1441 = vrot.lane.b32.xlu0 %v898, 32
      %v1442 = vpop.permute.xlu0 %1441
      %1443 = vrot.lane.b32.xlu0 %v902, 32
      %v1444 = vpop.permute.xlu0 %1443
      %1445 = vrot.lane.b32.xlu0 %v901, 32
      %v1446 = vpop.permute.xlu0 %1445
      %1447 = vrot.lane.b32.xlu0 %v905, 32
      %v1448 = vpop.permute.xlu0 %1447
      %1449 = vrot.lane.b32.xlu0 %v904, 32
      %v1450 = vpop.permute.xlu0 %1449
      %1451 = vrot.lane.b32.xlu0 %v908, 32
      %v1452 = vpop.permute.xlu0 %1451
      %1453 = vrot.lane.b32.xlu0 %v907, 32
      %v1454 = vpop.permute.xlu0 %1453
      %1455 = vrot.lane.b32.xlu0 %v1149, 32
      %v1456 = vpop.permute.xlu0 %1455
      %1457 = vrot.lane.b32.xlu0 %v1148, 32
      %v1458 = vpop.permute.xlu0 %1457
      %1459 = vrot.lane.b32.xlu0 %v1390, 32
      %v1460 = vpop.permute.xlu0 %1459
      %1461 = vrot.lane.b32.xlu0 %v1389, 32
      %v1462 = vpop.permute.xlu0 %1461
      %vm1463 = vcmask 31744
      %v1465 = vsel %vm1463, %v493, %v783
      %v1467 = vsel %vm1463, %v494, %v785
      %v1469 = vsel %vm1463, %v495, %v787
      %v1471 = vsel %vm1463, %v496, %v789
      %v1473 = vsel %vm1463, %v497, %v791
      %v1475 = vsel %vm1463, %v498, %v793
      %v1477 = vsel %vm1463, %v499, %v795
      %v1479 = vsel %vm1463, %v500, %v797
      %v1481 = vsel %vm1463, %v501, %v799
      %v1483 = vsel %vm1463, %v502, %v801
      %v1485 = vsel %vm1463, %v503, %v803
      %v1487 = vsel %vm1463, %v504, %v805
      %v1489 = vsel %vm1463, %v505, %v807
      %v1491 = vsel %vm1463, %v506, %v809
      %v1493 = vsel %vm1463, %v507, %v811
      %v1495 = vsel %vm1463, %v508, %v813
      %v1497 = vsel %vm1463, %v509, %v815
      %v1499 = vsel %vm1463, %v510, %v817
      %v1501 = vsel %vm1463, %v511, %v819
      %v1503 = vsel %vm1463, %v512, %v821
      %v1505 = vsel %vm1463, %v513, %v823
      %v1507 = vsel %vm1463, %v514, %v825
      %v1509 = vsel %vm1463, %v515, %v827
      %v1511 = vsel %vm1463, %v516, %v829
      %v1513 = vsel %vm1463, %v517, %v831
      %v1515 = vsel %vm1463, %v518, %v833
      %v1517 = vsel %vm1463, %v519, %v835
      %v1519 = vsel %vm1463, %v520, %v837
      %v1521 = vsel %vm1463, %v521, %v839
      %v1523 = vsel %vm1463, %v522, %v841
      %v1525 = vsel %vm1463, %v523, %v843
      %v1527 = vsel %vm1463, %v524, %v845
      %v1529 = vsel %vm1463, %v525, %v847
      %v1531 = vsel %vm1463, %v526, %v849
      %v1533 = vsel %vm1463, %v527, %v851
      %v1535 = vsel %vm1463, %v528, %v853
      %vm1536 = vcmask 64512
      %v1538 = vsel %vm1536, %v1465, %v910
      %v1540 = vsel %vm1536, %v1467, %v912
      %v1542 = vsel %vm1536, %v1469, %v914
      %v1544 = vsel %vm1536, %v1471, %v916
      %v1546 = vsel %vm1536, %v1473, %v918
      %v1548 = vsel %vm1536, %v1475, %v920
      %v1550 = vsel %vm1536, %v1477, %v922
      %v1552 = vsel %vm1536, %v1479, %v924
      %v1554 = vsel %vm1536, %v1481, %v926
      %v1556 = vsel %vm1536, %v1483, %v928
      %v1558 = vsel %vm1536, %v1485, %v930
      %v1560 = vsel %vm1536, %v1487, %v932
      %v1562 = vsel %vm1536, %v1489, %v934
      %v1564 = vsel %vm1536, %v1491, %v936
      %v1566 = vsel %vm1536, %v1493, %v938
      %v1568 = vsel %vm1536, %v1495, %v940
      %v1570 = vsel %vm1536, %v1497, %v942
      %v1572 = vsel %vm1536, %v1499, %v944
      %v1574 = vsel %vm1536, %v1501, %v946
      %v1576 = vsel %vm1536, %v1503, %v948
      %v1578 = vsel %vm1536, %v1505, %v950
      %v1580 = vsel %vm1536, %v1507, %v952
      %v1582 = vsel %vm1536, %v1509, %v954
      %v1584 = vsel %vm1536, %v1511, %v956
      %v1586 = vsel %vm1536, %v1513, %v958
      %v1588 = vsel %vm1536, %v1515, %v960
      %v1590 = vsel %vm1536, %v1517, %v962
      %v1592 = vsel %vm1536, %v1519, %v964
      %v1594 = vsel %vm1536, %v1521, %v966
      %v1596 = vsel %vm1536, %v1523, %v968
      %v1598 = vsel %vm1536, %v1525, %v970
      %v1600 = vsel %vm1536, %v1527, %v972
      %v1602 = vsel %vm1536, %v1529, %v974
      %v1604 = vsel %vm1536, %v1531, %v976
      %v1606 = vsel %vm1536, %v1533, %v978
      %v1608 = vsel %vm1536, %v1535, %v980
      %vm1609 = vcmask 97280
      %v1611 = vsel %vm1609, %v1538, %v990
      %v1613 = vsel %vm1609, %v1540, %v992
      %v1615 = vsel %vm1609, %v1542, %v994
      %v1617 = vsel %vm1609, %v1544, %v996
      %v1619 = vsel %vm1609, %v1546, %v998
      %v1621 = vsel %vm1609, %v1548, %v1000
      %v1623 = vsel %vm1609, %v1550, %v1002
      %v1625 = vsel %vm1609, %v1552, %v1004
      %v1627 = vsel %vm1609, %v1554, %v1006
      %v1629 = vsel %vm1609, %v1556, %v1008
      %v1631 = vsel %vm1609, %v1558, %v1010
      %v1633 = vsel %vm1609, %v1560, %v1012
      %v1635 = vsel %vm1609, %v1562, %v1014
      %v1637 = vsel %vm1609, %v1564, %v1016
      %v1639 = vsel %vm1609, %v1566, %v1018
      %v1641 = vsel %vm1609, %v1568, %v1020
      %v1643 = vsel %vm1609, %v1570, %v1022
      %v1645 = vsel %vm1609, %v1572, %v1024
      %v1647 = vsel %vm1609, %v1574, %v1026
      %v1649 = vsel %vm1609, %v1576, %v1028
      %v1651 = vsel %vm1609, %v1578, %v1030
      %v1653 = vsel %vm1609, %v1580, %v1032
      %v1655 = vsel %vm1609, %v1582, %v1034
      %v1657 = vsel %vm1609, %v1584, %v1036
      %v1659 = vsel %vm1609, %v1586, %v1038
      %v1661 = vsel %vm1609, %v1588, %v1040
      %v1663 = vsel %vm1609, %v1590, %v1042
      %v1665 = vsel %vm1609, %v1592, %v1044
      %v1667 = vsel %vm1609, %v1594, %v1046
      %v1669 = vsel %vm1609, %v1596, %v1048
      %v1671 = vsel %vm1609, %v1598, %v1050
      %v1673 = vsel %vm1609, %v1600, %v1052
      %v1675 = vsel %vm1609, %v1602, %v1054
      %v1677 = vsel %vm1609, %v1604, %v1056
      %v1679 = vsel %vm1609, %v1606, %v1058
      %v1681 = vsel %vm1609, %v1608, %v1060
      %vm1682 = vcmask 130048
      %v1684 = vsel %vm1682, %v1611, %v1076
      %v1686 = vsel %vm1682, %v1613, %v1078
      %v1688 = vsel %vm1682, %v1615, %v1080
      %v1690 = vsel %vm1682, %v1617, %v1082
      %v1692 = vsel %vm1682, %v1619, %v1084
      %v1694 = vsel %vm1682, %v1621, %v1086
      %v1696 = vsel %vm1682, %v1623, %v1088
      %v1698 = vsel %vm1682, %v1625, %v1090
      %v1700 = vsel %vm1682, %v1627, %v1092
      %v1702 = vsel %vm1682, %v1629, %v1094
      %v1704 = vsel %vm1682, %v1631, %v1096
      %v1706 = vsel %vm1682, %v1633, %v1098
      %v1708 = vsel %vm1682, %v1635, %v1100
      %v1710 = vsel %vm1682, %v1637, %v1102
      %v1712 = vsel %vm1682, %v1639, %v1104
      %v1714 = vsel %vm1682, %v1641, %v1106
      %v1716 = vsel %vm1682, %v1643, %v1108
      %v1718 = vsel %vm1682, %v1645, %v1110
      %v1720 = vsel %vm1682, %v1647, %v1112
      %v1722 = vsel %vm1682, %v1649, %v1114
      %v1724 = vsel %vm1682, %v1651, %v1116
      %v1726 = vsel %vm1682, %v1653, %v1118
      %v1728 = vsel %vm1682, %v1655, %v1120
      %v1730 = vsel %vm1682, %v1657, %v1122
      %v1732 = vsel %vm1682, %v1659, %v1124
      %v1734 = vsel %vm1682, %v1661, %v1126
      %v1736 = vsel %vm1682, %v1663, %v1128
      %v1738 = vsel %vm1682, %v1665, %v1130
      %v1740 = vsel %vm1682, %v1667, %v1132
      %v1742 = vsel %vm1682, %v1669, %v1134
      %v1744 = vsel %vm1682, %v1671, %v1136
      %v1746 = vsel %vm1682, %v1673, %v1138
      %v1748 = vsel %vm1682, %v1675, %v1140
      %v1750 = vsel %vm1682, %v1677, %v1142
      %v1752 = vsel %vm1682, %v1679, %v1144
      %v1754 = vsel %vm1682, %v1681, %v1146
      %vm1755 = vcmask 162816
      %v1757 = vsel %vm1755, %v1684, %v1151
      %v1759 = vsel %vm1755, %v1686, %v1153
      %v1761 = vsel %vm1755, %v1688, %v1155
      %v1763 = vsel %vm1755, %v1690, %v1157
      %v1765 = vsel %vm1755, %v1692, %v1159
      %v1767 = vsel %vm1755, %v1694, %v1161
      %v1769 = vsel %vm1755, %v1696, %v1163
      %v1771 = vsel %vm1755, %v1698, %v1165
      %v1773 = vsel %vm1755, %v1700, %v1167
      %v1775 = vsel %vm1755, %v1702, %v1169
      %v1777 = vsel %vm1755, %v1704, %v1171
      %v1779 = vsel %vm1755, %v1706, %v1173
      %v1781 = vsel %vm1755, %v1708, %v1175
      %v1783 = vsel %vm1755, %v1710, %v1177
      %v1785 = vsel %vm1755, %v1712, %v1179
      %v1787 = vsel %vm1755, %v1714, %v1181
      %v1789 = vsel %vm1755, %v1716, %v1183
      %v1791 = vsel %vm1755, %v1718, %v1185
      %v1793 = vsel %vm1755, %v1720, %v1187
      %v1795 = vsel %vm1755, %v1722, %v1189
      %v1797 = vsel %vm1755, %v1724, %v1191
      %v1799 = vsel %vm1755, %v1726, %v1193
      %v1801 = vsel %vm1755, %v1728, %v1195
      %v1803 = vsel %vm1755, %v1730, %v1197
      %v1805 = vsel %vm1755, %v1732, %v1199
      %v1807 = vsel %vm1755, %v1734, %v1201
      %v1809 = vsel %vm1755, %v1736, %v1203
      %v1811 = vsel %vm1755, %v1738, %v1205
      %v1813 = vsel %vm1755, %v1740, %v1207
      %v1815 = vsel %vm1755, %v1742, %v1209
      %v1817 = vsel %vm1755, %v1744, %v1211
      %v1819 = vsel %vm1755, %v1746, %v1213
      %v1821 = vsel %vm1755, %v1748, %v1215
      %v1823 = vsel %vm1755, %v1750, %v1217
      %v1825 = vsel %vm1755, %v1752, %v1219
      %v1827 = vsel %vm1755, %v1754, %v1221
      %vm1828 = vcmask 195584
      %v1830 = vsel %vm1828, %v1757, %v1231
      %v1832 = vsel %vm1828, %v1759, %v1233
      %v1834 = vsel %vm1828, %v1761, %v1235
      %v1836 = vsel %vm1828, %v1763, %v1237
      %v1838 = vsel %vm1828, %v1765, %v1239
      %v1840 = vsel %vm1828, %v1767, %v1241
      %v1842 = vsel %vm1828, %v1769, %v1243
      %v1844 = vsel %vm1828, %v1771, %v1245
      %v1846 = vsel %vm1828, %v1773, %v1247
      %v1848 = vsel %vm1828, %v1775, %v1249
      %v1850 = vsel %vm1828, %v1777, %v1251
      %v1852 = vsel %vm1828, %v1779, %v1253
      %v1854 = vsel %vm1828, %v1781, %v1255
      %v1856 = vsel %vm1828, %v1783, %v1257
      %v1858 = vsel %vm1828, %v1785, %v1259
      %v1860 = vsel %vm1828, %v1787, %v1261
      %v1862 = vsel %vm1828, %v1789, %v1263
      %v1864 = vsel %vm1828, %v1791, %v1265
      %v1866 = vsel %vm1828, %v1793, %v1267
      %v1868 = vsel %vm1828, %v1795, %v1269
      %v1870 = vsel %vm1828, %v1797, %v1271
      %v1872 = vsel %vm1828, %v1799, %v1273
      %v1874 = vsel %vm1828, %v1801, %v1275
      %v1876 = vsel %vm1828, %v1803, %v1277
      %v1878 = vsel %vm1828, %v1805, %v1279
      %v1880 = vsel %vm1828, %v1807, %v1281
      %v1882 = vsel %vm1828, %v1809, %v1283
      %v1884 = vsel %vm1828, %v1811, %v1285
      %v1886 = vsel %vm1828, %v1813, %v1287
      %v1888 = vsel %vm1828, %v1815, %v1289
      %v1890 = vsel %vm1828, %v1817, %v1291
      %v1892 = vsel %vm1828, %v1819, %v1293
      %v1894 = vsel %vm1828, %v1821, %v1295
      %v1896 = vsel %vm1828, %v1823, %v1297
      %v1898 = vsel %vm1828, %v1825, %v1299
      %v1900 = vsel %vm1828, %v1827, %v1301
      %vm1901 = vcmask 228352
      %v1903 = vsel %vm1901, %v1830, %v1317
      %v1905 = vsel %vm1901, %v1832, %v1319
      %v1907 = vsel %vm1901, %v1834, %v1321
      %v1909 = vsel %vm1901, %v1836, %v1323
      %v1911 = vsel %vm1901, %v1838, %v1325
      %v1913 = vsel %vm1901, %v1840, %v1327
      %v1915 = vsel %vm1901, %v1842, %v1329
      %v1917 = vsel %vm1901, %v1844, %v1331
      %v1919 = vsel %vm1901, %v1846, %v1333
      %v1921 = vsel %vm1901, %v1848, %v1335
      %v1923 = vsel %vm1901, %v1850, %v1337
      %v1925 = vsel %vm1901, %v1852, %v1339
      %v1927 = vsel %vm1901, %v1854, %v1341
      %v1929 = vsel %vm1901, %v1856, %v1343
      %v1931 = vsel %vm1901, %v1858, %v1345
      %v1933 = vsel %vm1901, %v1860, %v1347
      %v1935 = vsel %vm1901, %v1862, %v1349
      %v1937 = vsel %vm1901, %v1864, %v1351
      %v1939 = vsel %vm1901, %v1866, %v1353
      %v1941 = vsel %vm1901, %v1868, %v1355
      %v1943 = vsel %vm1901, %v1870, %v1357
      %v1945 = vsel %vm1901, %v1872, %v1359
      %v1947 = vsel %vm1901, %v1874, %v1361
      %v1949 = vsel %vm1901, %v1876, %v1363
      %v1951 = vsel %vm1901, %v1878, %v1365
      %v1953 = vsel %vm1901, %v1880, %v1367
      %v1955 = vsel %vm1901, %v1882, %v1369
      %v1957 = vsel %vm1901, %v1884, %v1371
      %v1959 = vsel %vm1901, %v1886, %v1373
      %v1961 = vsel %vm1901, %v1888, %v1375
      %v1963 = vsel %vm1901, %v1890, %v1377
      %v1965 = vsel %vm1901, %v1892, %v1379
      %v1967 = vsel %vm1901, %v1894, %v1381
      %v1969 = vsel %vm1901, %v1896, %v1383
      %v1971 = vsel %vm1901, %v1898, %v1385
      %v1973 = vsel %vm1901, %v1900, %v1387
      %vm1974 = vcmask 261120
      %v1976 = vsel %vm1974, %v1903, %v1392
      %v1978 = vsel %vm1974, %v1905, %v1394
      %v1980 = vsel %vm1974, %v1907, %v1396
      %v1982 = vsel %vm1974, %v1909, %v1398
      %v1984 = vsel %vm1974, %v1911, %v1400
      %v1986 = vsel %vm1974, %v1913, %v1402
      %v1988 = vsel %vm1974, %v1915, %v1404
      %v1990 = vsel %vm1974, %v1917, %v1406
      %v1992 = vsel %vm1974, %v1919, %v1408
      %v1994 = vsel %vm1974, %v1921, %v1410
      %v1996 = vsel %vm1974, %v1923, %v1412
      %v1998 = vsel %vm1974, %v1925, %v1414
      %v2000 = vsel %vm1974, %v1927, %v1416
      %v2002 = vsel %vm1974, %v1929, %v1418
      %v2004 = vsel %vm1974, %v1931, %v1420
      %v2006 = vsel %vm1974, %v1933, %v1422
      %v2008 = vsel %vm1974, %v1935, %v1424
      %v2010 = vsel %vm1974, %v1937, %v1426
      %v2012 = vsel %vm1974, %v1939, %v1428
      %v2014 = vsel %vm1974, %v1941, %v1430
      %v2016 = vsel %vm1974, %v1943, %v1432
      %v2018 = vsel %vm1974, %v1945, %v1434
      %v2020 = vsel %vm1974, %v1947, %v1436
      %v2022 = vsel %vm1974, %v1949, %v1438
      %v2024 = vsel %vm1974, %v1951, %v1440
      %v2026 = vsel %vm1974, %v1953, %v1442
      %v2028 = vsel %vm1974, %v1955, %v1444
      %v2030 = vsel %vm1974, %v1957, %v1446
      %v2032 = vsel %vm1974, %v1959, %v1448
      %v2034 = vsel %vm1974, %v1961, %v1450
      %v2036 = vsel %vm1974, %v1963, %v1452
      %v2038 = vsel %vm1974, %v1965, %v1454
      %v2040 = vsel %vm1974, %v1967, %v1456
      %v2042 = vsel %vm1974, %v1969, %v1458
      %v2044 = vsel %vm1974, %v1971, %v1460
      %v2046 = vsel %vm1974, %v1973, %v1462
      %v2047 = vshrl.u32 %v1976, 16
      %v2049 = vshll.u32 %v1976, 16
      %v2051 = vrot.slane %v2049, 1
      %v2052 = vor.u32 %v2047, %v2051
      %v2053 = vshll.u32 %v1978, 16
      %v2055 = vrot.slane %v2053, 1
      %v2056 = vsel %vm529, %v2052, %v2055
      %v2057 = vshrl.u32 %v1980, 16
      %v2059 = vshll.u32 %v1980, 16
      %v2061 = vrot.slane %v2059, 1
      %v2062 = vor.u32 %v2057, %v2061
      %v2063 = vshll.u32 %v1982, 16
      %v2065 = vrot.slane %v2063, 1
      %v2066 = vsel %vm529, %v2062, %v2065
      %v2067 = vshrl.u32 %v1984, 16
      %v2069 = vshll.u32 %v1984, 16
      %v2071 = vrot.slane %v2069, 1
      %v2072 = vor.u32 %v2067, %v2071
      %v2073 = vshll.u32 %v1986, 16
      %v2075 = vrot.slane %v2073, 1
      %v2076 = vsel %vm529, %v2072, %v2075
      %v2077 = vshrl.u32 %v1988, 16
      %v2079 = vshll.u32 %v1988, 16
      %v2081 = vrot.slane %v2079, 1
      %v2082 = vor.u32 %v2077, %v2081
      %v2083 = vshll.u32 %v1990, 16
      %v2085 = vrot.slane %v2083, 1
      %v2086 = vsel %vm529, %v2082, %v2085
      %v2087 = vshrl.u32 %v1992, 16
      %v2089 = vshll.u32 %v1992, 16
      %v2091 = vrot.slane %v2089, 1
      %v2092 = vor.u32 %v2087, %v2091
      %v2093 = vshll.u32 %v1994, 16
      %v2095 = vrot.slane %v2093, 1
      %v2096 = vsel %vm529, %v2092, %v2095
      %v2097 = vshrl.u32 %v1996, 16
      %v2099 = vshll.u32 %v1996, 16
      %v2101 = vrot.slane %v2099, 1
      %v2102 = vor.u32 %v2097, %v2101
      %v2103 = vshll.u32 %v1998, 16
      %v2105 = vrot.slane %v2103, 1
      %v2106 = vsel %vm529, %v2102, %v2105
      %v2107 = vshrl.u32 %v2000, 16
      %v2109 = vshll.u32 %v2000, 16
      %v2111 = vrot.slane %v2109, 1
      %v2112 = vor.u32 %v2107, %v2111
      %v2113 = vshll.u32 %v2002, 16
      %v2115 = vrot.slane %v2113, 1
      %v2116 = vsel %vm529, %v2112, %v2115
      %v2117 = vshrl.u32 %v2004, 16
      %v2119 = vshll.u32 %v2004, 16
      %v2121 = vrot.slane %v2119, 1
      %v2122 = vor.u32 %v2117, %v2121
      %v2123 = vshll.u32 %v2006, 16
      %v2125 = vrot.slane %v2123, 1
      %v2126 = vsel %vm529, %v2122, %v2125
      %v2127 = vshrl.u32 %v2008, 16
      %v2129 = vshll.u32 %v2008, 16
      %v2131 = vrot.slane %v2129, 1
      %v2132 = vor.u32 %v2127, %v2131
      %v2133 = vshll.u32 %v2010, 16
      %v2135 = vrot.slane %v2133, 1
      %v2136 = vsel %vm529, %v2132, %v2135
      %v2137 = vshrl.u32 %v2012, 16
      %v2139 = vshll.u32 %v2012, 16
      %v2141 = vrot.slane %v2139, 1
      %v2142 = vor.u32 %v2137, %v2141
      %v2143 = vshll.u32 %v2014, 16
      %v2145 = vrot.slane %v2143, 1
      %v2146 = vsel %vm529, %v2142, %v2145
      %v2147 = vshrl.u32 %v2016, 16
      %v2149 = vshll.u32 %v2016, 16
      %v2151 = vrot.slane %v2149, 1
      %v2152 = vor.u32 %v2147, %v2151
      %v2153 = vshll.u32 %v2018, 16
      %v2155 = vrot.slane %v2153, 1
      %v2156 = vsel %vm529, %v2152, %v2155
      %v2157 = vshrl.u32 %v2020, 16
      %v2159 = vshll.u32 %v2020, 16
      %v2161 = vrot.slane %v2159, 1
      %v2162 = vor.u32 %v2157, %v2161
      %v2163 = vshll.u32 %v2022, 16
      %v2165 = vrot.slane %v2163, 1
      %v2166 = vsel %vm529, %v2162, %v2165
      %v2167 = vshrl.u32 %v2024, 16
      %v2169 = vshll.u32 %v2024, 16
      %v2171 = vrot.slane %v2169, 1
      %v2172 = vor.u32 %v2167, %v2171
      %v2173 = vshll.u32 %v2026, 16
      %v2175 = vrot.slane %v2173, 1
      %v2176 = vsel %vm529, %v2172, %v2175
      %v2177 = vshrl.u32 %v2028, 16
      %v2179 = vshll.u32 %v2028, 16
      %v2181 = vrot.slane %v2179, 1
      %v2182 = vor.u32 %v2177, %v2181
      %v2183 = vshll.u32 %v2030, 16
      %v2185 = vrot.slane %v2183, 1
      %v2186 = vsel %vm529, %v2182, %v2185
      %v2187 = vshrl.u32 %v2032, 16
      %v2189 = vshll.u32 %v2032, 16
      %v2191 = vrot.slane %v2189, 1
      %v2192 = vor.u32 %v2187, %v2191
      %v2193 = vshll.u32 %v2034, 16
      %v2195 = vrot.slane %v2193, 1
      %v2196 = vsel %vm529, %v2192, %v2195
      %v2197 = vshrl.u32 %v2036, 16
      %v2199 = vshll.u32 %v2036, 16
      %v2201 = vrot.slane %v2199, 1
      %v2202 = vor.u32 %v2197, %v2201
      %v2203 = vshll.u32 %v2038, 16
      %v2205 = vrot.slane %v2203, 1
      %v2206 = vsel %vm529, %v2202, %v2205
      %v2207 = vshrl.u32 %v2040, 16
      %v2209 = vshll.u32 %v2040, 16
      %v2211 = vrot.slane %v2209, 1
      %v2212 = vor.u32 %v2207, %v2211
      %v2213 = vshll.u32 %v2042, 16
      %v2215 = vrot.slane %v2213, 1
      %v2216 = vsel %vm529, %v2212, %v2215
      %v2217 = vshrl.u32 %v2044, 16
      %v2219 = vshll.u32 %v2044, 16
      %v2221 = vrot.slane %v2219, 1
      %v2222 = vor.u32 %v2217, %v2221
      %v2223 = vshll.u32 %v2046, 16
      %v2225 = vrot.slane %v2223, 1
      %v2226 = vsel %vm529, %v2222, %v2225
      %v2227 = vld [vmem:[%s312] sm:$0xf]
      %v2228 = vld [vmem:[%s312 + $0x4] sm:$0xf]
      %v2229 = vld [vmem:[%s312 + $0x8] sm:$0x3]
      %v2230 = vld [vmem:[%s312 + $0xc] sm:$0xf]
      %v2231 = vld [vmem:[%s312 + $0x10] sm:$0xf]
      %v2232 = vld [vmem:[%s312 + $0x14] sm:$0x3]
      %v2233 = vld [vmem:[%s312 + $0x18] sm:$0xf]
      %v2234 = vld [vmem:[%s312 + $0x1c] sm:$0xf]
      %v2235 = vld [vmem:[%s312 + $0x20] sm:$0x3]
      %v2236 = vld [vmem:[%s312 + $0x24] sm:$0xf]
      %v2237 = vld [vmem:[%s312 + $0x28] sm:$0xf]
      %v2238 = vld [vmem:[%s312 + $0x2c] sm:$0x3]
      %v2239 = vld [vmem:[%s312 + $0x30] sm:$0xf]
      %v2240 = vld [vmem:[%s312 + $0x34] sm:$0xf]
      %v2241 = vld [vmem:[%s312 + $0x38] sm:$0x3]
      %v2242 = vld [vmem:[%s312 + $0x3c] sm:$0xf]
      %v2243 = vld [vmem:[%s312 + $0x40] sm:$0xf]
      %v2244 = vld [vmem:[%s312 + $0x44] sm:$0x3]
      %v2245 = vld [vmem:[%s312 + $0x48] sm:$0xf]
      %v2246 = vld [vmem:[%s312 + $0x4c] sm:$0xf]
      %v2247 = vld [vmem:[%s312 + $0x50] sm:$0x3]
      %v2248 = vld [vmem:[%s312 + $0x54] sm:$0xf]
      %v2249 = vld [vmem:[%s312 + $0x58] sm:$0xf]
      %v2250 = vld [vmem:[%s312 + $0x5c] sm:$0x3]
      %v2251 = vld [vmem:[%s312 + $0x60] sm:$0xf]
      %v2252 = vld [vmem:[%s312 + $0x64] sm:$0xf]
      %v2253 = vld [vmem:[%s312 + $0x68] sm:$0x3]
      %v2254 = vld [vmem:[%s312 + $0x6c] sm:$0xf]
      %v2255 = vld [vmem:[%s312 + $0x70] sm:$0xf]
      %v2256 = vld [vmem:[%s312 + $0x74] sm:$0x3]
      %v2257 = vld [vmem:[%s312 + $0x78] sm:$0xf]
      %v2258 = vld [vmem:[%s312 + $0x7c] sm:$0xf]
      %v2259 = vld [vmem:[%s312 + $0x80] sm:$0x3]
      %v2260 = vld [vmem:[%s312 + $0x84] sm:$0xf]
      %v2261 = vld [vmem:[%s312 + $0x88] sm:$0xf]
      %v2262 = vld [vmem:[%s312 + $0x8c] sm:$0x3]
      %v2263 = vld [vmem:[%s312 + $0x90] sm:$0xf]
      %v2264 = vld [vmem:[%s312 + $0x94] sm:$0xf]
      %v2265 = vld [vmem:[%s312 + $0x98] sm:$0x3]
      %v2266 = vld [vmem:[%s312 + $0x9c] sm:$0xf]
      %v2267 = vld [vmem:[%s312 + $0xa0] sm:$0xf]
      %v2268 = vld [vmem:[%s312 + $0xa4] sm:$0x3]
      %v2269 = vld [vmem:[%s312 + $0xa8] sm:$0xf]
      %v2270 = vld [vmem:[%s312 + $0xac] sm:$0xf]
      %v2271 = vld [vmem:[%s312 + $0xb0] sm:$0x3]
      %v2272 = vld [vmem:[%s312 + $0xb4] sm:$0xf]
      %v2273 = vld [vmem:[%s312 + $0xb8] sm:$0xf]
      %v2274 = vld [vmem:[%s312 + $0xbc] sm:$0x3]
      %v2275 = vld [vmem:[%s312 + $0xc0] sm:$0xf]
      %v2276 = vld [vmem:[%s312 + $0xc4] sm:$0xf]
      %v2277 = vld [vmem:[%s312 + $0xc8] sm:$0x3]
      %v2278 = vld [vmem:[%s312 + $0xcc] sm:$0xf]
      %v2279 = vld [vmem:[%s312 + $0xd0] sm:$0xf]
      %v2280 = vld [vmem:[%s312 + $0xd4] sm:$0x3]
      %v2281 = vld [vmem:[%s312 + $0xd8] sm:$0xf]
      %v2282 = vld [vmem:[%s312 + $0xdc] sm:$0xf]
      %v2283 = vld [vmem:[%s312 + $0xe0] sm:$0x3]
      %v2284 = vld [vmem:[%s312 + $0xe4] sm:$0xf]
      %v2285 = vld [vmem:[%s312 + $0xe8] sm:$0xf]
      %v2286 = vld [vmem:[%s312 + $0xec] sm:$0x3]
      %v2341 = vunpack.c.l.b16 %v2227
      %v2342 = vunpack.c.l.b16 %v2228
      %v2343 = vunpack.c.l.b16 %v2229
      %v2344 = vunpack.c.l.b16 %v2230
      %v2345 = vunpack.c.l.b16 %v2231
      %v2346 = vunpack.c.l.b16 %v2232
      %v2347 = vunpack.c.l.b16 %v2233
      %v2348 = vunpack.c.l.b16 %v2234
      %v2349 = vunpack.c.l.b16 %v2235
      %v2350 = vunpack.c.l.b16 %v2236
      %v2351 = vunpack.c.l.b16 %v2237
      %v2352 = vunpack.c.l.b16 %v2238
      %v2353 = vunpack.c.l.b16 %v2239
      %v2354 = vunpack.c.l.b16 %v2240
      %v2355 = vunpack.c.l.b16 %v2241
      %v2356 = vunpack.c.l.b16 %v2242
      %v2357 = vunpack.c.l.b16 %v2243
      %v2358 = vunpack.c.l.b16 %v2244
      %v2359 = vunpack.c.l.b16 %v2245
      %v2360 = vunpack.c.l.b16 %v2246
      %v2361 = vunpack.c.l.b16 %v2247
      %v2362 = vunpack.c.l.b16 %v2248
      %v2363 = vunpack.c.l.b16 %v2249
      %v2364 = vunpack.c.l.b16 %v2250
      %v2365 = vunpack.c.l.b16 %v2251
      %v2366 = vunpack.c.l.b16 %v2252
      %v2367 = vunpack.c.l.b16 %v2253
      %v2368 = vunpack.c.l.b16 %v2254
      %v2369 = vunpack.c.l.b16 %v2255
      %v2370 = vunpack.c.l.b16 %v2256
      %v2371 = vunpack.c.l.b16 %v2257
      %v2372 = vunpack.c.l.b16 %v2258
      %v2373 = vunpack.c.l.b16 %v2259
      %v2374 = vunpack.c.l.b16 %v2260
      %v2375 = vunpack.c.l.b16 %v2261
      %v2376 = vunpack.c.l.b16 %v2262
      %v2377 = vunpack.c.l.b16 %v2263
      %v2378 = vunpack.c.l.b16 %v2264
      %v2379 = vunpack.c.l.b16 %v2265
      %v2380 = vunpack.c.l.b16 %v2266
      %v2381 = vunpack.c.l.b16 %v2267
      %v2382 = vunpack.c.l.b16 %v2268
      %v2383 = vunpack.c.l.b16 %v2269
      %v2384 = vunpack.c.l.b16 %v2270
      %v2385 = vunpack.c.l.b16 %v2271
      %v2386 = vunpack.c.l.b16 %v2272
      %v2387 = vunpack.c.l.b16 %v2273
      %v2388 = vunpack.c.l.b16 %v2274
      %v2389 = vunpack.c.l.b16 %v2275
      %v2390 = vunpack.c.l.b16 %v2276
      %v2391 = vunpack.c.l.b16 %v2277
      %v2392 = vunpack.c.l.b16 %v2278
      %v2393 = vunpack.c.l.b16 %v2279
      %v2394 = vunpack.c.l.b16 %v2280
      %v2395 = vpack.c.b16 %v2342, %v2341
      %v2396 = vpack.c.b16 %v2343, %v2343
      %v2397 = vpack.c.b16 %v2345, %v2344
      %v2398 = vpack.c.b16 %v2346, %v2346
      %v2399 = vpack.c.b16 %v2348, %v2347
      %v2400 = vpack.c.b16 %v2349, %v2349
      %v2401 = vpack.c.b16 %v2351, %v2350
      %v2402 = vpack.c.b16 %v2352, %v2352
      %v2403 = vpack.c.b16 %v2354, %v2353
      %v2404 = vpack.c.b16 %v2355, %v2355
      %v2405 = vpack.c.b16 %v2357, %v2356
      %v2406 = vpack.c.b16 %v2358, %v2358
      %v2407 = vpack.c.b16 %v2360, %v2359
      %v2408 = vpack.c.b16 %v2361, %v2361
      %v2409 = vpack.c.b16 %v2363, %v2362
      %v2410 = vpack.c.b16 %v2364, %v2364
      %v2411 = vpack.c.b16 %v2366, %v2365
      %v2412 = vpack.c.b16 %v2367, %v2367
      %v2413 = vpack.c.b16 %v2369, %v2368
      %v2414 = vpack.c.b16 %v2370, %v2370
      %v2415 = vpack.c.b16 %v2372, %v2371
      %v2416 = vpack.c.b16 %v2373, %v2373
      %v2417 = vpack.c.b16 %v2375, %v2374
      %v2418 = vpack.c.b16 %v2376, %v2376
      %v2419 = vpack.c.b16 %v2378, %v2377
      %v2420 = vpack.c.b16 %v2379, %v2379
      %v2421 = vpack.c.b16 %v2381, %v2380
      %v2422 = vpack.c.b16 %v2382, %v2382
      %v2423 = vpack.c.b16 %v2384, %v2383
      %v2424 = vpack.c.b16 %v2385, %v2385
      %v2425 = vpack.c.b16 %v2387, %v2386
      %v2426 = vpack.c.b16 %v2388, %v2388
      %v2427 = vpack.c.b16 %v2390, %v2389
      %v2428 = vpack.c.b16 %v2391, %v2391
      %v2429 = vpack.c.b16 %v2393, %v2392
      %v2430 = vpack.c.b16 %v2394, %v2394
      %v2432 = vshrl.u32 %v2395, 16
      %v2434 = vshll.u32 %v2395, 16
      %v2436 = vrot.slane %v2434, 1
      %v2437 = vor.u32 %v2432, %v2436
      %v2439 = vshll.u32 %v2396, 16
      %v2441 = vrot.slane %v2439, 1
      %v2442 = vsel %vm529, %v2437, %v2441
      %v2443 = vshrl.u32 %v2396, 16
      %v2446 = vshrl.u32 %v2397, 16
      %v2448 = vshll.u32 %v2397, 16
      %v2450 = vrot.slane %v2448, 1
      %v2451 = vor.u32 %v2446, %v2450
      %v2453 = vshll.u32 %v2398, 16
      %v2455 = vrot.slane %v2453, 1
      %v2456 = vsel %vm529, %v2451, %v2455
      %v2457 = vshrl.u32 %v2398, 16
      %v2460 = vshrl.u32 %v2399, 16
      %v2462 = vshll.u32 %v2399, 16
      %v2464 = vrot.slane %v2462, 1
      %v2465 = vor.u32 %v2460, %v2464
      %v2467 = vshll.u32 %v2400, 16
      %v2469 = vrot.slane %v2467, 1
      %v2470 = vsel %vm529, %v2465, %v2469
      %v2471 = vshrl.u32 %v2400, 16
      %v2474 = vshrl.u32 %v2401, 16
      %v2476 = vshll.u32 %v2401, 16
      %v2478 = vrot.slane %v2476, 1
      %v2479 = vor.u32 %v2474, %v2478
      %v2481 = vshll.u32 %v2402, 16
      %v2483 = vrot.slane %v2481, 1
      %v2484 = vsel %vm529, %v2479, %v2483
      %v2485 = vshrl.u32 %v2402, 16
      %v2488 = vshrl.u32 %v2403, 16
      %v2490 = vshll.u32 %v2403, 16
      %v2492 = vrot.slane %v2490, 1
      %v2493 = vor.u32 %v2488, %v2492
      %v2495 = vshll.u32 %v2404, 16
      %v2497 = vrot.slane %v2495, 1
      %v2498 = vsel %vm529, %v2493, %v2497
      %v2499 = vshrl.u32 %v2404, 16
      %v2502 = vshrl.u32 %v2405, 16
      %v2504 = vshll.u32 %v2405, 16
      %v2506 = vrot.slane %v2504, 1
      %v2507 = vor.u32 %v2502, %v2506
      %v2509 = vshll.u32 %v2406, 16
      %v2511 = vrot.slane %v2509, 1
      %v2512 = vsel %vm529, %v2507, %v2511
      %v2513 = vshrl.u32 %v2406, 16
      %v2516 = vshrl.u32 %v2407, 16
      %v2518 = vshll.u32 %v2407, 16
      %v2520 = vrot.slane %v2518, 1
      %v2521 = vor.u32 %v2516, %v2520
      %v2523 = vshll.u32 %v2408, 16
      %v2525 = vrot.slane %v2523, 1
      %v2526 = vsel %vm529, %v2521, %v2525
      %v2527 = vshrl.u32 %v2408, 16
      %v2530 = vshrl.u32 %v2409, 16
      %v2532 = vshll.u32 %v2409, 16
      %v2534 = vrot.slane %v2532, 1
      %v2535 = vor.u32 %v2530, %v2534
      %v2537 = vshll.u32 %v2410, 16
      %v2539 = vrot.slane %v2537, 1
      %v2540 = vsel %vm529, %v2535, %v2539
      %v2541 = vshrl.u32 %v2410, 16
      %v2544 = vshrl.u32 %v2411, 16
      %v2546 = vshll.u32 %v2411, 16
      %v2548 = vrot.slane %v2546, 1
      %v2549 = vor.u32 %v2544, %v2548
      %v2551 = vshll.u32 %v2412, 16
      %v2553 = vrot.slane %v2551, 1
      %v2554 = vsel %vm529, %v2549, %v2553
      %v2555 = vshrl.u32 %v2412, 16
      %v2558 = vshrl.u32 %v2413, 16
      %v2560 = vshll.u32 %v2413, 16
      %v2562 = vrot.slane %v2560, 1
      %v2563 = vor.u32 %v2558, %v2562
      %v2565 = vshll.u32 %v2414, 16
      %v2567 = vrot.slane %v2565, 1
      %v2568 = vsel %vm529, %v2563, %v2567
      %v2569 = vshrl.u32 %v2414, 16
      %v2572 = vshrl.u32 %v2415, 16
      %v2574 = vshll.u32 %v2415, 16
      %v2576 = vrot.slane %v2574, 1
      %v2577 = vor.u32 %v2572, %v2576
      %v2579 = vshll.u32 %v2416, 16
      %v2581 = vrot.slane %v2579, 1
      %v2582 = vsel %vm529, %v2577, %v2581
      %v2583 = vshrl.u32 %v2416, 16
      %v2586 = vshrl.u32 %v2417, 16
      %v2588 = vshll.u32 %v2417, 16
      %v2590 = vrot.slane %v2588, 1
      %v2591 = vor.u32 %v2586, %v2590
      %v2593 = vshll.u32 %v2418, 16
      %v2595 = vrot.slane %v2593, 1
      %v2596 = vsel %vm529, %v2591, %v2595
      %v2597 = vshrl.u32 %v2418, 16
      %v2600 = vshrl.u32 %v2419, 16
      %v2602 = vshll.u32 %v2419, 16
      %v2604 = vrot.slane %v2602, 1
      %v2605 = vor.u32 %v2600, %v2604
      %v2607 = vshll.u32 %v2420, 16
      %v2609 = vrot.slane %v2607, 1
      %v2610 = vsel %vm529, %v2605, %v2609
      %v2611 = vshrl.u32 %v2420, 16
      %v2614 = vshrl.u32 %v2421, 16
      %v2616 = vshll.u32 %v2421, 16
      %v2618 = vrot.slane %v2616, 1
      %v2619 = vor.u32 %v2614, %v2618
      %v2621 = vshll.u32 %v2422, 16
      %v2623 = vrot.slane %v2621, 1
      %v2624 = vsel %vm529, %v2619, %v2623
      %v2625 = vshrl.u32 %v2422, 16
      %v2628 = vshrl.u32 %v2423, 16
      %v2630 = vshll.u32 %v2423, 16
      %v2632 = vrot.slane %v2630, 1
      %v2633 = vor.u32 %v2628, %v2632
      %v2635 = vshll.u32 %v2424, 16
      %v2637 = vrot.slane %v2635, 1
      %v2638 = vsel %vm529, %v2633, %v2637
      %v2639 = vshrl.u32 %v2424, 16
      %v2642 = vshrl.u32 %v2425, 16
      %v2644 = vshll.u32 %v2425, 16
      %v2646 = vrot.slane %v2644, 1
      %v2647 = vor.u32 %v2642, %v2646
      %v2649 = vshll.u32 %v2426, 16
      %v2651 = vrot.slane %v2649, 1
      %v2652 = vsel %vm529, %v2647, %v2651
      %v2653 = vshrl.u32 %v2426, 16
      %v2656 = vshrl.u32 %v2427, 16
      %v2658 = vshll.u32 %v2427, 16
      %v2660 = vrot.slane %v2658, 1
      %v2661 = vor.u32 %v2656, %v2660
      %v2663 = vshll.u32 %v2428, 16
      %v2665 = vrot.slane %v2663, 1
      %v2666 = vsel %vm529, %v2661, %v2665
      %v2667 = vshrl.u32 %v2428, 16
      %v2670 = vshrl.u32 %v2429, 16
      %v2672 = vshll.u32 %v2429, 16
      %v2674 = vrot.slane %v2672, 1
      %v2675 = vor.u32 %v2670, %v2674
      %v2677 = vshll.u32 %v2430, 16
      %v2679 = vrot.slane %v2677, 1
      %v2680 = vsel %vm529, %v2675, %v2679
      %v2681 = vshrl.u32 %v2430, 16
      %2683 = vrot.lane.b32.xlu0 %v2442, 4
      %v2684 = vpop.permute.xlu0 %2683
      %2685 = vrot.lane.b32.xlu0 %v2443, 4
      %v2686 = vpop.permute.xlu0 %2685
      %2687 = vrot.lane.b32.xlu0 %v2456, 4
      %v2688 = vpop.permute.xlu0 %2687
      %2689 = vrot.lane.b32.xlu0 %v2457, 4
      %v2690 = vpop.permute.xlu0 %2689
      %2691 = vrot.lane.b32.xlu0 %v2470, 4
      %v2692 = vpop.permute.xlu0 %2691
      %2693 = vrot.lane.b32.xlu0 %v2471, 4
      %v2694 = vpop.permute.xlu0 %2693
      %2695 = vrot.lane.b32.xlu0 %v2484, 4
      %v2696 = vpop.permute.xlu0 %2695
      %2697 = vrot.lane.b32.xlu0 %v2485, 4
      %v2698 = vpop.permute.xlu0 %2697
      %2699 = vrot.lane.b32.xlu0 %v2498, 4
      %v2700 = vpop.permute.xlu0 %2699
      %2701 = vrot.lane.b32.xlu0 %v2499, 4
      %v2702 = vpop.permute.xlu0 %2701
      %2703 = vrot.lane.b32.xlu0 %v2512, 4
      %v2704 = vpop.permute.xlu0 %2703
      %2705 = vrot.lane.b32.xlu0 %v2513, 4
      %v2706 = vpop.permute.xlu0 %2705
      %2707 = vrot.lane.b32.xlu0 %v2526, 4
      %v2708 = vpop.permute.xlu0 %2707
      %2709 = vrot.lane.b32.xlu0 %v2527, 4
      %v2710 = vpop.permute.xlu0 %2709
      %2711 = vrot.lane.b32.xlu0 %v2540, 4
      %v2712 = vpop.permute.xlu0 %2711
      %2713 = vrot.lane.b32.xlu0 %v2541, 4
      %v2714 = vpop.permute.xlu0 %2713
      %2715 = vrot.lane.b32.xlu0 %v2554, 4
      %v2716 = vpop.permute.xlu0 %2715
      %2717 = vrot.lane.b32.xlu0 %v2555, 4
      %v2718 = vpop.permute.xlu0 %2717
      %2719 = vrot.lane.b32.xlu0 %v2568, 4
      %v2720 = vpop.permute.xlu0 %2719
      %2721 = vrot.lane.b32.xlu0 %v2569, 4
      %v2722 = vpop.permute.xlu0 %2721
      %2723 = vrot.lane.b32.xlu0 %v2582, 4
      %v2724 = vpop.permute.xlu0 %2723
      %2725 = vrot.lane.b32.xlu0 %v2583, 4
      %v2726 = vpop.permute.xlu0 %2725
      %2727 = vrot.lane.b32.xlu0 %v2596, 4
      %v2728 = vpop.permute.xlu0 %2727
      %2729 = vrot.lane.b32.xlu0 %v2597, 4
      %v2730 = vpop.permute.xlu0 %2729
      %2731 = vrot.lane.b32.xlu0 %v2610, 4
      %v2732 = vpop.permute.xlu0 %2731
      %2733 = vrot.lane.b32.xlu0 %v2611, 4
      %v2734 = vpop.permute.xlu0 %2733
      %2735 = vrot.lane.b32.xlu0 %v2624, 4
      %v2736 = vpop.permute.xlu0 %2735
      %2737 = vrot.lane.b32.xlu0 %v2625, 4
      %v2738 = vpop.permute.xlu0 %2737
      %2739 = vrot.lane.b32.xlu0 %v2638, 4
      %v2740 = vpop.permute.xlu0 %2739
      %2741 = vrot.lane.b32.xlu0 %v2639, 4
      %v2742 = vpop.permute.xlu0 %2741
      %2743 = vrot.lane.b32.xlu0 %v2652, 4
      %v2744 = vpop.permute.xlu0 %2743
      %2745 = vrot.lane.b32.xlu0 %v2653, 4
      %v2746 = vpop.permute.xlu0 %2745
      %2747 = vrot.lane.b32.xlu0 %v2666, 4
      %v2748 = vpop.permute.xlu0 %2747
      %2749 = vrot.lane.b32.xlu0 %v2667, 4
      %v2750 = vpop.permute.xlu0 %2749
      %2751 = vrot.lane.b32.xlu0 %v2680, 4
      %v2752 = vpop.permute.xlu0 %2751
      %2753 = vrot.lane.b32.xlu0 %v2681, 4
      %v2754 = vpop.permute.xlu0 %2753
      %v2755 = vrot.slane %v2395, 1
      %v2756 = vrot.slane %v2396, 1
      %v2757 = vsel %vm854, %v2755, %v2756
      %v2758 = vrot.slane %v2397, 1
      %v2759 = vrot.slane %v2398, 1
      %v2760 = vsel %vm854, %v2758, %v2759
      %v2761 = vrot.slane %v2399, 1
      %v2762 = vrot.slane %v2400, 1
      %v2763 = vsel %vm854, %v2761, %v2762
      %v2764 = vrot.slane %v2401, 1
      %v2765 = vrot.slane %v2402, 1
      %v2766 = vsel %vm854, %v2764, %v2765
      %v2767 = vrot.slane %v2403, 1
      %v2768 = vrot.slane %v2404, 1
      %v2769 = vsel %vm854, %v2767, %v2768
      %v2770 = vrot.slane %v2405, 1
      %v2771 = vrot.slane %v2406, 1
      %v2772 = vsel %vm854, %v2770, %v2771
      %v2773 = vrot.slane %v2407, 1
      %v2774 = vrot.slane %v2408, 1
      %v2775 = vsel %vm854, %v2773, %v2774
      %v2776 = vrot.slane %v2409, 1
      %v2777 = vrot.slane %v2410, 1
      %v2778 = vsel %vm854, %v2776, %v2777
      %v2779 = vrot.slane %v2411, 1
      %v2780 = vrot.slane %v2412, 1
      %v2781 = vsel %vm854, %v2779, %v2780
      %v2782 = vrot.slane %v2413, 1
      %v2783 = vrot.slane %v2414, 1
      %v2784 = vsel %vm854, %v2782, %v2783
      %v2785 = vrot.slane %v2415, 1
      %v2786 = vrot.slane %v2416, 1
      %v2787 = vsel %vm854, %v2785, %v2786
      %v2788 = vrot.slane %v2417, 1
      %v2789 = vrot.slane %v2418, 1
      %v2790 = vsel %vm854, %v2788, %v2789
      %v2791 = vrot.slane %v2419, 1
      %v2792 = vrot.slane %v2420, 1
      %v2793 = vsel %vm854, %v2791, %v2792
      %v2794 = vrot.slane %v2421, 1
      %v2795 = vrot.slane %v2422, 1
      %v2796 = vsel %vm854, %v2794, %v2795
      %v2797 = vrot.slane %v2423, 1
      %v2798 = vrot.slane %v2424, 1
      %v2799 = vsel %vm854, %v2797, %v2798
      %v2800 = vrot.slane %v2425, 1
      %v2801 = vrot.slane %v2426, 1
      %v2802 = vsel %vm854, %v2800, %v2801
      %v2803 = vrot.slane %v2427, 1
      %v2804 = vrot.slane %v2428, 1
      %v2805 = vsel %vm854, %v2803, %v2804
      %v2806 = vrot.slane %v2429, 1
      %v2807 = vrot.slane %v2430, 1
      %v2808 = vsel %vm854, %v2806, %v2807
      %2809 = vrot.lane.b32.xlu0 %v2757, 8
      %v2810 = vpop.permute.xlu0 %2809
      %2811 = vrot.lane.b32.xlu0 %v2756, 8
      %v2812 = vpop.permute.xlu0 %2811
      %2813 = vrot.lane.b32.xlu0 %v2760, 8
      %v2814 = vpop.permute.xlu0 %2813
      %2815 = vrot.lane.b32.xlu0 %v2759, 8
      %v2816 = vpop.permute.xlu0 %2815
      %2817 = vrot.lane.b32.xlu0 %v2763, 8
      %v2818 = vpop.permute.xlu0 %2817
      %2819 = vrot.lane.b32.xlu0 %v2762, 8
      %v2820 = vpop.permute.xlu0 %2819
      %2821 = vrot.lane.b32.xlu0 %v2766, 8
      %v2822 = vpop.permute.xlu0 %2821
      %2823 = vrot.lane.b32.xlu0 %v2765, 8
      %v2824 = vpop.permute.xlu0 %2823
      %2825 = vrot.lane.b32.xlu0 %v2769, 8
      %v2826 = vpop.permute.xlu0 %2825
      %2827 = vrot.lane.b32.xlu0 %v2768, 8
      %v2828 = vpop.permute.xlu0 %2827
      %2829 = vrot.lane.b32.xlu0 %v2772, 8
      %v2830 = vpop.permute.xlu0 %2829
      %2831 = vrot.lane.b32.xlu0 %v2771, 8
      %v2832 = vpop.permute.xlu0 %2831
      %2833 = vrot.lane.b32.xlu0 %v2775, 8
      %v2834 = vpop.permute.xlu0 %2833
      %2835 = vrot.lane.b32.xlu0 %v2774, 8
      %v2836 = vpop.permute.xlu0 %2835
      %2837 = vrot.lane.b32.xlu0 %v2778, 8
      %v2838 = vpop.permute.xlu0 %2837
      %2839 = vrot.lane.b32.xlu0 %v2777, 8
      %v2840 = vpop.permute.xlu0 %2839
      %2841 = vrot.lane.b32.xlu0 %v2781, 8
      %v2842 = vpop.permute.xlu0 %2841
      %2843 = vrot.lane.b32.xlu0 %v2780, 8
      %v2844 = vpop.permute.xlu0 %2843
      %2845 = vrot.lane.b32.xlu0 %v2784, 8
      %v2846 = vpop.permute.xlu0 %2845
      %2847 = vrot.lane.b32.xlu0 %v2783, 8
      %v2848 = vpop.permute.xlu0 %2847
      %2849 = vrot.lane.b32.xlu0 %v2787, 8
      %v2850 = vpop.permute.xlu0 %2849
      %2851 = vrot.lane.b32.xlu0 %v2786, 8
      %v2852 = vpop.permute.xlu0 %2851
      %2853 = vrot.lane.b32.xlu0 %v2790, 8
      %v2854 = vpop.permute.xlu0 %2853
      %2855 = vrot.lane.b32.xlu0 %v2789, 8
      %v2856 = vpop.permute.xlu0 %2855
      %2857 = vrot.lane.b32.xlu0 %v2793, 8
      %v2858 = vpop.permute.xlu0 %2857
      %2859 = vrot.lane.b32.xlu0 %v2792, 8
      %v2860 = vpop.permute.xlu0 %2859
      %2861 = vrot.lane.b32.xlu0 %v2796, 8
      %v2862 = vpop.permute.xlu0 %2861
      %2863 = vrot.lane.b32.xlu0 %v2795, 8
      %v2864 = vpop.permute.xlu0 %2863
      %2865 = vrot.lane.b32.xlu0 %v2799, 8
      %v2866 = vpop.permute.xlu0 %2865
      %2867 = vrot.lane.b32.xlu0 %v2798, 8
      %v2868 = vpop.permute.xlu0 %2867
      %2869 = vrot.lane.b32.xlu0 %v2802, 8
      %v2870 = vpop.permute.xlu0 %2869
      %2871 = vrot.lane.b32.xlu0 %v2801, 8
      %v2872 = vpop.permute.xlu0 %2871
      %2873 = vrot.lane.b32.xlu0 %v2805, 8
      %v2874 = vpop.permute.xlu0 %2873
      %2875 = vrot.lane.b32.xlu0 %v2804, 8
      %v2876 = vpop.permute.xlu0 %2875
      %2877 = vrot.lane.b32.xlu0 %v2808, 8
      %v2878 = vpop.permute.xlu0 %2877
      %2879 = vrot.lane.b32.xlu0 %v2807, 8
      %v2880 = vpop.permute.xlu0 %2879
      %v2884 = vunpack.c.l.b16 %v2281
      %v2885 = vunpack.c.l.b16 %v2282
      %v2886 = vunpack.c.l.b16 %v2283
      %v2887 = vpack.c.b16 %v2885, %v2884
      %v2888 = vpack.c.b16 %v2886, %v2886
      %2889 = vrot.lane.b32.xlu0 %v2397, 12
      %v2890 = vpop.permute.xlu0 %2889
      %2891 = vrot.lane.b32.xlu0 %v2398, 12
      %v2892 = vpop.permute.xlu0 %2891
      %2893 = vrot.lane.b32.xlu0 %v2399, 12
      %v2894 = vpop.permute.xlu0 %2893
      %2895 = vrot.lane.b32.xlu0 %v2400, 12
      %v2896 = vpop.permute.xlu0 %2895
      %2897 = vrot.lane.b32.xlu0 %v2401, 12
      %v2898 = vpop.permute.xlu0 %2897
      %2899 = vrot.lane.b32.xlu0 %v2402, 12
      %v2900 = vpop.permute.xlu0 %2899
      %2901 = vrot.lane.b32.xlu0 %v2403, 12
      %v2902 = vpop.permute.xlu0 %2901
      %2903 = vrot.lane.b32.xlu0 %v2404, 12
      %v2904 = vpop.permute.xlu0 %2903
      %2905 = vrot.lane.b32.xlu0 %v2405, 12
      %v2906 = vpop.permute.xlu0 %2905
      %2907 = vrot.lane.b32.xlu0 %v2406, 12
      %v2908 = vpop.permute.xlu0 %2907
      %2909 = vrot.lane.b32.xlu0 %v2407, 12
      %v2910 = vpop.permute.xlu0 %2909
      %2911 = vrot.lane.b32.xlu0 %v2408, 12
      %v2912 = vpop.permute.xlu0 %2911
      %2913 = vrot.lane.b32.xlu0 %v2409, 12
      %v2914 = vpop.permute.xlu0 %2913
      %2915 = vrot.lane.b32.xlu0 %v2410, 12
      %v2916 = vpop.permute.xlu0 %2915
      %2917 = vrot.lane.b32.xlu0 %v2411, 12
      %v2918 = vpop.permute.xlu0 %2917
      %2919 = vrot.lane.b32.xlu0 %v2412, 12
      %v2920 = vpop.permute.xlu0 %2919
      %2921 = vrot.lane.b32.xlu0 %v2413, 12
      %v2922 = vpop.permute.xlu0 %2921
      %2923 = vrot.lane.b32.xlu0 %v2414, 12
      %v2924 = vpop.permute.xlu0 %2923
      %2925 = vrot.lane.b32.xlu0 %v2415, 12
      %v2926 = vpop.permute.xlu0 %2925
      %2927 = vrot.lane.b32.xlu0 %v2416, 12
      %v2928 = vpop.permute.xlu0 %2927
      %2929 = vrot.lane.b32.xlu0 %v2417, 12
      %v2930 = vpop.permute.xlu0 %2929
      %2931 = vrot.lane.b32.xlu0 %v2418, 12
      %v2932 = vpop.permute.xlu0 %2931
      %2933 = vrot.lane.b32.xlu0 %v2419, 12
      %v2934 = vpop.permute.xlu0 %2933
      %2935 = vrot.lane.b32.xlu0 %v2420, 12
      %v2936 = vpop.permute.xlu0 %2935
      %2937 = vrot.lane.b32.xlu0 %v2421, 12
      %v2938 = vpop.permute.xlu0 %2937
      %2939 = vrot.lane.b32.xlu0 %v2422, 12
      %v2940 = vpop.permute.xlu0 %2939
      %2941 = vrot.lane.b32.xlu0 %v2423, 12
      %v2942 = vpop.permute.xlu0 %2941
      %2943 = vrot.lane.b32.xlu0 %v2424, 12
      %v2944 = vpop.permute.xlu0 %2943
      %2945 = vrot.lane.b32.xlu0 %v2425, 12
      %v2946 = vpop.permute.xlu0 %2945
      %2947 = vrot.lane.b32.xlu0 %v2426, 12
      %v2948 = vpop.permute.xlu0 %2947
      %2949 = vrot.lane.b32.xlu0 %v2427, 12
      %v2950 = vpop.permute.xlu0 %2949
      %2951 = vrot.lane.b32.xlu0 %v2428, 12
      %v2952 = vpop.permute.xlu0 %2951
      %2953 = vrot.lane.b32.xlu0 %v2429, 12
      %v2954 = vpop.permute.xlu0 %2953
      %2955 = vrot.lane.b32.xlu0 %v2430, 12
      %v2956 = vpop.permute.xlu0 %2955
      %2957 = vrot.lane.b32.xlu0 %v2887, 12
      %v2958 = vpop.permute.xlu0 %2957
      %2959 = vrot.lane.b32.xlu0 %v2888, 12
      %v2960 = vpop.permute.xlu0 %2959
      %v2962 = vshrl.u32 %v2887, 16
      %v2964 = vshll.u32 %v2887, 16
      %v2966 = vrot.slane %v2964, 1
      %v2967 = vor.u32 %v2962, %v2966
      %v2969 = vshll.u32 %v2888, 16
      %v2971 = vrot.slane %v2969, 1
      %v2972 = vsel %vm529, %v2967, %v2971
      %v2973 = vshrl.u32 %v2888, 16
      %2975 = vrot.lane.b32.xlu0 %v2456, 16
      %v2976 = vpop.permute.xlu0 %2975
      %2977 = vrot.lane.b32.xlu0 %v2457, 16
      %v2978 = vpop.permute.xlu0 %2977
      %2979 = vrot.lane.b32.xlu0 %v2470, 16
      %v2980 = vpop.permute.xlu0 %2979
      %2981 = vrot.lane.b32.xlu0 %v2471, 16
      %v2982 = vpop.permute.xlu0 %2981
      %2983 = vrot.lane.b32.xlu0 %v2484, 16
      %v2984 = vpop.permute.xlu0 %2983
      %2985 = vrot.lane.b32.xlu0 %v2485, 16
      %v2986 = vpop.permute.xlu0 %2985
      %2987 = vrot.lane.b32.xlu0 %v2498, 16
      %v2988 = vpop.permute.xlu0 %2987
      %2989 = vrot.lane.b32.xlu0 %v2499, 16
      %v2990 = vpop.permute.xlu0 %2989
      %2991 = vrot.lane.b32.xlu0 %v2512, 16
      %v2992 = vpop.permute.xlu0 %2991
      %2993 = vrot.lane.b32.xlu0 %v2513, 16
      %v2994 = vpop.permute.xlu0 %2993
      %2995 = vrot.lane.b32.xlu0 %v2526, 16
      %v2996 = vpop.permute.xlu0 %2995
      %2997 = vrot.lane.b32.xlu0 %v2527, 16
      %v2998 = vpop.permute.xlu0 %2997
      %2999 = vrot.lane.b32.xlu0 %v2540, 16
      %v3000 = vpop.permute.xlu0 %2999
      %3001 = vrot.lane.b32.xlu0 %v2541, 16
      %v3002 = vpop.permute.xlu0 %3001
      %3003 = vrot.lane.b32.xlu0 %v2554, 16
      %v3004 = vpop.permute.xlu0 %3003
      %3005 = vrot.lane.b32.xlu0 %v2555, 16
      %v3006 = vpop.permute.xlu0 %3005
      %3007 = vrot.lane.b32.xlu0 %v2568, 16
      %v3008 = vpop.permute.xlu0 %3007
      %3009 = vrot.lane.b32.xlu0 %v2569, 16
      %v3010 = vpop.permute.xlu0 %3009
      %3011 = vrot.lane.b32.xlu0 %v2582, 16
      %v3012 = vpop.permute.xlu0 %3011
      %3013 = vrot.lane.b32.xlu0 %v2583, 16
      %v3014 = vpop.permute.xlu0 %3013
      %3015 = vrot.lane.b32.xlu0 %v2596, 16
      %v3016 = vpop.permute.xlu0 %3015
      %3017 = vrot.lane.b32.xlu0 %v2597, 16
      %v3018 = vpop.permute.xlu0 %3017
      %3019 = vrot.lane.b32.xlu0 %v2610, 16
      %v3020 = vpop.permute.xlu0 %3019
      %3021 = vrot.lane.b32.xlu0 %v2611, 16
      %v3022 = vpop.permute.xlu0 %3021
      %3023 = vrot.lane.b32.xlu0 %v2624, 16
      %v3024 = vpop.permute.xlu0 %3023
      %3025 = vrot.lane.b32.xlu0 %v2625, 16
      %v3026 = vpop.permute.xlu0 %3025
      %3027 = vrot.lane.b32.xlu0 %v2638, 16
      %v3028 = vpop.permute.xlu0 %3027
      %3029 = vrot.lane.b32.xlu0 %v2639, 16
      %v3030 = vpop.permute.xlu0 %3029
      %3031 = vrot.lane.b32.xlu0 %v2652, 16
      %v3032 = vpop.permute.xlu0 %3031
      %3033 = vrot.lane.b32.xlu0 %v2653, 16
      %v3034 = vpop.permute.xlu0 %3033
      %3035 = vrot.lane.b32.xlu0 %v2666, 16
      %v3036 = vpop.permute.xlu0 %3035
      %3037 = vrot.lane.b32.xlu0 %v2667, 16
      %v3038 = vpop.permute.xlu0 %3037
      %3039 = vrot.lane.b32.xlu0 %v2680, 16
      %v3040 = vpop.permute.xlu0 %3039
      %3041 = vrot.lane.b32.xlu0 %v2681, 16
      %v3042 = vpop.permute.xlu0 %3041
      %3043 = vrot.lane.b32.xlu0 %v2972, 16
      %v3044 = vpop.permute.xlu0 %3043
      %3045 = vrot.lane.b32.xlu0 %v2973, 16
      %v3046 = vpop.permute.xlu0 %3045
      %v3047 = vrot.slane %v2887, 1
      %v3048 = vrot.slane %v2888, 1
      %v3049 = vsel %vm854, %v3047, %v3048
      %3050 = vrot.lane.b32.xlu0 %v2760, 20
      %v3051 = vpop.permute.xlu0 %3050
      %3052 = vrot.lane.b32.xlu0 %v2759, 20
      %v3053 = vpop.permute.xlu0 %3052
      %3054 = vrot.lane.b32.xlu0 %v2763, 20
      %v3055 = vpop.permute.xlu0 %3054
      %3056 = vrot.lane.b32.xlu0 %v2762, 20
      %v3057 = vpop.permute.xlu0 %3056
      %3058 = vrot.lane.b32.xlu0 %v2766, 20
      %v3059 = vpop.permute.xlu0 %3058
      %3060 = vrot.lane.b32.xlu0 %v2765, 20
      %v3061 = vpop.permute.xlu0 %3060
      %3062 = vrot.lane.b32.xlu0 %v2769, 20
      %v3063 = vpop.permute.xlu0 %3062
      %3064 = vrot.lane.b32.xlu0 %v2768, 20
      %v3065 = vpop.permute.xlu0 %3064
      %3066 = vrot.lane.b32.xlu0 %v2772, 20
      %v3067 = vpop.permute.xlu0 %3066
      %3068 = vrot.lane.b32.xlu0 %v2771, 20
      %v3069 = vpop.permute.xlu0 %3068
      %3070 = vrot.lane.b32.xlu0 %v2775, 20
      %v3071 = vpop.permute.xlu0 %3070
      %3072 = vrot.lane.b32.xlu0 %v2774, 20
      %v3073 = vpop.permute.xlu0 %3072
      %3074 = vrot.lane.b32.xlu0 %v2778, 20
      %v3075 = vpop.permute.xlu0 %3074
      %3076 = vrot.lane.b32.xlu0 %v2777, 20
      %v3077 = vpop.permute.xlu0 %3076
      %3078 = vrot.lane.b32.xlu0 %v2781, 20
      %v3079 = vpop.permute.xlu0 %3078
      %3080 = vrot.lane.b32.xlu0 %v2780, 20
      %v3081 = vpop.permute.xlu0 %3080
      %3082 = vrot.lane.b32.xlu0 %v2784, 20
      %v3083 = vpop.permute.xlu0 %3082
      %3084 = vrot.lane.b32.xlu0 %v2783, 20
      %v3085 = vpop.permute.xlu0 %3084
      %3086 = vrot.lane.b32.xlu0 %v2787, 20
      %v3087 = vpop.permute.xlu0 %3086
      %3088 = vrot.lane.b32.xlu0 %v2786, 20
      %v3089 = vpop.permute.xlu0 %3088
      %3090 = vrot.lane.b32.xlu0 %v2790, 20
      %v3091 = vpop.permute.xlu0 %3090
      %3092 = vrot.lane.b32.xlu0 %v2789, 20
      %v3093 = vpop.permute.xlu0 %3092
      %3094 = vrot.lane.b32.xlu0 %v2793, 20
      %v3095 = vpop.permute.xlu0 %3094
      %3096 = vrot.lane.b32.xlu0 %v2792, 20
      %v3097 = vpop.permute.xlu0 %3096
      %3098 = vrot.lane.b32.xlu0 %v2796, 20
      %v3099 = vpop.permute.xlu0 %3098
      %3100 = vrot.lane.b32.xlu0 %v2795, 20
      %v3101 = vpop.permute.xlu0 %3100
      %3102 = vrot.lane.b32.xlu0 %v2799, 20
      %v3103 = vpop.permute.xlu0 %3102
      %3104 = vrot.lane.b32.xlu0 %v2798, 20
      %v3105 = vpop.permute.xlu0 %3104
      %3106 = vrot.lane.b32.xlu0 %v2802, 20
      %v3107 = vpop.permute.xlu0 %3106
      %3108 = vrot.lane.b32.xlu0 %v2801, 20
      %v3109 = vpop.permute.xlu0 %3108
      %3110 = vrot.lane.b32.xlu0 %v2805, 20
      %v3111 = vpop.permute.xlu0 %3110
      %3112 = vrot.lane.b32.xlu0 %v2804, 20
      %v3113 = vpop.permute.xlu0 %3112
      %3114 = vrot.lane.b32.xlu0 %v2808, 20
      %v3115 = vpop.permute.xlu0 %3114
      %3116 = vrot.lane.b32.xlu0 %v2807, 20
      %v3117 = vpop.permute.xlu0 %3116
      %3118 = vrot.lane.b32.xlu0 %v3049, 20
      %v3119 = vpop.permute.xlu0 %3118
      %3120 = vrot.lane.b32.xlu0 %v3048, 20
      %v3121 = vpop.permute.xlu0 %3120
      %v3125 = vunpack.c.l.b16 %v2284
      %v3126 = vunpack.c.l.b16 %v2285
      %v3127 = vunpack.c.l.b16 %v2286
      %v3128 = vpack.c.b16 %v3126, %v3125
      %v3129 = vpack.c.b16 %v3127, %v3127
      %3130 = vrot.lane.b32.xlu0 %v2399, 24
      %v3131 = vpop.permute.xlu0 %3130
      %3132 = vrot.lane.b32.xlu0 %v2400, 24
      %v3133 = vpop.permute.xlu0 %3132
      %3134 = vrot.lane.b32.xlu0 %v2401, 24
      %v3135 = vpop.permute.xlu0 %3134
      %3136 = vrot.lane.b32.xlu0 %v2402, 24
      %v3137 = vpop.permute.xlu0 %3136
      %3138 = vrot.lane.b32.xlu0 %v2403, 24
      %v3139 = vpop.permute.xlu0 %3138
      %3140 = vrot.lane.b32.xlu0 %v2404, 24
      %v3141 = vpop.permute.xlu0 %3140
      %3142 = vrot.lane.b32.xlu0 %v2405, 24
      %v3143 = vpop.permute.xlu0 %3142
      %3144 = vrot.lane.b32.xlu0 %v2406, 24
      %v3145 = vpop.permute.xlu0 %3144
      %3146 = vrot.lane.b32.xlu0 %v2407, 24
      %v3147 = vpop.permute.xlu0 %3146
      %3148 = vrot.lane.b32.xlu0 %v2408, 24
      %v3149 = vpop.permute.xlu0 %3148
      %3150 = vrot.lane.b32.xlu0 %v2409, 24
      %v3151 = vpop.permute.xlu0 %3150
      %3152 = vrot.lane.b32.xlu0 %v2410, 24
      %v3153 = vpop.permute.xlu0 %3152
      %3154 = vrot.lane.b32.xlu0 %v2411, 24
      %v3155 = vpop.permute.xlu0 %3154
      %3156 = vrot.lane.b32.xlu0 %v2412, 24
      %v3157 = vpop.permute.xlu0 %3156
      %3158 = vrot.lane.b32.xlu0 %v2413, 24
      %v3159 = vpop.permute.xlu0 %3158
      %3160 = vrot.lane.b32.xlu0 %v2414, 24
      %v3161 = vpop.permute.xlu0 %3160
      %3162 = vrot.lane.b32.xlu0 %v2415, 24
      %v3163 = vpop.permute.xlu0 %3162
      %3164 = vrot.lane.b32.xlu0 %v2416, 24
      %v3165 = vpop.permute.xlu0 %3164
      %3166 = vrot.lane.b32.xlu0 %v2417, 24
      %v3167 = vpop.permute.xlu0 %3166
      %3168 = vrot.lane.b32.xlu0 %v2418, 24
      %v3169 = vpop.permute.xlu0 %3168
      %3170 = vrot.lane.b32.xlu0 %v2419, 24
      %v3171 = vpop.permute.xlu0 %3170
      %3172 = vrot.lane.b32.xlu0 %v2420, 24
      %v3173 = vpop.permute.xlu0 %3172
      %3174 = vrot.lane.b32.xlu0 %v2421, 24
      %v3175 = vpop.permute.xlu0 %3174
      %3176 = vrot.lane.b32.xlu0 %v2422, 24
      %v3177 = vpop.permute.xlu0 %3176
      %3178 = vrot.lane.b32.xlu0 %v2423, 24
      %v3179 = vpop.permute.xlu0 %3178
      %3180 = vrot.lane.b32.xlu0 %v2424, 24
      %v3181 = vpop.permute.xlu0 %3180
      %3182 = vrot.lane.b32.xlu0 %v2425, 24
      %v3183 = vpop.permute.xlu0 %3182
      %3184 = vrot.lane.b32.xlu0 %v2426, 24
      %v3185 = vpop.permute.xlu0 %3184
      %3186 = vrot.lane.b32.xlu0 %v2427, 24
      %v3187 = vpop.permute.xlu0 %3186
      %3188 = vrot.lane.b32.xlu0 %v2428, 24
      %v3189 = vpop.permute.xlu0 %3188
      %3190 = vrot.lane.b32.xlu0 %v2429, 24
      %v3191 = vpop.permute.xlu0 %3190
      %3192 = vrot.lane.b32.xlu0 %v2430, 24
      %v3193 = vpop.permute.xlu0 %3192
      %3194 = vrot.lane.b32.xlu0 %v2887, 24
      %v3195 = vpop.permute.xlu0 %3194
      %3196 = vrot.lane.b32.xlu0 %v2888, 24
      %v3197 = vpop.permute.xlu0 %3196
      %3198 = vrot.lane.b32.xlu0 %v3128, 24
      %v3199 = vpop.permute.xlu0 %3198
      %3200 = vrot.lane.b32.xlu0 %v3129, 24
      %v3201 = vpop.permute.xlu0 %3200
      %v3203 = vshrl.u32 %v3128, 16
      %v3205 = vshll.u32 %v3128, 16
      %v3207 = vrot.slane %v3205, 1
      %v3208 = vor.u32 %v3203, %v3207
      %v3210 = vshll.u32 %v3129, 16
      %v3212 = vrot.slane %v3210, 1
      %v3213 = vsel %vm529, %v3208, %v3212
      %v3214 = vshrl.u32 %v3129, 16
      %3216 = vrot.lane.b32.xlu0 %v2470, 28
      %v3217 = vpop.permute.xlu0 %3216
      %3218 = vrot.lane.b32.xlu0 %v2471, 28
      %v3219 = vpop.permute.xlu0 %3218
      %3220 = vrot.lane.b32.xlu0 %v2484, 28
      %v3221 = vpop.permute.xlu0 %3220
      %3222 = vrot.lane.b32.xlu0 %v2485, 28
      %v3223 = vpop.permute.xlu0 %3222
      %3224 = vrot.lane.b32.xlu0 %v2498, 28
      %v3225 = vpop.permute.xlu0 %3224
      %3226 = vrot.lane.b32.xlu0 %v2499, 28
      %v3227 = vpop.permute.xlu0 %3226
      %3228 = vrot.lane.b32.xlu0 %v2512, 28
      %v3229 = vpop.permute.xlu0 %3228
      %3230 = vrot.lane.b32.xlu0 %v2513, 28
      %v3231 = vpop.permute.xlu0 %3230
      %3232 = vrot.lane.b32.xlu0 %v2526, 28
      %v3233 = vpop.permute.xlu0 %3232
      %3234 = vrot.lane.b32.xlu0 %v2527, 28
      %v3235 = vpop.permute.xlu0 %3234
      %3236 = vrot.lane.b32.xlu0 %v2540, 28
      %v3237 = vpop.permute.xlu0 %3236
      %3238 = vrot.lane.b32.xlu0 %v2541, 28
      %v3239 = vpop.permute.xlu0 %3238
      %3240 = vrot.lane.b32.xlu0 %v2554, 28
      %v3241 = vpop.permute.xlu0 %3240
      %3242 = vrot.lane.b32.xlu0 %v2555, 28
      %v3243 = vpop.permute.xlu0 %3242
      %3244 = vrot.lane.b32.xlu0 %v2568, 28
      %v3245 = vpop.permute.xlu0 %3244
      %3246 = vrot.lane.b32.xlu0 %v2569, 28
      %v3247 = vpop.permute.xlu0 %3246
      %3248 = vrot.lane.b32.xlu0 %v2582, 28
      %v3249 = vpop.permute.xlu0 %3248
      %3250 = vrot.lane.b32.xlu0 %v2583, 28
      %v3251 = vpop.permute.xlu0 %3250
      %3252 = vrot.lane.b32.xlu0 %v2596, 28
      %v3253 = vpop.permute.xlu0 %3252
      %3254 = vrot.lane.b32.xlu0 %v2597, 28
      %v3255 = vpop.permute.xlu0 %3254
      %3256 = vrot.lane.b32.xlu0 %v2610, 28
      %v3257 = vpop.permute.xlu0 %3256
      %3258 = vrot.lane.b32.xlu0 %v2611, 28
      %v3259 = vpop.permute.xlu0 %3258
      %3260 = vrot.lane.b32.xlu0 %v2624, 28
      %v3261 = vpop.permute.xlu0 %3260
      %3262 = vrot.lane.b32.xlu0 %v2625, 28
      %v3263 = vpop.permute.xlu0 %3262
      %3264 = vrot.lane.b32.xlu0 %v2638, 28
      %v3265 = vpop.permute.xlu0 %3264
      %3266 = vrot.lane.b32.xlu0 %v2639, 28
      %v3267 = vpop.permute.xlu0 %3266
      %3268 = vrot.lane.b32.xlu0 %v2652, 28
      %v3269 = vpop.permute.xlu0 %3268
      %3270 = vrot.lane.b32.xlu0 %v2653, 28
      %v3271 = vpop.permute.xlu0 %3270
      %3272 = vrot.lane.b32.xlu0 %v2666, 28
      %v3273 = vpop.permute.xlu0 %3272
      %3274 = vrot.lane.b32.xlu0 %v2667, 28
      %v3275 = vpop.permute.xlu0 %3274
      %3276 = vrot.lane.b32.xlu0 %v2680, 28
      %v3277 = vpop.permute.xlu0 %3276
      %3278 = vrot.lane.b32.xlu0 %v2681, 28
      %v3279 = vpop.permute.xlu0 %3278
      %3280 = vrot.lane.b32.xlu0 %v2972, 28
      %v3281 = vpop.permute.xlu0 %3280
      %3282 = vrot.lane.b32.xlu0 %v2973, 28
      %v3283 = vpop.permute.xlu0 %3282
      %3284 = vrot.lane.b32.xlu0 %v3213, 28
      %v3285 = vpop.permute.xlu0 %3284
      %3286 = vrot.lane.b32.xlu0 %v3214, 28
      %v3287 = vpop.permute.xlu0 %3286
      %v3288 = vrot.slane %v3128, 1
      %v3289 = vrot.slane %v3129, 1
      %v3290 = vsel %vm854, %v3288, %v3289
      %3291 = vrot.lane.b32.xlu0 %v2763, 32
      %v3292 = vpop.permute.xlu0 %3291
      %3293 = vrot.lane.b32.xlu0 %v2762, 32
      %v3294 = vpop.permute.xlu0 %3293
      %3295 = vrot.lane.b32.xlu0 %v2766, 32
      %v3296 = vpop.permute.xlu0 %3295
      %3297 = vrot.lane.b32.xlu0 %v2765, 32
      %v3298 = vpop.permute.xlu0 %3297
      %3299 = vrot.lane.b32.xlu0 %v2769, 32
      %v3300 = vpop.permute.xlu0 %3299
      %3301 = vrot.lane.b32.xlu0 %v2768, 32
      %v3302 = vpop.permute.xlu0 %3301
      %3303 = vrot.lane.b32.xlu0 %v2772, 32
      %v3304 = vpop.permute.xlu0 %3303
      %3305 = vrot.lane.b32.xlu0 %v2771, 32
      %v3306 = vpop.permute.xlu0 %3305
      %3307 = vrot.lane.b32.xlu0 %v2775, 32
      %v3308 = vpop.permute.xlu0 %3307
      %3309 = vrot.lane.b32.xlu0 %v2774, 32
      %v3310 = vpop.permute.xlu0 %3309
      %3311 = vrot.lane.b32.xlu0 %v2778, 32
      %v3312 = vpop.permute.xlu0 %3311
      %3313 = vrot.lane.b32.xlu0 %v2777, 32
      %v3314 = vpop.permute.xlu0 %3313
      %3315 = vrot.lane.b32.xlu0 %v2781, 32
      %v3316 = vpop.permute.xlu0 %3315
      %3317 = vrot.lane.b32.xlu0 %v2780, 32
      %v3318 = vpop.permute.xlu0 %3317
      %3319 = vrot.lane.b32.xlu0 %v2784, 32
      %v3320 = vpop.permute.xlu0 %3319
      %3321 = vrot.lane.b32.xlu0 %v2783, 32
      %v3322 = vpop.permute.xlu0 %3321
      %3323 = vrot.lane.b32.xlu0 %v2787, 32
      %v3324 = vpop.permute.xlu0 %3323
      %3325 = vrot.lane.b32.xlu0 %v2786, 32
      %v3326 = vpop.permute.xlu0 %3325
      %3327 = vrot.lane.b32.xlu0 %v2790, 32
      %v3328 = vpop.permute.xlu0 %3327
      %3329 = vrot.lane.b32.xlu0 %v2789, 32
      %v3330 = vpop.permute.xlu0 %3329
      %3331 = vrot.lane.b32.xlu0 %v2793, 32
      %v3332 = vpop.permute.xlu0 %3331
      %3333 = vrot.lane.b32.xlu0 %v2792, 32
      %v3334 = vpop.permute.xlu0 %3333
      %3335 = vrot.lane.b32.xlu0 %v2796, 32
      %v3336 = vpop.permute.xlu0 %3335
      %3337 = vrot.lane.b32.xlu0 %v2795, 32
      %v3338 = vpop.permute.xlu0 %3337
      %3339 = vrot.lane.b32.xlu0 %v2799, 32
      %v3340 = vpop.permute.xlu0 %3339
      %3341 = vrot.lane.b32.xlu0 %v2798, 32
      %v3342 = vpop.permute.xlu0 %3341
      %3343 = vrot.lane.b32.xlu0 %v2802, 32
      %v3344 = vpop.permute.xlu0 %3343
      %3345 = vrot.lane.b32.xlu0 %v2801, 32
      %v3346 = vpop.permute.xlu0 %3345
      %3347 = vrot.lane.b32.xlu0 %v2805, 32
      %v3348 = vpop.permute.xlu0 %3347
      %3349 = vrot.lane.b32.xlu0 %v2804, 32
      %v3350 = vpop.permute.xlu0 %3349
      %3351 = vrot.lane.b32.xlu0 %v2808, 32
      %v3352 = vpop.permute.xlu0 %3351
      %3353 = vrot.lane.b32.xlu0 %v2807, 32
      %v3354 = vpop.permute.xlu0 %3353
      %3355 = vrot.lane.b32.xlu0 %v3049, 32
      %v3356 = vpop.permute.xlu0 %3355
      %3357 = vrot.lane.b32.xlu0 %v3048, 32
      %v3358 = vpop.permute.xlu0 %3357
      %3359 = vrot.lane.b32.xlu0 %v3290, 32
      %v3360 = vpop.permute.xlu0 %3359
      %3361 = vrot.lane.b32.xlu0 %v3289, 32
      %v3362 = vpop.permute.xlu0 %3361
      %v3364 = vsel %vm1463, %v2395, %v2684
      %v3366 = vsel %vm1463, %v2396, %v2686
      %v3368 = vsel %vm1463, %v2397, %v2688
      %v3370 = vsel %vm1463, %v2398, %v2690
      %v3372 = vsel %vm1463, %v2399, %v2692
      %v3374 = vsel %vm1463, %v2400, %v2694
      %v3376 = vsel %vm1463, %v2401, %v2696
      %v3378 = vsel %vm1463, %v2402, %v2698
      %v3380 = vsel %vm1463, %v2403, %v2700
      %v3382 = vsel %vm1463, %v2404, %v2702
      %v3384 = vsel %vm1463, %v2405, %v2704
      %v3386 = vsel %vm1463, %v2406, %v2706
      %v3388 = vsel %vm1463, %v2407, %v2708
      %v3390 = vsel %vm1463, %v2408, %v2710
      %v3392 = vsel %vm1463, %v2409, %v2712
      %v3394 = vsel %vm1463, %v2410, %v2714
      %v3396 = vsel %vm1463, %v2411, %v2716
      %v3398 = vsel %vm1463, %v2412, %v2718
      %v3400 = vsel %vm1463, %v2413, %v2720
      %v3402 = vsel %vm1463, %v2414, %v2722
      %v3404 = vsel %vm1463, %v2415, %v2724
      %v3406 = vsel %vm1463, %v2416, %v2726
      %v3408 = vsel %vm1463, %v2417, %v2728
      %v3410 = vsel %vm1463, %v2418, %v2730
      %v3412 = vsel %vm1463, %v2419, %v2732
      %v3414 = vsel %vm1463, %v2420, %v2734
      %v3416 = vsel %vm1463, %v2421, %v2736
      %v3418 = vsel %vm1463, %v2422, %v2738
      %v3420 = vsel %vm1463, %v2423, %v2740
      %v3422 = vsel %vm1463, %v2424, %v2742
      %v3424 = vsel %vm1463, %v2425, %v2744
      %v3426 = vsel %vm1463, %v2426, %v2746
      %v3428 = vsel %vm1463, %v2427, %v2748
      %v3430 = vsel %vm1463, %v2428, %v2750
      %v3432 = vsel %vm1463, %v2429, %v2752
      %v3434 = vsel %vm1463, %v2430, %v2754
      %v3436 = vsel %vm1536, %v3364, %v2810
      %v3438 = vsel %vm1536, %v3366, %v2812
      %v3440 = vsel %vm1536, %v3368, %v2814
      %v3442 = vsel %vm1536, %v3370, %v2816
      %v3444 = vsel %vm1536, %v3372, %v2818
      %v3446 = vsel %vm1536, %v3374, %v2820
      %v3448 = vsel %vm1536, %v3376, %v2822
      %v3450 = vsel %vm1536, %v3378, %v2824
      %v3452 = vsel %vm1536, %v3380, %v2826
      %v3454 = vsel %vm1536, %v3382, %v2828
      %v3456 = vsel %vm1536, %v3384, %v2830
      %v3458 = vsel %vm1536, %v3386, %v2832
      %v3460 = vsel %vm1536, %v3388, %v2834
      %v3462 = vsel %vm1536, %v3390, %v2836
      %v3464 = vsel %vm1536, %v3392, %v2838
      %v3466 = vsel %vm1536, %v3394, %v2840
      %v3468 = vsel %vm1536, %v3396, %v2842
      %v3470 = vsel %vm1536, %v3398, %v2844
      %v3472 = vsel %vm1536, %v3400, %v2846
      %v3474 = vsel %vm1536, %v3402, %v2848
      %v3476 = vsel %vm1536, %v3404, %v2850
      %v3478 = vsel %vm1536, %v3406, %v2852
      %v3480 = vsel %vm1536, %v3408, %v2854
      %v3482 = vsel %vm1536, %v3410, %v2856
      %v3484 = vsel %vm1536, %v3412, %v2858
      %v3486 = vsel %vm1536, %v3414, %v2860
      %v3488 = vsel %vm1536, %v3416, %v2862
      %v3490 = vsel %vm1536, %v3418, %v2864
      %v3492 = vsel %vm1536, %v3420, %v2866
      %v3494 = vsel %vm1536, %v3422, %v2868
      %v3496 = vsel %vm1536, %v3424, %v2870
      %v3498 = vsel %vm1536, %v3426, %v2872
      %v3500 = vsel %vm1536, %v3428, %v2874
      %v3502 = vsel %vm1536, %v3430, %v2876
      %v3504 = vsel %vm1536, %v3432, %v2878
      %v3506 = vsel %vm1536, %v3434, %v2880
      %v3508 = vsel %vm1609, %v3436, %v2890
      %v3510 = vsel %vm1609, %v3438, %v2892
      %v3512 = vsel %vm1609, %v3440, %v2894
      %v3514 = vsel %vm1609, %v3442, %v2896
      %v3516 = vsel %vm1609, %v3444, %v2898
      %v3518 = vsel %vm1609, %v3446, %v2900
      %v3520 = vsel %vm1609, %v3448, %v2902
      %v3522 = vsel %vm1609, %v3450, %v2904
      %v3524 = vsel %vm1609, %v3452, %v2906
      %v3526 = vsel %vm1609, %v3454, %v2908
      %v3528 = vsel %vm1609, %v3456, %v2910
      %v3530 = vsel %vm1609, %v3458, %v2912
      %v3532 = vsel %vm1609, %v3460, %v2914
      %v3534 = vsel %vm1609, %v3462, %v2916
      %v3536 = vsel %vm1609, %v3464, %v2918
      %v3538 = vsel %vm1609, %v3466, %v2920
      %v3540 = vsel %vm1609, %v3468, %v2922
      %v3542 = vsel %vm1609, %v3470, %v2924
      %v3544 = vsel %vm1609, %v3472, %v2926
      %v3546 = vsel %vm1609, %v3474, %v2928
      %v3548 = vsel %vm1609, %v3476, %v2930
      %v3550 = vsel %vm1609, %v3478, %v2932
      %v3552 = vsel %vm1609, %v3480, %v2934
      %v3554 = vsel %vm1609, %v3482, %v2936
      %v3556 = vsel %vm1609, %v3484, %v2938
      %v3558 = vsel %vm1609, %v3486, %v2940
      %v3560 = vsel %vm1609, %v3488, %v2942
      %v3562 = vsel %vm1609, %v3490, %v2944
      %v3564 = vsel %vm1609, %v3492, %v2946
      %v3566 = vsel %vm1609, %v3494, %v2948
      %v3568 = vsel %vm1609, %v3496, %v2950
      %v3570 = vsel %vm1609, %v3498, %v2952
      %v3572 = vsel %vm1609, %v3500, %v2954
      %v3574 = vsel %vm1609, %v3502, %v2956
      %v3576 = vsel %vm1609, %v3504, %v2958
      %v3578 = vsel %vm1609, %v3506, %v2960
      %v3580 = vsel %vm1682, %v3508, %v2976
      %v3582 = vsel %vm1682, %v3510, %v2978
      %v3584 = vsel %vm1682, %v3512, %v2980
      %v3586 = vsel %vm1682, %v3514, %v2982
      %v3588 = vsel %vm1682, %v3516, %v2984
      %v3590 = vsel %vm1682, %v3518, %v2986
      %v3592 = vsel %vm1682, %v3520, %v2988
      %v3594 = vsel %vm1682, %v3522, %v2990
      %v3596 = vsel %vm1682, %v3524, %v2992
      %v3598 = vsel %vm1682, %v3526, %v2994
      %v3600 = vsel %vm1682, %v3528, %v2996
      %v3602 = vsel %vm1682, %v3530, %v2998
      %v3604 = vsel %vm1682, %v3532, %v3000
      %v3606 = vsel %vm1682, %v3534, %v3002
      %v3608 = vsel %vm1682, %v3536, %v3004
      %v3610 = vsel %vm1682, %v3538, %v3006
      %v3612 = vsel %vm1682, %v3540, %v3008
      %v3614 = vsel %vm1682, %v3542, %v3010
      %v3616 = vsel %vm1682, %v3544, %v3012
      %v3618 = vsel %vm1682, %v3546, %v3014
      %v3620 = vsel %vm1682, %v3548, %v3016
      %v3622 = vsel %vm1682, %v3550, %v3018
      %v3624 = vsel %vm1682, %v3552, %v3020
      %v3626 = vsel %vm1682, %v3554, %v3022
      %v3628 = vsel %vm1682, %v3556, %v3024
      %v3630 = vsel %vm1682, %v3558, %v3026
      %v3632 = vsel %vm1682, %v3560, %v3028
      %v3634 = vsel %vm1682, %v3562, %v3030
      %v3636 = vsel %vm1682, %v3564, %v3032
      %v3638 = vsel %vm1682, %v3566, %v3034
      %v3640 = vsel %vm1682, %v3568, %v3036
      %v3642 = vsel %vm1682, %v3570, %v3038
      %v3644 = vsel %vm1682, %v3572, %v3040
      %v3646 = vsel %vm1682, %v3574, %v3042
      %v3648 = vsel %vm1682, %v3576, %v3044
      %v3650 = vsel %vm1682, %v3578, %v3046
      %v3652 = vsel %vm1755, %v3580, %v3051
      %v3654 = vsel %vm1755, %v3582, %v3053
      %v3656 = vsel %vm1755, %v3584, %v3055
      %v3658 = vsel %vm1755, %v3586, %v3057
      %v3660 = vsel %vm1755, %v3588, %v3059
      %v3662 = vsel %vm1755, %v3590, %v3061
      %v3664 = vsel %vm1755, %v3592, %v3063
      %v3666 = vsel %vm1755, %v3594, %v3065
      %v3668 = vsel %vm1755, %v3596, %v3067
      %v3670 = vsel %vm1755, %v3598, %v3069
      %v3672 = vsel %vm1755, %v3600, %v3071
      %v3674 = vsel %vm1755, %v3602, %v3073
      %v3676 = vsel %vm1755, %v3604, %v3075
      %v3678 = vsel %vm1755, %v3606, %v3077
      %v3680 = vsel %vm1755, %v3608, %v3079
      %v3682 = vsel %vm1755, %v3610, %v3081
      %v3684 = vsel %vm1755, %v3612, %v3083
      %v3686 = vsel %vm1755, %v3614, %v3085
      %v3688 = vsel %vm1755, %v3616, %v3087
      %v3690 = vsel %vm1755, %v3618, %v3089
      %v3692 = vsel %vm1755, %v3620, %v3091
      %v3694 = vsel %vm1755, %v3622, %v3093
      %v3696 = vsel %vm1755, %v3624, %v3095
      %v3698 = vsel %vm1755, %v3626, %v3097
      %v3700 = vsel %vm1755, %v3628, %v3099
      %v3702 = vsel %vm1755, %v3630, %v3101
      %v3704 = vsel %vm1755, %v3632, %v3103
      %v3706 = vsel %vm1755, %v3634, %v3105
      %v3708 = vsel %vm1755, %v3636, %v3107
      %v3710 = vsel %vm1755, %v3638, %v3109
      %v3712 = vsel %vm1755, %v3640, %v3111
      %v3714 = vsel %vm1755, %v3642, %v3113
      %v3716 = vsel %vm1755, %v3644, %v3115
      %v3718 = vsel %vm1755, %v3646, %v3117
      %v3720 = vsel %vm1755, %v3648, %v3119
      %v3722 = vsel %vm1755, %v3650, %v3121
      %v3724 = vsel %vm1828, %v3652, %v3131
      %v3726 = vsel %vm1828, %v3654, %v3133
      %v3728 = vsel %vm1828, %v3656, %v3135
      %v3730 = vsel %vm1828, %v3658, %v3137
      %v3732 = vsel %vm1828, %v3660, %v3139
      %v3734 = vsel %vm1828, %v3662, %v3141
      %v3736 = vsel %vm1828, %v3664, %v3143
      %v3738 = vsel %vm1828, %v3666, %v3145
      %v3740 = vsel %vm1828, %v3668, %v3147
      %v3742 = vsel %vm1828, %v3670, %v3149
      %v3744 = vsel %vm1828, %v3672, %v3151
      %v3746 = vsel %vm1828, %v3674, %v3153
      %v3748 = vsel %vm1828, %v3676, %v3155
      %v3750 = vsel %vm1828, %v3678, %v3157
      %v3752 = vsel %vm1828, %v3680, %v3159
      %v3754 = vsel %vm1828, %v3682, %v3161
      %v3756 = vsel %vm1828, %v3684, %v3163
      %v3758 = vsel %vm1828, %v3686, %v3165
      %v3760 = vsel %vm1828, %v3688, %v3167
      %v3762 = vsel %vm1828, %v3690, %v3169
      %v3764 = vsel %vm1828, %v3692, %v3171
      %v3766 = vsel %vm1828, %v3694, %v3173
      %v3768 = vsel %vm1828, %v3696, %v3175
      %v3770 = vsel %vm1828, %v3698, %v3177
      %v3772 = vsel %vm1828, %v3700, %v3179
      %v3774 = vsel %vm1828, %v3702, %v3181
      %v3776 = vsel %vm1828, %v3704, %v3183
      %v3778 = vsel %vm1828, %v3706, %v3185
      %v3780 = vsel %vm1828, %v3708, %v3187
      %v3782 = vsel %vm1828, %v3710, %v3189
      %v3784 = vsel %vm1828, %v3712, %v3191
      %v3786 = vsel %vm1828, %v3714, %v3193
      %v3788 = vsel %vm1828, %v3716, %v3195
      %v3790 = vsel %vm1828, %v3718, %v3197
      %v3792 = vsel %vm1828, %v3720, %v3199
      %v3794 = vsel %vm1828, %v3722, %v3201
      %v3796 = vsel %vm1901, %v3724, %v3217
      %v3798 = vsel %vm1901, %v3726, %v3219
      %v3800 = vsel %vm1901, %v3728, %v3221
      %v3802 = vsel %vm1901, %v3730, %v3223
      %v3804 = vsel %vm1901, %v3732, %v3225
      %v3806 = vsel %vm1901, %v3734, %v3227
      %v3808 = vsel %vm1901, %v3736, %v3229
      %v3810 = vsel %vm1901, %v3738, %v3231
      %v3812 = vsel %vm1901, %v3740, %v3233
      %v3814 = vsel %vm1901, %v3742, %v3235
      %v3816 = vsel %vm1901, %v3744, %v3237
      %v3818 = vsel %vm1901, %v3746, %v3239
      %v3820 = vsel %vm1901, %v3748, %v3241
      %v3822 = vsel %vm1901, %v3750, %v3243
      %v3824 = vsel %vm1901, %v3752, %v3245
      %v3826 = vsel %vm1901, %v3754, %v3247
      %v3828 = vsel %vm1901, %v3756, %v3249
      %v3830 = vsel %vm1901, %v3758, %v3251
      %v3832 = vsel %vm1901, %v3760, %v3253
      %v3834 = vsel %vm1901, %v3762, %v3255
      %v3836 = vsel %vm1901, %v3764, %v3257
      %v3838 = vsel %vm1901, %v3766, %v3259
      %v3840 = vsel %vm1901, %v3768, %v3261
      %v3842 = vsel %vm1901, %v3770, %v3263
      %v3844 = vsel %vm1901, %v3772, %v3265
      %v3846 = vsel %vm1901, %v3774, %v3267
      %v3848 = vsel %vm1901, %v3776, %v3269
      %v3850 = vsel %vm1901, %v3778, %v3271
      %v3852 = vsel %vm1901, %v3780, %v3273
      %v3854 = vsel %vm1901, %v3782, %v3275
      %v3856 = vsel %vm1901, %v3784, %v3277
      %v3858 = vsel %vm1901, %v3786, %v3279
      %v3860 = vsel %vm1901, %v3788, %v3281
      %v3862 = vsel %vm1901, %v3790, %v3283
      %v3864 = vsel %vm1901, %v3792, %v3285
      %v3866 = vsel %vm1901, %v3794, %v3287
      %v3868 = vsel %vm1974, %v3796, %v3292
      %v3870 = vsel %vm1974, %v3798, %v3294
      %v3872 = vsel %vm1974, %v3800, %v3296
      %v3874 = vsel %vm1974, %v3802, %v3298
      %v3876 = vsel %vm1974, %v3804, %v3300
      %v3878 = vsel %vm1974, %v3806, %v3302
      %v3880 = vsel %vm1974, %v3808, %v3304
      %v3882 = vsel %vm1974, %v3810, %v3306
      %v3884 = vsel %vm1974, %v3812, %v3308
      %v3886 = vsel %vm1974, %v3814, %v3310
      %v3888 = vsel %vm1974, %v3816, %v3312
      %v3890 = vsel %vm1974, %v3818, %v3314
      %v3892 = vsel %vm1974, %v3820, %v3316
      %v3894 = vsel %vm1974, %v3822, %v3318
      %v3896 = vsel %vm1974, %v3824, %v3320
      %v3898 = vsel %vm1974, %v3826, %v3322
      %v3900 = vsel %vm1974, %v3828, %v3324
      %v3902 = vsel %vm1974, %v3830, %v3326
      %v3904 = vsel %vm1974, %v3832, %v3328
      %v3906 = vsel %vm1974, %v3834, %v3330
      %v3908 = vsel %vm1974, %v3836, %v3332
      %v3910 = vsel %vm1974, %v3838, %v3334
      %v3912 = vsel %vm1974, %v3840, %v3336
      %v3914 = vsel %vm1974, %v3842, %v3338
      %v3916 = vsel %vm1974, %v3844, %v3340
      %v3918 = vsel %vm1974, %v3846, %v3342
      %v3920 = vsel %vm1974, %v3848, %v3344
      %v3922 = vsel %vm1974, %v3850, %v3346
      %v3924 = vsel %vm1974, %v3852, %v3348
      %v3926 = vsel %vm1974, %v3854, %v3350
      %v3928 = vsel %vm1974, %v3856, %v3352
      %v3930 = vsel %vm1974, %v3858, %v3354
      %v3932 = vsel %vm1974, %v3860, %v3356
      %v3934 = vsel %vm1974, %v3862, %v3358
      %v3936 = vsel %vm1974, %v3864, %v3360
      %v3938 = vsel %vm1974, %v3866, %v3362
      %v3939 = vshrl.u32 %v3868, 16
      %v3941 = vshll.u32 %v3868, 16
      %v3943 = vrot.slane %v3941, 1
      %v3944 = vor.u32 %v3939, %v3943
      %v3945 = vshll.u32 %v3870, 16
      %v3947 = vrot.slane %v3945, 1
      %v3948 = vsel %vm529, %v3944, %v3947
      %v3949 = vshrl.u32 %v3872, 16
      %v3951 = vshll.u32 %v3872, 16
      %v3953 = vrot.slane %v3951, 1
      %v3954 = vor.u32 %v3949, %v3953
      %v3955 = vshll.u32 %v3874, 16
      %v3957 = vrot.slane %v3955, 1
      %v3958 = vsel %vm529, %v3954, %v3957
      %v3959 = vshrl.u32 %v3876, 16
      %v3961 = vshll.u32 %v3876, 16
      %v3963 = vrot.slane %v3961, 1
      %v3964 = vor.u32 %v3959, %v3963
      %v3965 = vshll.u32 %v3878, 16
      %v3967 = vrot.slane %v3965, 1
      %v3968 = vsel %vm529, %v3964, %v3967
      %v3969 = vshrl.u32 %v3880, 16
      %v3971 = vshll.u32 %v3880, 16
      %v3973 = vrot.slane %v3971, 1
      %v3974 = vor.u32 %v3969, %v3973
      %v3975 = vshll.u32 %v3882, 16
      %v3977 = vrot.slane %v3975, 1
      %v3978 = vsel %vm529, %v3974, %v3977
      %v3979 = vshrl.u32 %v3884, 16
      %v3981 = vshll.u32 %v3884, 16
      %v3983 = vrot.slane %v3981, 1
      %v3984 = vor.u32 %v3979, %v3983
      %v3985 = vshll.u32 %v3886, 16
      %v3987 = vrot.slane %v3985, 1
      %v3988 = vsel %vm529, %v3984, %v3987
      %v3989 = vshrl.u32 %v3888, 16
      %v3991 = vshll.u32 %v3888, 16
      %v3993 = vrot.slane %v3991, 1
      %v3994 = vor.u32 %v3989, %v3993
      %v3995 = vshll.u32 %v3890, 16
      %v3997 = vrot.slane %v3995, 1
      %v3998 = vsel %vm529, %v3994, %v3997
      %v3999 = vshrl.u32 %v3892, 16
      %v4001 = vshll.u32 %v3892, 16
      %v4003 = vrot.slane %v4001, 1
      %v4004 = vor.u32 %v3999, %v4003
      %v4005 = vshll.u32 %v3894, 16
      %v4007 = vrot.slane %v4005, 1
      %v4008 = vsel %vm529, %v4004, %v4007
      %v4009 = vshrl.u32 %v3896, 16
      %v4011 = vshll.u32 %v3896, 16
      %v4013 = vrot.slane %v4011, 1
      %v4014 = vor.u32 %v4009, %v4013
      %v4015 = vshll.u32 %v3898, 16
      %v4017 = vrot.slane %v4015, 1
      %v4018 = vsel %vm529, %v4014, %v4017
      %v4019 = vshrl.u32 %v3900, 16
      %v4021 = vshll.u32 %v3900, 16
      %v4023 = vrot.slane %v4021, 1
      %v4024 = vor.u32 %v4019, %v4023
      %v4025 = vshll.u32 %v3902, 16
      %v4027 = vrot.slane %v4025, 1
      %v4028 = vsel %vm529, %v4024, %v4027
      %v4029 = vshrl.u32 %v3904, 16
      %v4031 = vshll.u32 %v3904, 16
      %v4033 = vrot.slane %v4031, 1
      %v4034 = vor.u32 %v4029, %v4033
      %v4035 = vshll.u32 %v3906, 16
      %v4037 = vrot.slane %v4035, 1
      %v4038 = vsel %vm529, %v4034, %v4037
      %v4039 = vshrl.u32 %v3908, 16
      %v4041 = vshll.u32 %v3908, 16
      %v4043 = vrot.slane %v4041, 1
      %v4044 = vor.u32 %v4039, %v4043
      %v4045 = vshll.u32 %v3910, 16
      %v4047 = vrot.slane %v4045, 1
      %v4048 = vsel %vm529, %v4044, %v4047
      %v4049 = vshrl.u32 %v3912, 16
      %v4051 = vshll.u32 %v3912, 16
      %v4053 = vrot.slane %v4051, 1
      %v4054 = vor.u32 %v4049, %v4053
      %v4055 = vshll.u32 %v3914, 16
      %v4057 = vrot.slane %v4055, 1
      %v4058 = vsel %vm529, %v4054, %v4057
      %v4059 = vshrl.u32 %v3916, 16
      %v4061 = vshll.u32 %v3916, 16
      %v4063 = vrot.slane %v4061, 1
      %v4064 = vor.u32 %v4059, %v4063
      %v4065 = vshll.u32 %v3918, 16
      %v4067 = vrot.slane %v4065, 1
      %v4068 = vsel %vm529, %v4064, %v4067
      %v4069 = vshrl.u32 %v3920, 16
      %v4071 = vshll.u32 %v3920, 16
      %v4073 = vrot.slane %v4071, 1
      %v4074 = vor.u32 %v4069, %v4073
      %v4075 = vshll.u32 %v3922, 16
      %v4077 = vrot.slane %v4075, 1
      %v4078 = vsel %vm529, %v4074, %v4077
      %v4079 = vshrl.u32 %v3924, 16
      %v4081 = vshll.u32 %v3924, 16
      %v4083 = vrot.slane %v4081, 1
      %v4084 = vor.u32 %v4079, %v4083
      %v4085 = vshll.u32 %v3926, 16
      %v4087 = vrot.slane %v4085, 1
      %v4088 = vsel %vm529, %v4084, %v4087
      %v4089 = vshrl.u32 %v3928, 16
      %v4091 = vshll.u32 %v3928, 16
      %v4093 = vrot.slane %v4091, 1
      %v4094 = vor.u32 %v4089, %v4093
      %v4095 = vshll.u32 %v3930, 16
      %v4097 = vrot.slane %v4095, 1
      %v4098 = vsel %vm529, %v4094, %v4097
      %v4099 = vshrl.u32 %v3932, 16
      %v4101 = vshll.u32 %v3932, 16
      %v4103 = vrot.slane %v4101, 1
      %v4104 = vor.u32 %v4099, %v4103
      %v4105 = vshll.u32 %v3934, 16
      %v4107 = vrot.slane %v4105, 1
      %v4108 = vsel %vm529, %v4104, %v4107
      %v4109 = vshrl.u32 %v3936, 16
      %v4111 = vshll.u32 %v3936, 16
      %v4113 = vrot.slane %v4111, 1
      %v4114 = vor.u32 %v4109, %v4113
      %v4115 = vshll.u32 %v3938, 16
      %v4117 = vrot.slane %v4115, 1
      %v4118 = vsel %vm529, %v4114, %v4117
      %v4119 = vld [vmem:[%s2] sm:$0xf]
      %v4120 = vld [vmem:[%s2 + $0x4] sm:$0xf]
      %v4121 = vld [vmem:[%s2 + $0x8] sm:$0xf]
      %v4122 = vld [vmem:[%s2 + $0xc] sm:$0xf]
      %v4123 = vld [vmem:[%s2 + $0x10] sm:$0x3]
      %v4124 = vld [vmem:[%s3] sm:$0xf]
      %v4125 = vld [vmem:[%s3 + $0x4] sm:$0xf]
      %v4126 = vld [vmem:[%s3 + $0x8] sm:$0xf]
      %v4127 = vld [vmem:[%s3 + $0xc] sm:$0xf]
      %v4128 = vld [vmem:[%s3 + $0x10] sm:$0x3]
      %v4134 = vunpack.c.l.b16 %v4124
      %v4135 = vunpack.c.l.b16 %v4125
      %v4136 = vunpack.c.l.b16 %v4126
      %v4137 = vunpack.c.l.b16 %v4127
      %v4138 = vunpack.c.l.b16 %v4128
      %v4139 = vpack.c.b16 %v4135, %v4134
      %v4140 = vpack.c.b16 %v4137, %v4136
      %v4141 = vpack.c.b16 %v4138, %v4138
      %vm4144 = vcmask 293888
      %v4146 = vsel %vm4144, %v3948, 0
      %v4149 = vsel %vm4144, %v3958, 0
      %v4152 = vsel %vm4144, %v3968, 0
      %v4155 = vsel %vm4144, %v3978, 0
      %v4158 = vsel %vm4144, %v3988, 0
      %v4161 = vsel %vm4144, %v3998, 0
      %v4164 = vsel %vm4144, %v4008, 0
      %v4167 = vsel %vm4144, %v4018, 0
      %v4170 = vsel %vm4144, %v4028, 0
      %v4173 = vsel %vm4144, %v4038, 0
      %v4176 = vsel %vm4144, %v4048, 0
      %v4179 = vsel %vm4144, %v4058, 0
      %v4182 = vsel %vm4144, %v4068, 0
      %v4185 = vsel %vm4144, %v4078, 0
      %v4188 = vsel %vm4144, %v4088, 0
      %v4191 = vsel %vm4144, %v4098, 0
      %v4194 = vsel %vm4144, %v4108, 0
      %v4197 = vsel %vm4144, %v4118, 0
      %vm4199 = vcmask 1041408
      %v4201 = vsel %vm4199, %v4141, 0
      %4203 = vmatprep.subr.bf16.mxu0 0
      %4204 = vmatpush1.bf16.msra.mxu0 0
      %4205 = vmatprep.subr.bf16.mxu0 0
      %4206 = vmatpush1.bf16.msra.mxu0 0
      %4207 = vmatprep.subr.bf16.mxu0 0
      %4208 = vmatpush1.bf16.msra.mxu0 0
      %4209 = vmatprep.subr.bf16.mxu0 0
      %4210 = vmatpush1.bf16.msra.mxu0 0
      %4211 = vmatprep.subr.bf16.mxu0 0
      %4212 = vmatpush1.bf16.msra.mxu0 0
      %4213 = vmatprep.subr.bf16.mxu0 0
      %4214 = vmatpush1.bf16.msra.mxu0 %v4201
      %4215 = vmatprep.subr.bf16.mxu0 0
      %4216 = vmatpush1.bf16.msra.mxu0 %v4140
      %4217 = vmatprep.subr.bf16.mxu0 0
      %4218 = vmatpush1.bf16.msra.mxu0 %v4139
      %4219 = vmatprep.subr.bf16.mxu0 0
      %4220 = vmatpush2.bf16.msra.mxu0 0
      %4221 = vmatprep.subr.bf16.mxu0 0
      %4222 = vmatpush2.bf16.msra.mxu0 0
      %4223 = vmatprep.subr.bf16.mxu0 0
      %4224 = vmatpush2.bf16.msra.mxu0 0
      %4225 = vmatprep.subr.bf16.mxu0 0
      %4226 = vmatpush2.bf16.msra.mxu0 0
      %4227 = vmatprep.subr.bf16.mxu0 0
      %4228 = vmatpush2.bf16.msra.mxu0 0
      %4229 = vmatprep.subr.bf16.mxu0 0
      %4230 = vmatpush2.bf16.msra.mxu0 0
      %4231 = vmatprep.subr.bf16.mxu0 0
      %4232 = vmatpush2.bf16.msra.mxu0 0
      %4233 = vmatprep.subr.bf16.mxu0 0
      %4234 = vmatpush2.bf16.msra.mxu0 0
      %4235 = vmatprep.mubr.bf16.mxu0 0
      %4236 = vmatmul.mubr.bf16.gmra.mxu0 %v4146
      %v4237 = vpop.f32.mrf.mxu0
      %v4238 = vadd.f32 0.0, %v4237
      %v4239 = vpop.f32.mrf.mxu0
      %v4240 = vpop.f32.mrf.mxu0
      %v4241 = vadd.f32 0.0, %v4240
      %v4242 = vpop.f32.mrf.mxu0
      %4243 = vmatprep.mubr.bf16.mxu0 0
      %4244 = vmatmul.mubr.bf16.gmra.mxu0 %v4149
      %v4245 = vpop.f32.mrf.mxu0
      %v4246 = vadd.f32 0.0, %v4245
      %v4247 = vpop.f32.mrf.mxu0
      %v4248 = vpop.f32.mrf.mxu0
      %v4249 = vadd.f32 0.0, %v4248
      %v4250 = vpop.f32.mrf.mxu0
      %4251 = vmatprep.mubr.bf16.mxu0 0
      %4252 = vmatmul.mubr.bf16.gmra.mxu0 %v4152
      %v4253 = vpop.f32.mrf.mxu0
      %v4254 = vadd.f32 0.0, %v4253
      %v4255 = vpop.f32.mrf.mxu0
      %v4256 = vpop.f32.mrf.mxu0
      %v4257 = vadd.f32 0.0, %v4256
      %v4258 = vpop.f32.mrf.mxu0
      %4259 = vmatprep.mubr.bf16.mxu0 0
      %4260 = vmatmul.mubr.bf16.gmra.mxu0 %v4155
      %v4261 = vpop.f32.mrf.mxu0
      %v4262 = vadd.f32 0.0, %v4261
      %v4263 = vpop.f32.mrf.mxu0
      %v4264 = vpop.f32.mrf.mxu0
      %v4265 = vadd.f32 0.0, %v4264
      %v4266 = vpop.f32.mrf.mxu0
      %4267 = vmatprep.mubr.bf16.mxu0 0
      %4268 = vmatmul.mubr.bf16.gmra.mxu0 %v4158
      %v4269 = vpop.f32.mrf.mxu0
      %v4270 = vadd.f32 0.0, %v4269
      %v4271 = vpop.f32.mrf.mxu0
      %v4272 = vpop.f32.mrf.mxu0
      %v4273 = vadd.f32 0.0, %v4272
      %v4274 = vpop.f32.mrf.mxu0
      %4275 = vmatprep.mubr.bf16.mxu0 0
      %4276 = vmatmul.mubr.bf16.gmra.mxu0 %v4161
      %v4277 = vpop.f32.mrf.mxu0
      %v4278 = vadd.f32 0.0, %v4277
      %v4279 = vpop.f32.mrf.mxu0
      %v4280 = vpop.f32.mrf.mxu0
      %v4281 = vadd.f32 0.0, %v4280
      %v4282 = vpop.f32.mrf.mxu0
      %4283 = vmatprep.mubr.bf16.mxu0 0
      %4284 = vmatmul.mubr.bf16.gmra.mxu0 %v4164
      %v4285 = vpop.f32.mrf.mxu0
      %v4286 = vadd.f32 0.0, %v4285
      %v4287 = vpop.f32.mrf.mxu0
      %v4288 = vpop.f32.mrf.mxu0
      %v4289 = vadd.f32 0.0, %v4288
      %v4290 = vpop.f32.mrf.mxu0
      %4291 = vmatprep.mubr.bf16.mxu0 0
      %4292 = vmatmul.mubr.bf16.gmra.mxu0 %v4167
      %v4293 = vpop.f32.mrf.mxu0
      %v4294 = vadd.f32 0.0, %v4293
      %v4295 = vpop.f32.mrf.mxu0
      %v4296 = vpop.f32.mrf.mxu0
      %v4297 = vadd.f32 0.0, %v4296
      %v4298 = vpop.f32.mrf.mxu0
      %4299 = vmatprep.mubr.bf16.mxu0 0
      %4300 = vmatmul.mubr.bf16.gmra.mxu0 %v4170
      %v4301 = vpop.f32.mrf.mxu0
      %v4302 = vadd.f32 0.0, %v4301
      %v4303 = vpop.f32.mrf.mxu0
      %v4304 = vpop.f32.mrf.mxu0
      %v4305 = vadd.f32 0.0, %v4304
      %v4306 = vpop.f32.mrf.mxu0
      %4307 = vmatprep.mubr.bf16.mxu0 0
      %4308 = vmatmul.mubr.bf16.gmra.mxu0 %v4173
      %v4309 = vpop.f32.mrf.mxu0
      %v4310 = vadd.f32 0.0, %v4309
      %v4311 = vpop.f32.mrf.mxu0
      %v4312 = vpop.f32.mrf.mxu0
      %v4313 = vadd.f32 0.0, %v4312
      %v4314 = vpop.f32.mrf.mxu0
      %4315 = vmatprep.mubr.bf16.mxu0 0
      %4316 = vmatmul.mubr.bf16.gmra.mxu0 %v4176
      %v4317 = vpop.f32.mrf.mxu0
      %v4318 = vadd.f32 0.0, %v4317
      %v4319 = vpop.f32.mrf.mxu0
      %v4320 = vpop.f32.mrf.mxu0
      %v4321 = vadd.f32 0.0, %v4320
      %v4322 = vpop.f32.mrf.mxu0
      %4323 = vmatprep.mubr.bf16.mxu0 0
      %4324 = vmatmul.mubr.bf16.gmra.mxu0 %v4179
      %v4325 = vpop.f32.mrf.mxu0
      %v4326 = vadd.f32 0.0, %v4325
      %v4327 = vpop.f32.mrf.mxu0
      %v4328 = vpop.f32.mrf.mxu0
      %v4329 = vadd.f32 0.0, %v4328
      %v4330 = vpop.f32.mrf.mxu0
      %4331 = vmatprep.mubr.bf16.mxu0 0
      %4332 = vmatmul.mubr.bf16.gmra.mxu0 %v4182
      %v4333 = vpop.f32.mrf.mxu0
      %v4334 = vadd.f32 0.0, %v4333
      %v4335 = vpop.f32.mrf.mxu0
      %v4336 = vpop.f32.mrf.mxu0
      %v4337 = vadd.f32 0.0, %v4336
      %v4338 = vpop.f32.mrf.mxu0
      %4339 = vmatprep.mubr.bf16.mxu0 0
      %4340 = vmatmul.mubr.bf16.gmra.mxu0 %v4185
      %v4341 = vpop.f32.mrf.mxu0
      %v4342 = vadd.f32 0.0, %v4341
      %v4343 = vpop.f32.mrf.mxu0
      %v4344 = vpop.f32.mrf.mxu0
      %v4345 = vadd.f32 0.0, %v4344
      %v4346 = vpop.f32.mrf.mxu0
      %4347 = vmatprep.mubr.bf16.mxu0 0
      %4348 = vmatmul.mubr.bf16.gmra.mxu0 %v4188
      %v4349 = vpop.f32.mrf.mxu0
      %v4350 = vadd.f32 0.0, %v4349
      %v4351 = vpop.f32.mrf.mxu0
      %v4352 = vpop.f32.mrf.mxu0
      %v4353 = vadd.f32 0.0, %v4352
      %v4354 = vpop.f32.mrf.mxu0
      %4355 = vmatprep.mubr.bf16.mxu0 0
      %4356 = vmatmul.mubr.bf16.gmra.mxu0 %v4191
      %v4357 = vpop.f32.mrf.mxu0
      %v4358 = vadd.f32 0.0, %v4357
      %v4359 = vpop.f32.mrf.mxu0
      %v4360 = vpop.f32.mrf.mxu0
      %v4361 = vadd.f32 0.0, %v4360
      %v4362 = vpop.f32.mrf.mxu0
      %4363 = vmatprep.mubr.bf16.mxu0 0
      %4364 = vmatmul.mubr.bf16.gmra.mxu0 %v4194
      %v4365 = vpop.f32.mrf.mxu0
      %v4366 = vadd.f32 0.0, %v4365
      %v4367 = vpop.f32.mrf.mxu0
      %v4368 = vpop.f32.mrf.mxu0
      %v4369 = vadd.f32 0.0, %v4368
      %v4370 = vpop.f32.mrf.mxu0
      %4371 = vmatprep.mubr.bf16.mxu0 0
      %4372 = vmatmul.mubr.bf16.gmra.mxu0 %v4197
      %v4373 = vpop.f32.mrf.mxu0
      %v4374 = vadd.f32 0.0, %v4373
      %v4375 = vpop.f32.mrf.mxu0
      %v4376 = vpop.f32.mrf.mxu0
      %v4377 = vadd.f32 0.0, %v4376
      %v4378 = vpop.f32.mrf.mxu0
      %4379 = vdwg.mxu0
      %v4385 = vunpack.c.l.b16 %v4119
      %v4386 = vunpack.c.l.b16 %v4120
      %v4387 = vunpack.c.l.b16 %v4121
      %v4388 = vunpack.c.l.b16 %v4122
      %v4389 = vunpack.c.l.b16 %v4123
      %v4390 = vpack.c.b16 %v4386, %v4385
      %v4391 = vpack.c.b16 %v4388, %v4387
      %v4392 = vpack.c.b16 %v4389, %v4389
      %v4396 = vsel %vm4144, %v2056, 0
      %v4399 = vsel %vm4144, %v2066, 0
      %v4402 = vsel %vm4144, %v2076, 0
      %v4405 = vsel %vm4144, %v2086, 0
      %v4408 = vsel %vm4144, %v2096, 0
      %v4411 = vsel %vm4144, %v2106, 0
      %v4414 = vsel %vm4144, %v2116, 0
      %v4417 = vsel %vm4144, %v2126, 0
      %v4420 = vsel %vm4144, %v2136, 0
      %v4423 = vsel %vm4144, %v2146, 0
      %v4426 = vsel %vm4144, %v2156, 0
      %v4429 = vsel %vm4144, %v2166, 0
      %v4432 = vsel %vm4144, %v2176, 0
      %v4435 = vsel %vm4144, %v2186, 0
      %v4438 = vsel %vm4144, %v2196, 0
      %v4441 = vsel %vm4144, %v2206, 0
      %v4444 = vsel %vm4144, %v2216, 0
      %v4447 = vsel %vm4144, %v2226, 0
      %v4450 = vsel %vm4199, %v4392, 0
      %4452 = vmatprep.subr.bf16.mxu0 0
      %4453 = vmatpush1.bf16.msra.mxu0 0
      %4454 = vmatprep.subr.bf16.mxu0 0
      %4455 = vmatpush1.bf16.msra.mxu0 0
      %4456 = vmatprep.subr.bf16.mxu0 0
      %4457 = vmatpush1.bf16.msra.mxu0 0
      %4458 = vmatprep.subr.bf16.mxu0 0
      %4459 = vmatpush1.bf16.msra.mxu0 0
      %4460 = vmatprep.subr.bf16.mxu0 0
      %4461 = vmatpush1.bf16.msra.mxu0 0
      %4462 = vmatprep.subr.bf16.mxu0 0
      %4463 = vmatpush1.bf16.msra.mxu0 %v4450
      %4464 = vmatprep.subr.bf16.mxu0 0
      %4465 = vmatpush1.bf16.msra.mxu0 %v4391
      %4466 = vmatprep.subr.bf16.mxu0 0
      %4467 = vmatpush1.bf16.msra.mxu0 %v4390
      %4468 = vmatprep.subr.bf16.mxu0 0
      %4469 = vmatpush2.bf16.msra.mxu0 0
      %4470 = vmatprep.subr.bf16.mxu0 0
      %4471 = vmatpush2.bf16.msra.mxu0 0
      %4472 = vmatprep.subr.bf16.mxu0 0
      %4473 = vmatpush2.bf16.msra.mxu0 0
      %4474 = vmatprep.subr.bf16.mxu0 0
      %4475 = vmatpush2.bf16.msra.mxu0 0
      %4476 = vmatprep.subr.bf16.mxu0 0
      %4477 = vmatpush2.bf16.msra.mxu0 0
      %4478 = vmatprep.subr.bf16.mxu0 0
      %4479 = vmatpush2.bf16.msra.mxu0 0
      %4480 = vmatprep.subr.bf16.mxu0 0
      %4481 = vmatpush2.bf16.msra.mxu0 0
      %4482 = vmatprep.subr.bf16.mxu0 0
      %4483 = vmatpush2.bf16.msra.mxu0 0
      %4484 = vmatprep.mubr.bf16.mxu0 0
      %4485 = vmatmul.mubr.bf16.gmra.mxu0 %v4396
      %v4486 = vpop.f32.mrf.mxu0
      %v4487 = vadd.f32 %v4238, %v4486
      %v4488 = vpop.f32.mrf.mxu0
      %v4489 = vpop.f32.mrf.mxu0
      %v4490 = vadd.f32 %v4241, %v4489
      %v4491 = vpop.f32.mrf.mxu0
      %4492 = vmatprep.mubr.bf16.mxu0 0
      %4493 = vmatmul.mubr.bf16.gmra.mxu0 %v4399
      %v4494 = vpop.f32.mrf.mxu0
      %v4495 = vadd.f32 %v4246, %v4494
      %v4496 = vpop.f32.mrf.mxu0
      %v4497 = vpop.f32.mrf.mxu0
      %v4498 = vadd.f32 %v4249, %v4497
      %v4499 = vpop.f32.mrf.mxu0
      %4500 = vmatprep.mubr.bf16.mxu0 0
      %4501 = vmatmul.mubr.bf16.gmra.mxu0 %v4402
      %v4502 = vpop.f32.mrf.mxu0
      %v4503 = vadd.f32 %v4254, %v4502
      %v4504 = vpop.f32.mrf.mxu0
      %v4505 = vpop.f32.mrf.mxu0
      %v4506 = vadd.f32 %v4257, %v4505
      %v4507 = vpop.f32.mrf.mxu0
      %4508 = vmatprep.mubr.bf16.mxu0 0
      %4509 = vmatmul.mubr.bf16.gmra.mxu0 %v4405
      %v4510 = vpop.f32.mrf.mxu0
      %v4511 = vadd.f32 %v4262, %v4510
      %v4512 = vpop.f32.mrf.mxu0
      %v4513 = vpop.f32.mrf.mxu0
      %v4514 = vadd.f32 %v4265, %v4513
      %v4515 = vpop.f32.mrf.mxu0
      %4516 = vmatprep.mubr.bf16.mxu0 0
      %4517 = vmatmul.mubr.bf16.gmra.mxu0 %v4408
      %v4518 = vpop.f32.mrf.mxu0
      %v4519 = vadd.f32 %v4270, %v4518
      %v4520 = vpop.f32.mrf.mxu0
      %v4521 = vpop.f32.mrf.mxu0
      %v4522 = vadd.f32 %v4273, %v4521
      %v4523 = vpop.f32.mrf.mxu0
      %4524 = vmatprep.mubr.bf16.mxu0 0
      %4525 = vmatmul.mubr.bf16.gmra.mxu0 %v4411
      %v4526 = vpop.f32.mrf.mxu0
      %v4527 = vadd.f32 %v4278, %v4526
      %v4528 = vpop.f32.mrf.mxu0
      %v4529 = vpop.f32.mrf.mxu0
      %v4530 = vadd.f32 %v4281, %v4529
      %v4531 = vpop.f32.mrf.mxu0
      %4532 = vmatprep.mubr.bf16.mxu0 0
      %4533 = vmatmul.mubr.bf16.gmra.mxu0 %v4414
      %v4534 = vpop.f32.mrf.mxu0
      %v4535 = vadd.f32 %v4286, %v4534
      %v4536 = vpop.f32.mrf.mxu0
      %v4537 = vpop.f32.mrf.mxu0
      %v4538 = vadd.f32 %v4289, %v4537
      %v4539 = vpop.f32.mrf.mxu0
      %4540 = vmatprep.mubr.bf16.mxu0 0
      %4541 = vmatmul.mubr.bf16.gmra.mxu0 %v4417
      %v4542 = vpop.f32.mrf.mxu0
      %v4543 = vadd.f32 %v4294, %v4542
      %v4544 = vpop.f32.mrf.mxu0
      %v4545 = vpop.f32.mrf.mxu0
      %v4546 = vadd.f32 %v4297, %v4545
      %v4547 = vpop.f32.mrf.mxu0
      %4548 = vmatprep.mubr.bf16.mxu0 0
      %4549 = vmatmul.mubr.bf16.gmra.mxu0 %v4420
      %v4550 = vpop.f32.mrf.mxu0
      %v4551 = vadd.f32 %v4302, %v4550
      %v4552 = vpop.f32.mrf.mxu0
      %v4553 = vpop.f32.mrf.mxu0
      %v4554 = vadd.f32 %v4305, %v4553
      %v4555 = vpop.f32.mrf.mxu0
      %4556 = vmatprep.mubr.bf16.mxu0 0
      %4557 = vmatmul.mubr.bf16.gmra.mxu0 %v4423
      %v4558 = vpop.f32.mrf.mxu0
      %v4559 = vadd.f32 %v4310, %v4558
      %v4560 = vpop.f32.mrf.mxu0
      %v4561 = vpop.f32.mrf.mxu0
      %v4562 = vadd.f32 %v4313, %v4561
      %v4563 = vpop.f32.mrf.mxu0
      %4564 = vmatprep.mubr.bf16.mxu0 0
      %4565 = vmatmul.mubr.bf16.gmra.mxu0 %v4426
      %v4566 = vpop.f32.mrf.mxu0
      %v4567 = vadd.f32 %v4318, %v4566
      %v4568 = vpop.f32.mrf.mxu0
      %v4569 = vpop.f32.mrf.mxu0
      %v4570 = vadd.f32 %v4321, %v4569
      %v4571 = vpop.f32.mrf.mxu0
      %4572 = vmatprep.mubr.bf16.mxu0 0
      %4573 = vmatmul.mubr.bf16.gmra.mxu0 %v4429
      %v4574 = vpop.f32.mrf.mxu0
      %v4575 = vadd.f32 %v4326, %v4574
      %v4576 = vpop.f32.mrf.mxu0
      %v4577 = vpop.f32.mrf.mxu0
      %v4578 = vadd.f32 %v4329, %v4577
      %v4579 = vpop.f32.mrf.mxu0
      %4580 = vmatprep.mubr.bf16.mxu0 0
      %4581 = vmatmul.mubr.bf16.gmra.mxu0 %v4432
      %v4582 = vpop.f32.mrf.mxu0
      %v4583 = vadd.f32 %v4334, %v4582
      %v4584 = vpop.f32.mrf.mxu0
      %v4585 = vpop.f32.mrf.mxu0
      %v4586 = vadd.f32 %v4337, %v4585
      %v4587 = vpop.f32.mrf.mxu0
      %4588 = vmatprep.mubr.bf16.mxu0 0
      %4589 = vmatmul.mubr.bf16.gmra.mxu0 %v4435
      %v4590 = vpop.f32.mrf.mxu0
      %v4591 = vadd.f32 %v4342, %v4590
      %v4592 = vpop.f32.mrf.mxu0
      %v4593 = vpop.f32.mrf.mxu0
      %v4594 = vadd.f32 %v4345, %v4593
      %v4595 = vpop.f32.mrf.mxu0
      %4596 = vmatprep.mubr.bf16.mxu0 0
      %4597 = vmatmul.mubr.bf16.gmra.mxu0 %v4438
      %v4598 = vpop.f32.mrf.mxu0
      %v4599 = vadd.f32 %v4350, %v4598
      %v4600 = vpop.f32.mrf.mxu0
      %v4601 = vpop.f32.mrf.mxu0
      %v4602 = vadd.f32 %v4353, %v4601
      %v4603 = vpop.f32.mrf.mxu0
      %4604 = vmatprep.mubr.bf16.mxu0 0
      %4605 = vmatmul.mubr.bf16.gmra.mxu0 %v4441
      %v4606 = vpop.f32.mrf.mxu0
      %v4607 = vadd.f32 %v4358, %v4606
      %v4608 = vpop.f32.mrf.mxu0
      %v4609 = vpop.f32.mrf.mxu0
      %v4610 = vadd.f32 %v4361, %v4609
      %v4611 = vpop.f32.mrf.mxu0
      %4612 = vmatprep.mubr.bf16.mxu0 0
      %4613 = vmatmul.mubr.bf16.gmra.mxu0 %v4444
      %v4614 = vpop.f32.mrf.mxu0
      %v4615 = vadd.f32 %v4366, %v4614
      %v4616 = vpop.f32.mrf.mxu0
      %v4617 = vpop.f32.mrf.mxu0
      %v4618 = vadd.f32 %v4369, %v4617
      %v4619 = vpop.f32.mrf.mxu0
      %4620 = vmatprep.mubr.bf16.mxu0 0
      %4621 = vmatmul.mubr.bf16.gmra.mxu0 %v4447
      %v4622 = vpop.f32.mrf.mxu0
      %v4623 = vadd.f32 %v4374, %v4622
      %v4624 = vpop.f32.mrf.mxu0
      %v4625 = vpop.f32.mrf.mxu0
      %v4626 = vadd.f32 %v4377, %v4625
      %v4627 = vpop.f32.mrf.mxu0
      %4628 = vdwg.mxu0
      %v4629 = vld [vmem:[%s4] sm:$0x1]
      %v4631 = vlaneseq
      %v4632 = vshrl.u32 %v4631, 7
      %v4633 = vsub.s32 0, %v4632
      %v4634 = vrot.slane %v4629, %v4633
      %v4636 = vadd.f32 %v4487, %v4634
      %v4637 = vadd.f32 %v4490, %v4634
      %v4638 = vadd.f32 %v4495, %v4634
      %v4639 = vadd.f32 %v4498, %v4634
      %v4640 = vadd.f32 %v4503, %v4634
      %v4641 = vadd.f32 %v4506, %v4634
      %v4642 = vadd.f32 %v4511, %v4634
      %v4643 = vadd.f32 %v4514, %v4634
      %v4644 = vadd.f32 %v4519, %v4634
      %v4645 = vadd.f32 %v4522, %v4634
      %v4646 = vadd.f32 %v4527, %v4634
      %v4647 = vadd.f32 %v4530, %v4634
      %v4648 = vadd.f32 %v4535, %v4634
      %v4649 = vadd.f32 %v4538, %v4634
      %v4650 = vadd.f32 %v4543, %v4634
      %v4651 = vadd.f32 %v4546, %v4634
      %v4652 = vadd.f32 %v4551, %v4634
      %v4653 = vadd.f32 %v4554, %v4634
      %v4654 = vadd.f32 %v4559, %v4634
      %v4655 = vadd.f32 %v4562, %v4634
      %v4656 = vadd.f32 %v4567, %v4634
      %v4657 = vadd.f32 %v4570, %v4634
      %v4658 = vadd.f32 %v4575, %v4634
      %v4659 = vadd.f32 %v4578, %v4634
      %v4660 = vadd.f32 %v4583, %v4634
      %v4661 = vadd.f32 %v4586, %v4634
      %v4662 = vadd.f32 %v4591, %v4634
      %v4663 = vadd.f32 %v4594, %v4634
      %v4664 = vadd.f32 %v4599, %v4634
      %v4665 = vadd.f32 %v4602, %v4634
      %v4666 = vadd.f32 %v4607, %v4634
      %v4667 = vadd.f32 %v4610, %v4634
      %v4668 = vadd.f32 %v4615, %v4634
      %v4669 = vadd.f32 %v4618, %v4634
      %v4670 = vadd.f32 %v4623, %v4634
      %v4671 = vadd.f32 %v4626, %v4634
      %v4672 = vmax.f32 %v4636, 0.0
      %v4673 = vmax.f32 %v4637, 0.0
      %v4674 = vmax.f32 %v4638, 0.0
      %v4675 = vmax.f32 %v4639, 0.0
      %v4676 = vmax.f32 %v4640, 0.0
      %v4677 = vmax.f32 %v4641, 0.0
      %v4678 = vmax.f32 %v4642, 0.0
      %v4679 = vmax.f32 %v4643, 0.0
      %v4680 = vmax.f32 %v4644, 0.0
      %v4681 = vmax.f32 %v4645, 0.0
      %v4682 = vmax.f32 %v4646, 0.0
      %v4683 = vmax.f32 %v4647, 0.0
      %v4684 = vmax.f32 %v4648, 0.0
      %v4685 = vmax.f32 %v4649, 0.0
      %v4686 = vmax.f32 %v4650, 0.0
      %v4687 = vmax.f32 %v4651, 0.0
      %v4688 = vmax.f32 %v4652, 0.0
      %v4689 = vmax.f32 %v4653, 0.0
      %v4690 = vmax.f32 %v4654, 0.0
      %v4691 = vmax.f32 %v4655, 0.0
      %v4692 = vmax.f32 %v4656, 0.0
      %v4693 = vmax.f32 %v4657, 0.0
      %v4694 = vmax.f32 %v4658, 0.0
      %v4695 = vmax.f32 %v4659, 0.0
      %v4696 = vmax.f32 %v4660, 0.0
      %v4697 = vmax.f32 %v4661, 0.0
      %v4698 = vmax.f32 %v4662, 0.0
      %v4699 = vmax.f32 %v4663, 0.0
      %v4700 = vmax.f32 %v4664, 0.0
      %v4701 = vmax.f32 %v4665, 0.0
      %v4702 = vmax.f32 %v4666, 0.0
      %v4703 = vmax.f32 %v4667, 0.0
      %v4704 = vmax.f32 %v4668, 0.0
      %v4705 = vmax.f32 %v4669, 0.0
      %v4706 = vmax.f32 %v4670, 0.0
      %v4707 = vmax.f32 %v4671, 0.0
      %s4708 = smul.u32 %s23, 16
      %s4709 = ssub.s32 %s4708, 1
      %v4710 = vstv %s4709
      %v4711 = vadd.s32 %v4710, 1
      %v4712 = vadd.s32 %v4710, 2
      %v4713 = vadd.s32 %v4710, 3
      %v4714 = vadd.s32 %v4710, 4
      %v4715 = vadd.s32 %v4710, 5
      %v4716 = vadd.s32 %v4710, 6
      %v4717 = vadd.s32 %v4710, 7
      %v4718 = vadd.s32 %v4710, 8
      %v4719 = vadd.s32 %v4710, 9
      %v4720 = vadd.s32 %v4710, 10
      %v4721 = vadd.s32 %v4710, 11
      %v4722 = vadd.s32 %v4710, 12
      %v4723 = vadd.s32 %v4710, 13
      %v4724 = vadd.s32 %v4710, 14
      %v4725 = vadd.s32 %v4710, 15
      %v4726 = vadd.s32 %v4710, 16
      %v4727 = vadd.s32 %v4710, 17
      %vm4728 = vcmp.ge.s32.totalorder %v4710, 0
      %vm4729 = vcmp.ge.s32.totalorder %v4711, 0
      %vm4730 = vcmp.ge.s32.totalorder %v4712, 0
      %vm4731 = vcmp.ge.s32.totalorder %v4713, 0
      %vm4732 = vcmp.ge.s32.totalorder %v4714, 0
      %vm4733 = vcmp.ge.s32.totalorder %v4715, 0
      %vm4734 = vcmp.ge.s32.totalorder %v4716, 0
      %vm4735 = vcmp.ge.s32.totalorder %v4717, 0
      %vm4736 = vcmp.ge.s32.totalorder %v4718, 0
      %vm4737 = vcmp.ge.s32.totalorder %v4719, 0
      %vm4738 = vcmp.ge.s32.totalorder %v4720, 0
      %vm4739 = vcmp.ge.s32.totalorder %v4721, 0
      %vm4740 = vcmp.ge.s32.totalorder %v4722, 0
      %vm4741 = vcmp.ge.s32.totalorder %v4723, 0
      %vm4742 = vcmp.ge.s32.totalorder %v4724, 0
      %vm4743 = vcmp.ge.s32.totalorder %v4725, 0
      %vm4744 = vcmp.ge.s32.totalorder %v4726, 0
      %vm4745 = vcmp.ge.s32.totalorder %v4727, 0
      %vm4746 = vcmp.lt.s32.totalorder %v4710, 16
      %vm4747 = vcmp.lt.s32.totalorder %v4711, 16
      %vm4748 = vcmp.lt.s32.totalorder %v4712, 16
      %vm4749 = vcmp.lt.s32.totalorder %v4713, 16
      %vm4750 = vcmp.lt.s32.totalorder %v4714, 16
      %vm4751 = vcmp.lt.s32.totalorder %v4715, 16
      %vm4752 = vcmp.lt.s32.totalorder %v4716, 16
      %vm4753 = vcmp.lt.s32.totalorder %v4717, 16
      %vm4754 = vcmp.lt.s32.totalorder %v4718, 16
      %vm4755 = vcmp.lt.s32.totalorder %v4719, 16
      %vm4756 = vcmp.lt.s32.totalorder %v4720, 16
      %vm4757 = vcmp.lt.s32.totalorder %v4721, 16
      %vm4758 = vcmp.lt.s32.totalorder %v4722, 16
      %vm4759 = vcmp.lt.s32.totalorder %v4723, 16
      %vm4760 = vcmp.lt.s32.totalorder %v4724, 16
      %vm4761 = vcmp.lt.s32.totalorder %v4725, 16
      %vm4762 = vcmp.lt.s32.totalorder %v4726, 16
      %vm4763 = vcmp.lt.s32.totalorder %v4727, 16
      %vm4764 = vmand %vm4728, %vm4746
      %vm4765 = vmand %vm4729, %vm4747
      %vm4766 = vmand %vm4730, %vm4748
      %vm4767 = vmand %vm4731, %vm4749
      %vm4768 = vmand %vm4732, %vm4750
      %vm4769 = vmand %vm4733, %vm4751
      %vm4770 = vmand %vm4734, %vm4752
      %vm4771 = vmand %vm4735, %vm4753
      %vm4772 = vmand %vm4736, %vm4754
      %vm4773 = vmand %vm4737, %vm4755
      %vm4774 = vmand %vm4738, %vm4756
      %vm4775 = vmand %vm4739, %vm4757
      %vm4776 = vmand %vm4740, %vm4758
      %vm4777 = vmand %vm4741, %vm4759
      %vm4778 = vmand %vm4742, %vm4760
      %vm4779 = vmand %vm4743, %vm4761
      %vm4780 = vmand %vm4744, %vm4762
      %vm4781 = vmand %vm4745, %vm4763
      %v4782 = vsel %vm4764, 1, 0
      %v4783 = vsel %vm4765, 1, 0
      %v4784 = vsel %vm4766, 1, 0
      %v4785 = vsel %vm4767, 1, 0
      %v4786 = vsel %vm4768, 1, 0
      %v4787 = vsel %vm4769, 1, 0
      %v4788 = vsel %vm4770, 1, 0
      %v4789 = vsel %vm4771, 1, 0
      %v4790 = vsel %vm4772, 1, 0
      %v4791 = vsel %vm4773, 1, 0
      %v4792 = vsel %vm4774, 1, 0
      %v4793 = vsel %vm4775, 1, 0
      %v4794 = vsel %vm4776, 1, 0
      %v4795 = vsel %vm4777, 1, 0
      %v4796 = vsel %vm4778, 1, 0
      %v4797 = vsel %vm4779, 1, 0
      %v4798 = vsel %vm4780, 1, 0
      %v4799 = vsel %vm4781, 1, 0
      %vm4800 = vcmp.eq.s32.totalorder %v4782, 1
      %vm4801 = vcmp.eq.s32.totalorder %v4783, 1
      %vm4802 = vcmp.eq.s32.totalorder %v4784, 1
      %vm4803 = vcmp.eq.s32.totalorder %v4785, 1
      %vm4804 = vcmp.eq.s32.totalorder %v4786, 1
      %vm4805 = vcmp.eq.s32.totalorder %v4787, 1
      %vm4806 = vcmp.eq.s32.totalorder %v4788, 1
      %vm4807 = vcmp.eq.s32.totalorder %v4789, 1
      %vm4808 = vcmp.eq.s32.totalorder %v4790, 1
      %vm4809 = vcmp.eq.s32.totalorder %v4791, 1
      %vm4810 = vcmp.eq.s32.totalorder %v4792, 1
      %vm4811 = vcmp.eq.s32.totalorder %v4793, 1
      %vm4812 = vcmp.eq.s32.totalorder %v4794, 1
      %vm4813 = vcmp.eq.s32.totalorder %v4795, 1
      %vm4814 = vcmp.eq.s32.totalorder %v4796, 1
      %vm4815 = vcmp.eq.s32.totalorder %v4797, 1
      %vm4816 = vcmp.eq.s32.totalorder %v4798, 1
      %vm4817 = vcmp.eq.s32.totalorder %v4799, 1
      %v4818 = vsel %vm4800, %v4672, 0.0
      %v4819 = vsel %vm4800, %v4673, 0.0
      %v4820 = vsel %vm4801, %v4674, 0.0
      %v4821 = vsel %vm4801, %v4675, 0.0
      %v4822 = vsel %vm4802, %v4676, 0.0
      %v4823 = vsel %vm4802, %v4677, 0.0
      %v4824 = vsel %vm4803, %v4678, 0.0
      %v4825 = vsel %vm4803, %v4679, 0.0
      %v4826 = vsel %vm4804, %v4680, 0.0
      %v4827 = vsel %vm4804, %v4681, 0.0
      %v4828 = vsel %vm4805, %v4682, 0.0
      %v4829 = vsel %vm4805, %v4683, 0.0
      %v4830 = vsel %vm4806, %v4684, 0.0
      %v4831 = vsel %vm4806, %v4685, 0.0
      %v4832 = vsel %vm4807, %v4686, 0.0
      %v4833 = vsel %vm4807, %v4687, 0.0
      %v4834 = vsel %vm4808, %v4688, 0.0
      %v4835 = vsel %vm4808, %v4689, 0.0
      %v4836 = vsel %vm4809, %v4690, 0.0
      %v4837 = vsel %vm4809, %v4691, 0.0
      %v4838 = vsel %vm4810, %v4692, 0.0
      %v4839 = vsel %vm4810, %v4693, 0.0
      %v4840 = vsel %vm4811, %v4694, 0.0
      %v4841 = vsel %vm4811, %v4695, 0.0
      %v4842 = vsel %vm4812, %v4696, 0.0
      %v4843 = vsel %vm4812, %v4697, 0.0
      %v4844 = vsel %vm4813, %v4698, 0.0
      %v4845 = vsel %vm4813, %v4699, 0.0
      %v4846 = vsel %vm4814, %v4700, 0.0
      %v4847 = vsel %vm4814, %v4701, 0.0
      %v4848 = vsel %vm4815, %v4702, 0.0
      %v4849 = vsel %vm4815, %v4703, 0.0
      %v4850 = vsel %vm4816, %v4704, 0.0
      %v4851 = vsel %vm4816, %v4705, 0.0
      %v4852 = vsel %vm4817, %v4706, 0.0
      %v4853 = vsel %vm4817, %v4707, 0.0
      %vm4890 = vcmask 1040384
      %v4891 = vrot.slane %v4818, 7
      %v4892 = vrot.slane %v4819, 7
      %v4893 = vsel %vm4890, %v4891, %v4892
      %v4894 = vrot.slane %v4820, 7
      %v4895 = vrot.slane %v4821, 7
      %v4896 = vsel %vm4890, %v4894, %v4895
      %v4897 = vrot.slane %v4822, 7
      %v4898 = vrot.slane %v4823, 7
      %v4899 = vsel %vm4890, %v4897, %v4898
      %v4900 = vrot.slane %v4824, 7
      %v4901 = vrot.slane %v4825, 7
      %v4902 = vsel %vm4890, %v4900, %v4901
      %v4903 = vrot.slane %v4826, 7
      %v4904 = vrot.slane %v4827, 7
      %v4905 = vsel %vm4890, %v4903, %v4904
      %v4906 = vrot.slane %v4828, 7
      %v4907 = vrot.slane %v4829, 7
      %v4908 = vsel %vm4890, %v4906, %v4907
      %v4909 = vrot.slane %v4830, 7
      %v4910 = vrot.slane %v4831, 7
      %v4911 = vsel %vm4890, %v4909, %v4910
      %v4912 = vrot.slane %v4832, 7
      %v4913 = vrot.slane %v4833, 7
      %v4914 = vsel %vm4890, %v4912, %v4913
      %v4915 = vrot.slane %v4834, 7
      %v4916 = vrot.slane %v4835, 7
      %v4917 = vsel %vm4890, %v4915, %v4916
      %v4918 = vrot.slane %v4836, 7
      %v4919 = vrot.slane %v4837, 7
      %v4920 = vsel %vm4890, %v4918, %v4919
      %v4921 = vrot.slane %v4838, 7
      %v4922 = vrot.slane %v4839, 7
      %v4923 = vsel %vm4890, %v4921, %v4922
      %v4924 = vrot.slane %v4840, 7
      %v4925 = vrot.slane %v4841, 7
      %v4926 = vsel %vm4890, %v4924, %v4925
      %v4927 = vrot.slane %v4842, 7
      %v4928 = vrot.slane %v4843, 7
      %v4929 = vsel %vm4890, %v4927, %v4928
      %v4930 = vrot.slane %v4844, 7
      %v4931 = vrot.slane %v4845, 7
      %v4932 = vsel %vm4890, %v4930, %v4931
      %v4933 = vrot.slane %v4846, 7
      %v4934 = vrot.slane %v4847, 7
      %v4935 = vsel %vm4890, %v4933, %v4934
      %v4936 = vrot.slane %v4848, 7
      %v4937 = vrot.slane %v4849, 7
      %v4938 = vsel %vm4890, %v4936, %v4937
      %v4939 = vrot.slane %v4850, 7
      %v4940 = vrot.slane %v4851, 7
      %v4941 = vsel %vm4890, %v4939, %v4940
      %v4942 = vrot.slane %v4852, 7
      %v4943 = vrot.slane %v4853, 7
      %v4944 = vsel %vm4890, %v4942, %v4943
      %v4999 = vsel %vm4890, 0.0, %v4891
      %v5000 = vsel %vm4890, 0.0, %v4894
      %v5001 = vsel %vm4890, 0.0, %v4897
      %v5002 = vsel %vm4890, 0.0, %v4900
      %v5003 = vsel %vm4890, 0.0, %v4903
      %v5004 = vsel %vm4890, 0.0, %v4906
      %v5005 = vsel %vm4890, 0.0, %v4909
      %v5006 = vsel %vm4890, 0.0, %v4912
      %v5007 = vsel %vm4890, 0.0, %v4915
      %v5008 = vsel %vm4890, 0.0, %v4918
      %v5009 = vsel %vm4890, 0.0, %v4921
      %v5010 = vsel %vm4890, 0.0, %v4924
      %v5011 = vsel %vm4890, 0.0, %v4927
      %v5012 = vsel %vm4890, 0.0, %v4930
      %v5013 = vsel %vm4890, 0.0, %v4933
      %v5014 = vsel %vm4890, 0.0, %v4936
      %v5015 = vsel %vm4890, 0.0, %v4939
      %v5016 = vsel %vm4890, 0.0, %v4942
      %v5017 = vsel %vm4890, %v4892, 0.0
      %v5018 = vsel %vm4890, %v4895, 0.0
      %v5019 = vsel %vm4890, %v4898, 0.0
      %v5020 = vsel %vm4890, %v4901, 0.0
      %v5021 = vsel %vm4890, %v4904, 0.0
      %v5022 = vsel %vm4890, %v4907, 0.0
      %v5023 = vsel %vm4890, %v4910, 0.0
      %v5024 = vsel %vm4890, %v4913, 0.0
      %v5025 = vsel %vm4890, %v4916, 0.0
      %v5026 = vsel %vm4890, %v4919, 0.0
      %v5027 = vsel %vm4890, %v4922, 0.0
      %v5028 = vsel %vm4890, %v4925, 0.0
      %v5029 = vsel %vm4890, %v4928, 0.0
      %v5030 = vsel %vm4890, %v4931, 0.0
      %v5031 = vsel %vm4890, %v4934, 0.0
      %v5032 = vsel %vm4890, %v4937, 0.0
      %v5033 = vsel %vm4890, %v4940, 0.0
      %v5034 = vsel %vm4890, %v4943, 0.0
      %v5035 = vpack.c.bf16 %v4893, %v4999
      %v5036 = vpack.c.bf16 %v5017, %v5017
      %v5037 = vpack.c.bf16 %v4896, %v5000
      %v5038 = vpack.c.bf16 %v5018, %v5018
      %v5039 = vpack.c.bf16 %v4899, %v5001
      %v5040 = vpack.c.bf16 %v5019, %v5019
      %v5041 = vpack.c.bf16 %v4902, %v5002
      %v5042 = vpack.c.bf16 %v5020, %v5020
      %v5043 = vpack.c.bf16 %v4905, %v5003
      %v5044 = vpack.c.bf16 %v5021, %v5021
      %v5045 = vpack.c.bf16 %v4908, %v5004
      %v5046 = vpack.c.bf16 %v5022, %v5022
      %v5047 = vpack.c.bf16 %v4911, %v5005
      %v5048 = vpack.c.bf16 %v5023, %v5023
      %v5049 = vpack.c.bf16 %v4914, %v5006
      %v5050 = vpack.c.bf16 %v5024, %v5024
      %v5051 = vpack.c.bf16 %v4917, %v5007
      %v5052 = vpack.c.bf16 %v5025, %v5025
      %v5053 = vpack.c.bf16 %v4920, %v5008
      %v5054 = vpack.c.bf16 %v5026, %v5026
      %v5055 = vpack.c.bf16 %v4923, %v5009
      %v5056 = vpack.c.bf16 %v5027, %v5027
      %v5057 = vpack.c.bf16 %v4926, %v5010
      %v5058 = vpack.c.bf16 %v5028, %v5028
      %v5059 = vpack.c.bf16 %v4929, %v5011
      %v5060 = vpack.c.bf16 %v5029, %v5029
      %v5061 = vpack.c.bf16 %v4932, %v5012
      %v5062 = vpack.c.bf16 %v5030, %v5030
      %v5063 = vpack.c.bf16 %v4935, %v5013
      %v5064 = vpack.c.bf16 %v5031, %v5031
      %v5065 = vpack.c.bf16 %v4938, %v5014
      %v5066 = vpack.c.bf16 %v5032, %v5032
      %v5067 = vpack.c.bf16 %v4941, %v5015
      %v5068 = vpack.c.bf16 %v5033, %v5033
      %v5069 = vpack.c.bf16 %v4944, %v5016
      %v5070 = vpack.c.bf16 %v5034, %v5034
      %v5072 = vshrl.u32 %v5035, 16
      %v5074 = vshll.u32 %v5035, 16
      %v5076 = vrot.slane %v5074, 1
      %v5077 = vor.u32 %v5072, %v5076
      %v5079 = vshll.u32 %v5036, 16
      %v5081 = vrot.slane %v5079, 1
      %v5082 = vsel %vm529, %v5077, %v5081
      %v5084 = vshrl.u32 %v5037, 16
      %v5086 = vshll.u32 %v5037, 16
      %v5088 = vrot.slane %v5086, 1
      %v5089 = vor.u32 %v5084, %v5088
      %v5091 = vshll.u32 %v5038, 16
      %v5093 = vrot.slane %v5091, 1
      %v5094 = vsel %vm529, %v5089, %v5093
      %v5096 = vshrl.u32 %v5039, 16
      %v5098 = vshll.u32 %v5039, 16
      %v5100 = vrot.slane %v5098, 1
      %v5101 = vor.u32 %v5096, %v5100
      %v5103 = vshll.u32 %v5040, 16
      %v5105 = vrot.slane %v5103, 1
      %v5106 = vsel %vm529, %v5101, %v5105
      %v5108 = vshrl.u32 %v5041, 16
      %v5110 = vshll.u32 %v5041, 16
      %v5112 = vrot.slane %v5110, 1
      %v5113 = vor.u32 %v5108, %v5112
      %v5115 = vshll.u32 %v5042, 16
      %v5117 = vrot.slane %v5115, 1
      %v5118 = vsel %vm529, %v5113, %v5117
      %v5120 = vshrl.u32 %v5043, 16
      %v5122 = vshll.u32 %v5043, 16
      %v5124 = vrot.slane %v5122, 1
      %v5125 = vor.u32 %v5120, %v5124
      %v5127 = vshll.u32 %v5044, 16
      %v5129 = vrot.slane %v5127, 1
      %v5130 = vsel %vm529, %v5125, %v5129
      %v5132 = vshrl.u32 %v5045, 16
      %v5134 = vshll.u32 %v5045, 16
      %v5136 = vrot.slane %v5134, 1
      %v5137 = vor.u32 %v5132, %v5136
      %v5139 = vshll.u32 %v5046, 16
      %v5141 = vrot.slane %v5139, 1
      %v5142 = vsel %vm529, %v5137, %v5141
      %v5144 = vshrl.u32 %v5047, 16
      %v5146 = vshll.u32 %v5047, 16
      %v5148 = vrot.slane %v5146, 1
      %v5149 = vor.u32 %v5144, %v5148
      %v5151 = vshll.u32 %v5048, 16
      %v5153 = vrot.slane %v5151, 1
      %v5154 = vsel %vm529, %v5149, %v5153
      %v5156 = vshrl.u32 %v5049, 16
      %v5158 = vshll.u32 %v5049, 16
      %v5160 = vrot.slane %v5158, 1
      %v5161 = vor.u32 %v5156, %v5160
      %v5163 = vshll.u32 %v5050, 16
      %v5165 = vrot.slane %v5163, 1
      %v5166 = vsel %vm529, %v5161, %v5165
      %v5168 = vshrl.u32 %v5051, 16
      %v5170 = vshll.u32 %v5051, 16
      %v5172 = vrot.slane %v5170, 1
      %v5173 = vor.u32 %v5168, %v5172
      %v5175 = vshll.u32 %v5052, 16
      %v5177 = vrot.slane %v5175, 1
      %v5178 = vsel %vm529, %v5173, %v5177
      %v5180 = vshrl.u32 %v5053, 16
      %v5182 = vshll.u32 %v5053, 16
      %v5184 = vrot.slane %v5182, 1
      %v5185 = vor.u32 %v5180, %v5184
      %v5187 = vshll.u32 %v5054, 16
      %v5189 = vrot.slane %v5187, 1
      %v5190 = vsel %vm529, %v5185, %v5189
      %v5192 = vshrl.u32 %v5055, 16
      %v5194 = vshll.u32 %v5055, 16
      %v5196 = vrot.slane %v5194, 1
      %v5197 = vor.u32 %v5192, %v5196
      %v5199 = vshll.u32 %v5056, 16
      %v5201 = vrot.slane %v5199, 1
      %v5202 = vsel %vm529, %v5197, %v5201
      %v5204 = vshrl.u32 %v5057, 16
      %v5206 = vshll.u32 %v5057, 16
      %v5208 = vrot.slane %v5206, 1
      %v5209 = vor.u32 %v5204, %v5208
      %v5211 = vshll.u32 %v5058, 16
      %v5213 = vrot.slane %v5211, 1
      %v5214 = vsel %vm529, %v5209, %v5213
      %v5216 = vshrl.u32 %v5059, 16
      %v5218 = vshll.u32 %v5059, 16
      %v5220 = vrot.slane %v5218, 1
      %v5221 = vor.u32 %v5216, %v5220
      %v5223 = vshll.u32 %v5060, 16
      %v5225 = vrot.slane %v5223, 1
      %v5226 = vsel %vm529, %v5221, %v5225
      %v5228 = vshrl.u32 %v5061, 16
      %v5230 = vshll.u32 %v5061, 16
      %v5232 = vrot.slane %v5230, 1
      %v5233 = vor.u32 %v5228, %v5232
      %v5235 = vshll.u32 %v5062, 16
      %v5237 = vrot.slane %v5235, 1
      %v5238 = vsel %vm529, %v5233, %v5237
      %v5240 = vshrl.u32 %v5063, 16
      %v5242 = vshll.u32 %v5063, 16
      %v5244 = vrot.slane %v5242, 1
      %v5245 = vor.u32 %v5240, %v5244
      %v5247 = vshll.u32 %v5064, 16
      %v5249 = vrot.slane %v5247, 1
      %v5250 = vsel %vm529, %v5245, %v5249
      %v5252 = vshrl.u32 %v5065, 16
      %v5254 = vshll.u32 %v5065, 16
      %v5256 = vrot.slane %v5254, 1
      %v5257 = vor.u32 %v5252, %v5256
      %v5259 = vshll.u32 %v5066, 16
      %v5261 = vrot.slane %v5259, 1
      %v5262 = vsel %vm529, %v5257, %v5261
      %5263 = vrot.lane.b32.xlu0 %v5082, 4
      %v5264 = vpop.permute.xlu0 %5263
      %5265 = vrot.lane.b32.xlu0 %v5094, 4
      %v5266 = vpop.permute.xlu0 %5265
      %5267 = vrot.lane.b32.xlu0 %v5106, 4
      %v5268 = vpop.permute.xlu0 %5267
      %5269 = vrot.lane.b32.xlu0 %v5118, 4
      %v5270 = vpop.permute.xlu0 %5269
      %5271 = vrot.lane.b32.xlu0 %v5130, 4
      %v5272 = vpop.permute.xlu0 %5271
      %5273 = vrot.lane.b32.xlu0 %v5142, 4
      %v5274 = vpop.permute.xlu0 %5273
      %5275 = vrot.lane.b32.xlu0 %v5154, 4
      %v5276 = vpop.permute.xlu0 %5275
      %5277 = vrot.lane.b32.xlu0 %v5166, 4
      %v5278 = vpop.permute.xlu0 %5277
      %5279 = vrot.lane.b32.xlu0 %v5178, 4
      %v5280 = vpop.permute.xlu0 %5279
      %5281 = vrot.lane.b32.xlu0 %v5190, 4
      %v5282 = vpop.permute.xlu0 %5281
      %5283 = vrot.lane.b32.xlu0 %v5202, 4
      %v5284 = vpop.permute.xlu0 %5283
      %5285 = vrot.lane.b32.xlu0 %v5214, 4
      %v5286 = vpop.permute.xlu0 %5285
      %5287 = vrot.lane.b32.xlu0 %v5226, 4
      %v5288 = vpop.permute.xlu0 %5287
      %5289 = vrot.lane.b32.xlu0 %v5238, 4
      %v5290 = vpop.permute.xlu0 %5289
      %5291 = vrot.lane.b32.xlu0 %v5250, 4
      %v5292 = vpop.permute.xlu0 %5291
      %5293 = vrot.lane.b32.xlu0 %v5262, 4
      %v5294 = vpop.permute.xlu0 %5293
      %v5327 = vrot.slane %v5035, 1
      %v5328 = vrot.slane %v5036, 1
      %v5329 = vsel %vm854, %v5327, %v5328
      %v5330 = vrot.slane %v5037, 1
      %v5331 = vrot.slane %v5038, 1
      %v5332 = vsel %vm854, %v5330, %v5331
      %v5333 = vrot.slane %v5039, 1
      %v5334 = vrot.slane %v5040, 1
      %v5335 = vsel %vm854, %v5333, %v5334
      %v5336 = vrot.slane %v5041, 1
      %v5337 = vrot.slane %v5042, 1
      %v5338 = vsel %vm854, %v5336, %v5337
      %v5339 = vrot.slane %v5043, 1
      %v5340 = vrot.slane %v5044, 1
      %v5341 = vsel %vm854, %v5339, %v5340
      %v5342 = vrot.slane %v5045, 1
      %v5343 = vrot.slane %v5046, 1
      %v5344 = vsel %vm854, %v5342, %v5343
      %v5345 = vrot.slane %v5047, 1
      %v5346 = vrot.slane %v5048, 1
      %v5347 = vsel %vm854, %v5345, %v5346
      %v5348 = vrot.slane %v5049, 1
      %v5349 = vrot.slane %v5050, 1
      %v5350 = vsel %vm854, %v5348, %v5349
      %v5351 = vrot.slane %v5051, 1
      %v5352 = vrot.slane %v5052, 1
      %v5353 = vsel %vm854, %v5351, %v5352
      %v5354 = vrot.slane %v5053, 1
      %v5355 = vrot.slane %v5054, 1
      %v5356 = vsel %vm854, %v5354, %v5355
      %v5357 = vrot.slane %v5055, 1
      %v5358 = vrot.slane %v5056, 1
      %v5359 = vsel %vm854, %v5357, %v5358
      %v5360 = vrot.slane %v5057, 1
      %v5361 = vrot.slane %v5058, 1
      %v5362 = vsel %vm854, %v5360, %v5361
      %v5363 = vrot.slane %v5059, 1
      %v5364 = vrot.slane %v5060, 1
      %v5365 = vsel %vm854, %v5363, %v5364
      %v5366 = vrot.slane %v5061, 1
      %v5367 = vrot.slane %v5062, 1
      %v5368 = vsel %vm854, %v5366, %v5367
      %v5369 = vrot.slane %v5063, 1
      %v5370 = vrot.slane %v5064, 1
      %v5371 = vsel %vm854, %v5369, %v5370
      %v5372 = vrot.slane %v5065, 1
      %v5373 = vrot.slane %v5066, 1
      %v5374 = vsel %vm854, %v5372, %v5373
      %5375 = vrot.lane.b32.xlu0 %v5329, 8
      %v5376 = vpop.permute.xlu0 %5375
      %5377 = vrot.lane.b32.xlu0 %v5332, 8
      %v5378 = vpop.permute.xlu0 %5377
      %5379 = vrot.lane.b32.xlu0 %v5335, 8
      %v5380 = vpop.permute.xlu0 %5379
      %5381 = vrot.lane.b32.xlu0 %v5338, 8
      %v5382 = vpop.permute.xlu0 %5381
      %5383 = vrot.lane.b32.xlu0 %v5341, 8
      %v5384 = vpop.permute.xlu0 %5383
      %5385 = vrot.lane.b32.xlu0 %v5344, 8
      %v5386 = vpop.permute.xlu0 %5385
      %5387 = vrot.lane.b32.xlu0 %v5347, 8
      %v5388 = vpop.permute.xlu0 %5387
      %5389 = vrot.lane.b32.xlu0 %v5350, 8
      %v5390 = vpop.permute.xlu0 %5389
      %5391 = vrot.lane.b32.xlu0 %v5353, 8
      %v5392 = vpop.permute.xlu0 %5391
      %5393 = vrot.lane.b32.xlu0 %v5356, 8
      %v5394 = vpop.permute.xlu0 %5393
      %5395 = vrot.lane.b32.xlu0 %v5359, 8
      %v5396 = vpop.permute.xlu0 %5395
      %5397 = vrot.lane.b32.xlu0 %v5362, 8
      %v5398 = vpop.permute.xlu0 %5397
      %5399 = vrot.lane.b32.xlu0 %v5365, 8
      %v5400 = vpop.permute.xlu0 %5399
      %5401 = vrot.lane.b32.xlu0 %v5368, 8
      %v5402 = vpop.permute.xlu0 %5401
      %5403 = vrot.lane.b32.xlu0 %v5371, 8
      %v5404 = vpop.permute.xlu0 %5403
      %5405 = vrot.lane.b32.xlu0 %v5374, 8
      %v5406 = vpop.permute.xlu0 %5405
      %5408 = vrot.lane.b32.xlu0 %v5037, 12
      %v5409 = vpop.permute.xlu0 %5408
      %5410 = vrot.lane.b32.xlu0 %v5039, 12
      %v5411 = vpop.permute.xlu0 %5410
      %5412 = vrot.lane.b32.xlu0 %v5041, 12
      %v5413 = vpop.permute.xlu0 %5412
      %5414 = vrot.lane.b32.xlu0 %v5043, 12
      %v5415 = vpop.permute.xlu0 %5414
      %5416 = vrot.lane.b32.xlu0 %v5045, 12
      %v5417 = vpop.permute.xlu0 %5416
      %5418 = vrot.lane.b32.xlu0 %v5047, 12
      %v5419 = vpop.permute.xlu0 %5418
      %5420 = vrot.lane.b32.xlu0 %v5049, 12
      %v5421 = vpop.permute.xlu0 %5420
      %5422 = vrot.lane.b32.xlu0 %v5051, 12
      %v5423 = vpop.permute.xlu0 %5422
      %5424 = vrot.lane.b32.xlu0 %v5053, 12
      %v5425 = vpop.permute.xlu0 %5424
      %5426 = vrot.lane.b32.xlu0 %v5055, 12
      %v5427 = vpop.permute.xlu0 %5426
      %5428 = vrot.lane.b32.xlu0 %v5057, 12
      %v5429 = vpop.permute.xlu0 %5428
      %5430 = vrot.lane.b32.xlu0 %v5059, 12
      %v5431 = vpop.permute.xlu0 %5430
      %5432 = vrot.lane.b32.xlu0 %v5061, 12
      %v5433 = vpop.permute.xlu0 %5432
      %5434 = vrot.lane.b32.xlu0 %v5063, 12
      %v5435 = vpop.permute.xlu0 %5434
      %5436 = vrot.lane.b32.xlu0 %v5065, 12
      %v5437 = vpop.permute.xlu0 %5436
      %5438 = vrot.lane.b32.xlu0 %v5067, 12
      %v5439 = vpop.permute.xlu0 %5438
      %v5441 = vshrl.u32 %v5067, 16
      %v5443 = vshll.u32 %v5067, 16
      %v5445 = vrot.slane %v5443, 1
      %v5446 = vor.u32 %v5441, %v5445
      %v5448 = vshll.u32 %v5068, 16
      %v5450 = vrot.slane %v5448, 1
      %v5451 = vsel %vm529, %v5446, %v5450
      %5452 = vrot.lane.b32.xlu0 %v5094, 16
      %v5453 = vpop.permute.xlu0 %5452
      %5454 = vrot.lane.b32.xlu0 %v5106, 16
      %v5455 = vpop.permute.xlu0 %5454
      %5456 = vrot.lane.b32.xlu0 %v5118, 16
      %v5457 = vpop.permute.xlu0 %5456
      %5458 = vrot.lane.b32.xlu0 %v5130, 16
      %v5459 = vpop.permute.xlu0 %5458
      %5460 = vrot.lane.b32.xlu0 %v5142, 16
      %v5461 = vpop.permute.xlu0 %5460
      %5462 = vrot.lane.b32.xlu0 %v5154, 16
      %v5463 = vpop.permute.xlu0 %5462
      %5464 = vrot.lane.b32.xlu0 %v5166, 16
      %v5465 = vpop.permute.xlu0 %5464
      %5466 = vrot.lane.b32.xlu0 %v5178, 16
      %v5467 = vpop.permute.xlu0 %5466
      %5468 = vrot.lane.b32.xlu0 %v5190, 16
      %v5469 = vpop.permute.xlu0 %5468
      %5470 = vrot.lane.b32.xlu0 %v5202, 16
      %v5471 = vpop.permute.xlu0 %5470
      %5472 = vrot.lane.b32.xlu0 %v5214, 16
      %v5473 = vpop.permute.xlu0 %5472
      %5474 = vrot.lane.b32.xlu0 %v5226, 16
      %v5475 = vpop.permute.xlu0 %5474
      %5476 = vrot.lane.b32.xlu0 %v5238, 16
      %v5477 = vpop.permute.xlu0 %5476
      %5478 = vrot.lane.b32.xlu0 %v5250, 16
      %v5479 = vpop.permute.xlu0 %5478
      %5480 = vrot.lane.b32.xlu0 %v5262, 16
      %v5481 = vpop.permute.xlu0 %5480
      %5482 = vrot.lane.b32.xlu0 %v5451, 16
      %v5483 = vpop.permute.xlu0 %5482
      %v5485 = vrot.slane %v5067, 1
      %v5486 = vrot.slane %v5068, 1
      %v5487 = vsel %vm854, %v5485, %v5486
      %5488 = vrot.lane.b32.xlu0 %v5332, 20
      %v5489 = vpop.permute.xlu0 %5488
      %5490 = vrot.lane.b32.xlu0 %v5335, 20
      %v5491 = vpop.permute.xlu0 %5490
      %5492 = vrot.lane.b32.xlu0 %v5338, 20
      %v5493 = vpop.permute.xlu0 %5492
      %5494 = vrot.lane.b32.xlu0 %v5341, 20
      %v5495 = vpop.permute.xlu0 %5494
      %5496 = vrot.lane.b32.xlu0 %v5344, 20
      %v5497 = vpop.permute.xlu0 %5496
      %5498 = vrot.lane.b32.xlu0 %v5347, 20
      %v5499 = vpop.permute.xlu0 %5498
      %5500 = vrot.lane.b32.xlu0 %v5350, 20
      %v5501 = vpop.permute.xlu0 %5500
      %5502 = vrot.lane.b32.xlu0 %v5353, 20
      %v5503 = vpop.permute.xlu0 %5502
      %5504 = vrot.lane.b32.xlu0 %v5356, 20
      %v5505 = vpop.permute.xlu0 %5504
      %5506 = vrot.lane.b32.xlu0 %v5359, 20
      %v5507 = vpop.permute.xlu0 %5506
      %5508 = vrot.lane.b32.xlu0 %v5362, 20
      %v5509 = vpop.permute.xlu0 %5508
      %5510 = vrot.lane.b32.xlu0 %v5365, 20
      %v5511 = vpop.permute.xlu0 %5510
      %5512 = vrot.lane.b32.xlu0 %v5368, 20
      %v5513 = vpop.permute.xlu0 %5512
      %5514 = vrot.lane.b32.xlu0 %v5371, 20
      %v5515 = vpop.permute.xlu0 %5514
      %5516 = vrot.lane.b32.xlu0 %v5374, 20
      %v5517 = vpop.permute.xlu0 %5516
      %5518 = vrot.lane.b32.xlu0 %v5487, 20
      %v5519 = vpop.permute.xlu0 %5518
      %5521 = vrot.lane.b32.xlu0 %v5039, 24
      %v5522 = vpop.permute.xlu0 %5521
      %5523 = vrot.lane.b32.xlu0 %v5041, 24
      %v5524 = vpop.permute.xlu0 %5523
      %5525 = vrot.lane.b32.xlu0 %v5043, 24
      %v5526 = vpop.permute.xlu0 %5525
      %5527 = vrot.lane.b32.xlu0 %v5045, 24
      %v5528 = vpop.permute.xlu0 %5527
      %5529 = vrot.lane.b32.xlu0 %v5047, 24
      %v5530 = vpop.permute.xlu0 %5529
      %5531 = vrot.lane.b32.xlu0 %v5049, 24
      %v5532 = vpop.permute.xlu0 %5531
      %5533 = vrot.lane.b32.xlu0 %v5051, 24
      %v5534 = vpop.permute.xlu0 %5533
      %5535 = vrot.lane.b32.xlu0 %v5053, 24
      %v5536 = vpop.permute.xlu0 %5535
      %5537 = vrot.lane.b32.xlu0 %v5055, 24
      %v5538 = vpop.permute.xlu0 %5537
      %5539 = vrot.lane.b32.xlu0 %v5057, 24
      %v5540 = vpop.permute.xlu0 %5539
      %5541 = vrot.lane.b32.xlu0 %v5059, 24
      %v5542 = vpop.permute.xlu0 %5541
      %5543 = vrot.lane.b32.xlu0 %v5061, 24
      %v5544 = vpop.permute.xlu0 %5543
      %5545 = vrot.lane.b32.xlu0 %v5063, 24
      %v5546 = vpop.permute.xlu0 %5545
      %5547 = vrot.lane.b32.xlu0 %v5065, 24
      %v5548 = vpop.permute.xlu0 %5547
      %5549 = vrot.lane.b32.xlu0 %v5067, 24
      %v5550 = vpop.permute.xlu0 %5549
      %5551 = vrot.lane.b32.xlu0 %v5069, 24
      %v5552 = vpop.permute.xlu0 %5551
      %v5554 = vshrl.u32 %v5069, 16
      %v5556 = vshll.u32 %v5069, 16
      %v5558 = vrot.slane %v5556, 1
      %v5559 = vor.u32 %v5554, %v5558
      %v5561 = vshll.u32 %v5070, 16
      %v5563 = vrot.slane %v5561, 1
      %v5564 = vsel %vm529, %v5559, %v5563
      %5565 = vrot.lane.b32.xlu0 %v5106, 28
      %v5566 = vpop.permute.xlu0 %5565
      %5567 = vrot.lane.b32.xlu0 %v5118, 28
      %v5568 = vpop.permute.xlu0 %5567
      %5569 = vrot.lane.b32.xlu0 %v5130, 28
      %v5570 = vpop.permute.xlu0 %5569
      %5571 = vrot.lane.b32.xlu0 %v5142, 28
      %v5572 = vpop.permute.xlu0 %5571
      %5573 = vrot.lane.b32.xlu0 %v5154, 28
      %v5574 = vpop.permute.xlu0 %5573
      %5575 = vrot.lane.b32.xlu0 %v5166, 28
      %v5576 = vpop.permute.xlu0 %5575
      %5577 = vrot.lane.b32.xlu0 %v5178, 28
      %v5578 = vpop.permute.xlu0 %5577
      %5579 = vrot.lane.b32.xlu0 %v5190, 28
      %v5580 = vpop.permute.xlu0 %5579
      %5581 = vrot.lane.b32.xlu0 %v5202, 28
      %v5582 = vpop.permute.xlu0 %5581
      %5583 = vrot.lane.b32.xlu0 %v5214, 28
      %v5584 = vpop.permute.xlu0 %5583
      %5585 = vrot.lane.b32.xlu0 %v5226, 28
      %v5586 = vpop.permute.xlu0 %5585
      %5587 = vrot.lane.b32.xlu0 %v5238, 28
      %v5588 = vpop.permute.xlu0 %5587
      %5589 = vrot.lane.b32.xlu0 %v5250, 28
      %v5590 = vpop.permute.xlu0 %5589
      %5591 = vrot.lane.b32.xlu0 %v5262, 28
      %v5592 = vpop.permute.xlu0 %5591
      %5593 = vrot.lane.b32.xlu0 %v5451, 28
      %v5594 = vpop.permute.xlu0 %5593
      %5595 = vrot.lane.b32.xlu0 %v5564, 28
      %v5596 = vpop.permute.xlu0 %5595
      %v5598 = vrot.slane %v5069, 1
      %v5599 = vrot.slane %v5070, 1
      %v5600 = vsel %vm854, %v5598, %v5599
      %5601 = vrot.lane.b32.xlu0 %v5335, 32
      %v5602 = vpop.permute.xlu0 %5601
      %5603 = vrot.lane.b32.xlu0 %v5338, 32
      %v5604 = vpop.permute.xlu0 %5603
      %5605 = vrot.lane.b32.xlu0 %v5341, 32
      %v5606 = vpop.permute.xlu0 %5605
      %5607 = vrot.lane.b32.xlu0 %v5344, 32
      %v5608 = vpop.permute.xlu0 %5607
      %5609 = vrot.lane.b32.xlu0 %v5347, 32
      %v5610 = vpop.permute.xlu0 %5609
      %5611 = vrot.lane.b32.xlu0 %v5350, 32
      %v5612 = vpop.permute.xlu0 %5611
      %5613 = vrot.lane.b32.xlu0 %v5353, 32
      %v5614 = vpop.permute.xlu0 %5613
      %5615 = vrot.lane.b32.xlu0 %v5356, 32
      %v5616 = vpop.permute.xlu0 %5615
      %5617 = vrot.lane.b32.xlu0 %v5359, 32
      %v5618 = vpop.permute.xlu0 %5617
      %5619 = vrot.lane.b32.xlu0 %v5362, 32
      %v5620 = vpop.permute.xlu0 %5619
      %5621 = vrot.lane.b32.xlu0 %v5365, 32
      %v5622 = vpop.permute.xlu0 %5621
      %5623 = vrot.lane.b32.xlu0 %v5368, 32
      %v5624 = vpop.permute.xlu0 %5623
      %5625 = vrot.lane.b32.xlu0 %v5371, 32
      %v5626 = vpop.permute.xlu0 %5625
      %5627 = vrot.lane.b32.xlu0 %v5374, 32
      %v5628 = vpop.permute.xlu0 %5627
      %5629 = vrot.lane.b32.xlu0 %v5487, 32
      %v5630 = vpop.permute.xlu0 %5629
      %5631 = vrot.lane.b32.xlu0 %v5600, 32
      %v5632 = vpop.permute.xlu0 %5631
      %v5634 = vsel %vm1463, %v5035, %v5264
      %v5636 = vsel %vm1463, %v5037, %v5266
      %v5638 = vsel %vm1463, %v5039, %v5268
      %v5640 = vsel %vm1463, %v5041, %v5270
      %v5642 = vsel %vm1463, %v5043, %v5272
      %v5644 = vsel %vm1463, %v5045, %v5274
      %v5646 = vsel %vm1463, %v5047, %v5276
      %v5648 = vsel %vm1463, %v5049, %v5278
      %v5650 = vsel %vm1463, %v5051, %v5280
      %v5652 = vsel %vm1463, %v5053, %v5282
      %v5654 = vsel %vm1463, %v5055, %v5284
      %v5656 = vsel %vm1463, %v5057, %v5286
      %v5658 = vsel %vm1463, %v5059, %v5288
      %v5660 = vsel %vm1463, %v5061, %v5290
      %v5662 = vsel %vm1463, %v5063, %v5292
      %v5664 = vsel %vm1463, %v5065, %v5294
      %v5666 = vsel %vm1536, %v5634, %v5376
      %v5668 = vsel %vm1536, %v5636, %v5378
      %v5670 = vsel %vm1536, %v5638, %v5380
      %v5672 = vsel %vm1536, %v5640, %v5382
      %v5674 = vsel %vm1536, %v5642, %v5384
      %v5676 = vsel %vm1536, %v5644, %v5386
      %v5678 = vsel %vm1536, %v5646, %v5388
      %v5680 = vsel %vm1536, %v5648, %v5390
      %v5682 = vsel %vm1536, %v5650, %v5392
      %v5684 = vsel %vm1536, %v5652, %v5394
      %v5686 = vsel %vm1536, %v5654, %v5396
      %v5688 = vsel %vm1536, %v5656, %v5398
      %v5690 = vsel %vm1536, %v5658, %v5400
      %v5692 = vsel %vm1536, %v5660, %v5402
      %v5694 = vsel %vm1536, %v5662, %v5404
      %v5696 = vsel %vm1536, %v5664, %v5406
      %v5698 = vsel %vm1609, %v5666, %v5409
      %v5700 = vsel %vm1609, %v5668, %v5411
      %v5702 = vsel %vm1609, %v5670, %v5413
      %v5704 = vsel %vm1609, %v5672, %v5415
      %v5706 = vsel %vm1609, %v5674, %v5417
      %v5708 = vsel %vm1609, %v5676, %v5419
      %v5710 = vsel %vm1609, %v5678, %v5421
      %v5712 = vsel %vm1609, %v5680, %v5423
      %v5714 = vsel %vm1609, %v5682, %v5425
      %v5716 = vsel %vm1609, %v5684, %v5427
      %v5718 = vsel %vm1609, %v5686, %v5429
      %v5720 = vsel %vm1609, %v5688, %v5431
      %v5722 = vsel %vm1609, %v5690, %v5433
      %v5724 = vsel %vm1609, %v5692, %v5435
      %v5726 = vsel %vm1609, %v5694, %v5437
      %v5728 = vsel %vm1609, %v5696, %v5439
      %v5730 = vsel %vm1682, %v5698, %v5453
      %v5732 = vsel %vm1682, %v5700, %v5455
      %v5734 = vsel %vm1682, %v5702, %v5457
      %v5736 = vsel %vm1682, %v5704, %v5459
      %v5738 = vsel %vm1682, %v5706, %v5461
      %v5740 = vsel %vm1682, %v5708, %v5463
      %v5742 = vsel %vm1682, %v5710, %v5465
      %v5744 = vsel %vm1682, %v5712, %v5467
      %v5746 = vsel %vm1682, %v5714, %v5469
      %v5748 = vsel %vm1682, %v5716, %v5471
      %v5750 = vsel %vm1682, %v5718, %v5473
      %v5752 = vsel %vm1682, %v5720, %v5475
      %v5754 = vsel %vm1682, %v5722, %v5477
      %v5756 = vsel %vm1682, %v5724, %v5479
      %v5758 = vsel %vm1682, %v5726, %v5481
      %v5760 = vsel %vm1682, %v5728, %v5483
      %v5762 = vsel %vm1755, %v5730, %v5489
      %v5764 = vsel %vm1755, %v5732, %v5491
      %v5766 = vsel %vm1755, %v5734, %v5493
      %v5768 = vsel %vm1755, %v5736, %v5495
      %v5770 = vsel %vm1755, %v5738, %v5497
      %v5772 = vsel %vm1755, %v5740, %v5499
      %v5774 = vsel %vm1755, %v5742, %v5501
      %v5776 = vsel %vm1755, %v5744, %v5503
      %v5778 = vsel %vm1755, %v5746, %v5505
      %v5780 = vsel %vm1755, %v5748, %v5507
      %v5782 = vsel %vm1755, %v5750, %v5509
      %v5784 = vsel %vm1755, %v5752, %v5511
      %v5786 = vsel %vm1755, %v5754, %v5513
      %v5788 = vsel %vm1755, %v5756, %v5515
      %v5790 = vsel %vm1755, %v5758, %v5517
      %v5792 = vsel %vm1755, %v5760, %v5519
      %v5794 = vsel %vm1828, %v5762, %v5522
      %v5796 = vsel %vm1828, %v5764, %v5524
      %v5798 = vsel %vm1828, %v5766, %v5526
      %v5800 = vsel %vm1828, %v5768, %v5528
      %v5802 = vsel %vm1828, %v5770, %v5530
      %v5804 = vsel %vm1828, %v5772, %v5532
      %v5806 = vsel %vm1828, %v5774, %v5534
      %v5808 = vsel %vm1828, %v5776, %v5536
      %v5810 = vsel %vm1828, %v5778, %v5538
      %v5812 = vsel %vm1828, %v5780, %v5540
      %v5814 = vsel %vm1828, %v5782, %v5542
      %v5816 = vsel %vm1828, %v5784, %v5544
      %v5818 = vsel %vm1828, %v5786, %v5546
      %v5820 = vsel %vm1828, %v5788, %v5548
      %v5822 = vsel %vm1828, %v5790, %v5550
      %v5824 = vsel %vm1828, %v5792, %v5552
      %v5826 = vsel %vm1901, %v5794, %v5566
      %v5828 = vsel %vm1901, %v5796, %v5568
      %v5830 = vsel %vm1901, %v5798, %v5570
      %v5832 = vsel %vm1901, %v5800, %v5572
      %v5834 = vsel %vm1901, %v5802, %v5574
      %v5836 = vsel %vm1901, %v5804, %v5576
      %v5838 = vsel %vm1901, %v5806, %v5578
      %v5840 = vsel %vm1901, %v5808, %v5580
      %v5842 = vsel %vm1901, %v5810, %v5582
      %v5844 = vsel %vm1901, %v5812, %v5584
      %v5846 = vsel %vm1901, %v5814, %v5586
      %v5848 = vsel %vm1901, %v5816, %v5588
      %v5850 = vsel %vm1901, %v5818, %v5590
      %v5852 = vsel %vm1901, %v5820, %v5592
      %v5854 = vsel %vm1901, %v5822, %v5594
      %v5856 = vsel %vm1901, %v5824, %v5596
      %v5858 = vsel %vm1974, %v5826, %v5602
      %v5860 = vsel %vm1974, %v5828, %v5604
      %v5862 = vsel %vm1974, %v5830, %v5606
      %v5864 = vsel %vm1974, %v5832, %v5608
      %v5866 = vsel %vm1974, %v5834, %v5610
      %v5868 = vsel %vm1974, %v5836, %v5612
      %v5870 = vsel %vm1974, %v5838, %v5614
      %v5872 = vsel %vm1974, %v5840, %v5616
      %v5874 = vsel %vm1974, %v5842, %v5618
      %v5876 = vsel %vm1974, %v5844, %v5620
      %v5878 = vsel %vm1974, %v5846, %v5622
      %v5880 = vsel %vm1974, %v5848, %v5624
      %v5882 = vsel %vm1974, %v5850, %v5626
      %v5884 = vsel %vm1974, %v5852, %v5628
      %v5886 = vsel %vm1974, %v5854, %v5630
      %v5888 = vsel %vm1974, %v5856, %v5632
      %v5889 = vld [vmem:[%s5] sm:$0xf]
      %v5890 = vld [vmem:[%s5 + $0x4] sm:$0xf]
      %v5891 = vld [vmem:[%s5 + $0x8] sm:$0xf]
      %v5892 = vld [vmem:[%s5 + $0xc] sm:$0xf]
      %v5893 = vld [vmem:[%s5 + $0x10] sm:$0x3]
      %v5894 = vld [vmem:[%s6] sm:$0x1]
      %v5896 = vlaneseq
      %v5897 = vshrl.u32 %v5896, 7
      %v5898 = vsub.s32 0, %v5897
      %v5899 = vrot.slane %v5894, %v5898
      %v5906 = vunpack.c.l.b16 %v5889
      %v5907 = vunpack.c.l.b16 %v5890
      %v5908 = vunpack.c.l.b16 %v5891
      %v5909 = vunpack.c.l.b16 %v5892
      %v5910 = vunpack.c.l.b16 %v5893
      %v5911 = vpack.c.b16 %v5907, %v5906
      %v5912 = vpack.c.b16 %v5909, %v5908
      %v5913 = vpack.c.b16 %v5910, %v5910
      %v5916 = vsel %vm4144, %v5858, 0
      %v5918 = vsel %vm4144, %v5860, 0
      %v5920 = vsel %vm4144, %v5862, 0
      %v5922 = vsel %vm4144, %v5864, 0
      %v5924 = vsel %vm4144, %v5866, 0
      %v5926 = vsel %vm4144, %v5868, 0
      %v5928 = vsel %vm4144, %v5870, 0
      %v5930 = vsel %vm4144, %v5872, 0
      %v5932 = vsel %vm4144, %v5874, 0
      %v5934 = vsel %vm4144, %v5876, 0
      %v5936 = vsel %vm4144, %v5878, 0
      %v5938 = vsel %vm4144, %v5880, 0
      %v5940 = vsel %vm4144, %v5882, 0
      %v5942 = vsel %vm4144, %v5884, 0
      %v5944 = vsel %vm4144, %v5886, 0
      %v5946 = vsel %vm4144, %v5888, 0
      %v5949 = vsel %vm4199, %v5913, 0
      %5951 = vmatprep.subr.bf16.mxu0 0
      %5952 = vmatpush1.bf16.msra.mxu0 0
      %5953 = vmatprep.subr.bf16.mxu0 0
      %5954 = vmatpush1.bf16.msra.mxu0 0
      %5955 = vmatprep.subr.bf16.mxu0 0
      %5956 = vmatpush1.bf16.msra.mxu0 0
      %5957 = vmatprep.subr.bf16.mxu0 0
      %5958 = vmatpush1.bf16.msra.mxu0 0
      %5959 = vmatprep.subr.bf16.mxu0 0
      %5960 = vmatpush1.bf16.msra.mxu0 0
      %5961 = vmatprep.subr.bf16.mxu0 0
      %5962 = vmatpush1.bf16.msra.mxu0 %v5949
      %5963 = vmatprep.subr.bf16.mxu0 0
      %5964 = vmatpush1.bf16.msra.mxu0 %v5912
      %5965 = vmatprep.subr.bf16.mxu0 0
      %5966 = vmatpush1.bf16.msra.mxu0 %v5911
      %5967 = vmatprep.subr.bf16.mxu0 0
      %5968 = vmatpush2.bf16.msra.mxu0 0
      %5969 = vmatprep.subr.bf16.mxu0 0
      %5970 = vmatpush2.bf16.msra.mxu0 0
      %5971 = vmatprep.subr.bf16.mxu0 0
      %5972 = vmatpush2.bf16.msra.mxu0 0
      %5973 = vmatprep.subr.bf16.mxu0 0
      %5974 = vmatpush2.bf16.msra.mxu0 0
      %5975 = vmatprep.subr.bf16.mxu0 0
      %5976 = vmatpush2.bf16.msra.mxu0 0
      %5977 = vmatprep.subr.bf16.mxu0 0
      %5978 = vmatpush2.bf16.msra.mxu0 0
      %5979 = vmatprep.subr.bf16.mxu0 0
      %5980 = vmatpush2.bf16.msra.mxu0 0
      %5981 = vmatprep.subr.bf16.mxu0 0
      %5982 = vmatpush2.bf16.msra.mxu0 0
      %5983 = vmatprep.mubr.bf16.mxu0 0
      %5984 = vmatmul.mubr.bf16.gmra.mxu0 %v5916
      %v5985 = vpop.f32.mrf.mxu0
      %v5986 = vadd.f32 %v5899, %v5985
      %v5987 = vpop.f32.mrf.mxu0
      %v5988 = vpop.f32.mrf.mxu0
      %v5989 = vadd.f32 %v5899, %v5988
      %v5990 = vpop.f32.mrf.mxu0
      %5991 = vmatprep.mubr.bf16.mxu0 0
      %5992 = vmatmul.mubr.bf16.gmra.mxu0 %v5918
      %v5993 = vpop.f32.mrf.mxu0
      %v5994 = vadd.f32 %v5899, %v5993
      %v5995 = vpop.f32.mrf.mxu0
      %v5996 = vpop.f32.mrf.mxu0
      %v5997 = vadd.f32 %v5899, %v5996
      %v5998 = vpop.f32.mrf.mxu0
      %5999 = vmatprep.mubr.bf16.mxu0 0
      %6000 = vmatmul.mubr.bf16.gmra.mxu0 %v5920
      %v6001 = vpop.f32.mrf.mxu0
      %v6002 = vadd.f32 %v5899, %v6001
      %v6003 = vpop.f32.mrf.mxu0
      %v6004 = vpop.f32.mrf.mxu0
      %v6005 = vadd.f32 %v5899, %v6004
      %v6006 = vpop.f32.mrf.mxu0
      %6007 = vmatprep.mubr.bf16.mxu0 0
      %6008 = vmatmul.mubr.bf16.gmra.mxu0 %v5922
      %v6009 = vpop.f32.mrf.mxu0
      %v6010 = vadd.f32 %v5899, %v6009
      %v6011 = vpop.f32.mrf.mxu0
      %v6012 = vpop.f32.mrf.mxu0
      %v6013 = vadd.f32 %v5899, %v6012
      %v6014 = vpop.f32.mrf.mxu0
      %6015 = vmatprep.mubr.bf16.mxu0 0
      %6016 = vmatmul.mubr.bf16.gmra.mxu0 %v5924
      %v6017 = vpop.f32.mrf.mxu0
      %v6018 = vadd.f32 %v5899, %v6017
      %v6019 = vpop.f32.mrf.mxu0
      %v6020 = vpop.f32.mrf.mxu0
      %v6021 = vadd.f32 %v5899, %v6020
      %v6022 = vpop.f32.mrf.mxu0
      %6023 = vmatprep.mubr.bf16.mxu0 0
      %6024 = vmatmul.mubr.bf16.gmra.mxu0 %v5926
      %v6025 = vpop.f32.mrf.mxu0
      %v6026 = vadd.f32 %v5899, %v6025
      %v6027 = vpop.f32.mrf.mxu0
      %v6028 = vpop.f32.mrf.mxu0
      %v6029 = vadd.f32 %v5899, %v6028
      %v6030 = vpop.f32.mrf.mxu0
      %6031 = vmatprep.mubr.bf16.mxu0 0
      %6032 = vmatmul.mubr.bf16.gmra.mxu0 %v5928
      %v6033 = vpop.f32.mrf.mxu0
      %v6034 = vadd.f32 %v5899, %v6033
      %v6035 = vpop.f32.mrf.mxu0
      %v6036 = vpop.f32.mrf.mxu0
      %v6037 = vadd.f32 %v5899, %v6036
      %v6038 = vpop.f32.mrf.mxu0
      %6039 = vmatprep.mubr.bf16.mxu0 0
      %6040 = vmatmul.mubr.bf16.gmra.mxu0 %v5930
      %v6041 = vpop.f32.mrf.mxu0
      %v6042 = vadd.f32 %v5899, %v6041
      %v6043 = vpop.f32.mrf.mxu0
      %v6044 = vpop.f32.mrf.mxu0
      %v6045 = vadd.f32 %v5899, %v6044
      %v6046 = vpop.f32.mrf.mxu0
      %6047 = vmatprep.mubr.bf16.mxu0 0
      %6048 = vmatmul.mubr.bf16.gmra.mxu0 %v5932
      %v6049 = vpop.f32.mrf.mxu0
      %v6050 = vadd.f32 %v5899, %v6049
      %v6051 = vpop.f32.mrf.mxu0
      %v6052 = vpop.f32.mrf.mxu0
      %v6053 = vadd.f32 %v5899, %v6052
      %v6054 = vpop.f32.mrf.mxu0
      %6055 = vmatprep.mubr.bf16.mxu0 0
      %6056 = vmatmul.mubr.bf16.gmra.mxu0 %v5934
      %v6057 = vpop.f32.mrf.mxu0
      %v6058 = vadd.f32 %v5899, %v6057
      %v6059 = vpop.f32.mrf.mxu0
      %v6060 = vpop.f32.mrf.mxu0
      %v6061 = vadd.f32 %v5899, %v6060
      %v6062 = vpop.f32.mrf.mxu0
      %6063 = vmatprep.mubr.bf16.mxu0 0
      %6064 = vmatmul.mubr.bf16.gmra.mxu0 %v5936
      %v6065 = vpop.f32.mrf.mxu0
      %v6066 = vadd.f32 %v5899, %v6065
      %v6067 = vpop.f32.mrf.mxu0
      %v6068 = vpop.f32.mrf.mxu0
      %v6069 = vadd.f32 %v5899, %v6068
      %v6070 = vpop.f32.mrf.mxu0
      %6071 = vmatprep.mubr.bf16.mxu0 0
      %6072 = vmatmul.mubr.bf16.gmra.mxu0 %v5938
      %v6073 = vpop.f32.mrf.mxu0
      %v6074 = vadd.f32 %v5899, %v6073
      %v6075 = vpop.f32.mrf.mxu0
      %v6076 = vpop.f32.mrf.mxu0
      %v6077 = vadd.f32 %v5899, %v6076
      %v6078 = vpop.f32.mrf.mxu0
      %6079 = vmatprep.mubr.bf16.mxu0 0
      %6080 = vmatmul.mubr.bf16.gmra.mxu0 %v5940
      %v6081 = vpop.f32.mrf.mxu0
      %v6082 = vadd.f32 %v5899, %v6081
      %v6083 = vpop.f32.mrf.mxu0
      %v6084 = vpop.f32.mrf.mxu0
      %v6085 = vadd.f32 %v5899, %v6084
      %v6086 = vpop.f32.mrf.mxu0
      %6087 = vmatprep.mubr.bf16.mxu0 0
      %6088 = vmatmul.mubr.bf16.gmra.mxu0 %v5942
      %v6089 = vpop.f32.mrf.mxu0
      %v6090 = vadd.f32 %v5899, %v6089
      %v6091 = vpop.f32.mrf.mxu0
      %v6092 = vpop.f32.mrf.mxu0
      %v6093 = vadd.f32 %v5899, %v6092
      %v6094 = vpop.f32.mrf.mxu0
      %6095 = vmatprep.mubr.bf16.mxu0 0
      %6096 = vmatmul.mubr.bf16.gmra.mxu0 %v5944
      %v6097 = vpop.f32.mrf.mxu0
      %v6098 = vadd.f32 %v5899, %v6097
      %v6099 = vpop.f32.mrf.mxu0
      %v6100 = vpop.f32.mrf.mxu0
      %v6101 = vadd.f32 %v5899, %v6100
      %v6102 = vpop.f32.mrf.mxu0
      %6103 = vmatprep.mubr.bf16.mxu0 0
      %6104 = vmatmul.mubr.bf16.gmra.mxu0 %v5946
      %v6105 = vpop.f32.mrf.mxu0
      %v6106 = vadd.f32 %v5899, %v6105
      %v6107 = vpop.f32.mrf.mxu0
      %v6108 = vpop.f32.mrf.mxu0
      %v6109 = vadd.f32 %v5899, %v6108
      %v6110 = vpop.f32.mrf.mxu0
      %6111 = vdwg.mxu0
      %v6112 = vmax.f32 %v5986, 0.0
      %v6113 = vmax.f32 %v5989, 0.0
      %v6114 = vmax.f32 %v5994, 0.0
      %v6115 = vmax.f32 %v5997, 0.0
      %v6116 = vmax.f32 %v6002, 0.0
      %v6117 = vmax.f32 %v6005, 0.0
      %v6118 = vmax.f32 %v6010, 0.0
      %v6119 = vmax.f32 %v6013, 0.0
      %v6120 = vmax.f32 %v6018, 0.0
      %v6121 = vmax.f32 %v6021, 0.0
      %v6122 = vmax.f32 %v6026, 0.0
      %v6123 = vmax.f32 %v6029, 0.0
      %v6124 = vmax.f32 %v6034, 0.0
      %v6125 = vmax.f32 %v6037, 0.0
      %v6126 = vmax.f32 %v6042, 0.0
      %v6127 = vmax.f32 %v6045, 0.0
      %v6128 = vmax.f32 %v6050, 0.0
      %v6129 = vmax.f32 %v6053, 0.0
      %v6130 = vmax.f32 %v6058, 0.0
      %v6131 = vmax.f32 %v6061, 0.0
      %v6132 = vmax.f32 %v6066, 0.0
      %v6133 = vmax.f32 %v6069, 0.0
      %v6134 = vmax.f32 %v6074, 0.0
      %v6135 = vmax.f32 %v6077, 0.0
      %v6136 = vmax.f32 %v6082, 0.0
      %v6137 = vmax.f32 %v6085, 0.0
      %v6138 = vmax.f32 %v6090, 0.0
      %v6139 = vmax.f32 %v6093, 0.0
      %v6140 = vmax.f32 %v6098, 0.0
      %v6141 = vmax.f32 %v6101, 0.0
      %v6142 = vmax.f32 %v6106, 0.0
      %v6143 = vmax.f32 %v6109, 0.0
      %6144 = vst.msk [vmem:[%s322] sm:$0xff] %vm1463, %v6112
      %6145 = vst.msk [vmem:[%s322 + $0x8] sm:$0xff] %vm1463, %v6113
      %6146 = vst.msk [vmem:[%s322 + $0x10] sm:$0xff] %vm1463, %v6114
      %6147 = vst.msk [vmem:[%s322 + $0x18] sm:$0xff] %vm1463, %v6115
      %6148 = vst.msk [vmem:[%s322 + $0x20] sm:$0xff] %vm1463, %v6116
      %6149 = vst.msk [vmem:[%s322 + $0x28] sm:$0xff] %vm1463, %v6117
      %6150 = vst.msk [vmem:[%s322 + $0x30] sm:$0xff] %vm1463, %v6118
      %6151 = vst.msk [vmem:[%s322 + $0x38] sm:$0xff] %vm1463, %v6119
      %6152 = vst.msk [vmem:[%s322 + $0x40] sm:$0xff] %vm1463, %v6120
      %6153 = vst.msk [vmem:[%s322 + $0x48] sm:$0xff] %vm1463, %v6121
      %6154 = vst.msk [vmem:[%s322 + $0x50] sm:$0xff] %vm1463, %v6122
      %6155 = vst.msk [vmem:[%s322 + $0x58] sm:$0xff] %vm1463, %v6123
      %6156 = vst.msk [vmem:[%s322 + $0x60] sm:$0xff] %vm1463, %v6124
      %6157 = vst.msk [vmem:[%s322 + $0x68] sm:$0xff] %vm1463, %v6125
      %6158 = vst.msk [vmem:[%s322 + $0x70] sm:$0xff] %vm1463, %v6126
      %6159 = vst.msk [vmem:[%s322 + $0x78] sm:$0xff] %vm1463, %v6127
      %6160 = vst.msk [vmem:[%s322 + $0x80] sm:$0xff] %vm1463, %v6128
      %6161 = vst.msk [vmem:[%s322 + $0x88] sm:$0xff] %vm1463, %v6129
      %6162 = vst.msk [vmem:[%s322 + $0x90] sm:$0xff] %vm1463, %v6130
      %6163 = vst.msk [vmem:[%s322 + $0x98] sm:$0xff] %vm1463, %v6131
      %6164 = vst.msk [vmem:[%s322 + $0xa0] sm:$0xff] %vm1463, %v6132
      %6165 = vst.msk [vmem:[%s322 + $0xa8] sm:$0xff] %vm1463, %v6133
      %6166 = vst.msk [vmem:[%s322 + $0xb0] sm:$0xff] %vm1463, %v6134
      %6167 = vst.msk [vmem:[%s322 + $0xb8] sm:$0xff] %vm1463, %v6135
      %6168 = vst.msk [vmem:[%s322 + $0xc0] sm:$0xff] %vm1463, %v6136
      %6169 = vst.msk [vmem:[%s322 + $0xc8] sm:$0xff] %vm1463, %v6137
      %6170 = vst.msk [vmem:[%s322 + $0xd0] sm:$0xff] %vm1463, %v6138
      %6171 = vst.msk [vmem:[%s322 + $0xd8] sm:$0xff] %vm1463, %v6139
      %6172 = vst.msk [vmem:[%s322 + $0xe0] sm:$0xff] %vm1463, %v6140
      %6173 = vst.msk [vmem:[%s322 + $0xe8] sm:$0xff] %vm1463, %v6141
      %6174 = vst.msk [vmem:[%s322 + $0xf0] sm:$0xff] %vm1463, %v6142
      %6175 = vst.msk [vmem:[%s322 + $0xf8] sm:$0xff] %vm1463, %v6143
      %s6176 = smul.u32 16, %s23
      %p6177 = scmp.lt.s32.totalorder %s22, 1
      %s6178 = scalar_select %p6177, %s22, 1
      %p6179 = scmp.lt.s32.totalorder %s6176, 15
      %s6180 = scalar_select %p6179, %s6176, 15
      %s6181 = smul.addr %s6180, 2
      %s6182 = smul.addr %s6178, 32
      %s6183 = sadd.s32 %s6181, %s6182
      %s6184 = smul.addr %s6183, 8
      %s6185 = scalar_lea.vmem %s7, %s6184
      // Predicated region
      $region49: #{unet_up_forward.1} parent=47 // pred_check
        %p6186 = pneg %p207
      $region50: #{unet_up_forward.1} parent=47 // pred_check_branch
        %6188 = sbr.rel (%p6186) target = $region52
      $region51: #{unet_up_forward.1} parent=47 // pred_region
        %s6189 = smul.u32 16, %s23
      $region52: #{unet_up_forward.1} parent=47 // pred_fallthru
        _
    $region48: #{unet_up_forward.1} parent=5 // pred_fallthru
      _
    %p6190 = scmp.le.s32.totalorder 2, %s13
    // Predicated region
    $region53: #{unet_up_forward.1} parent=5 // pred_check
      %p6191 = pneg %p6190
    $region54: #{unet_up_forward.1} parent=5 // pred_check_branch
      %6193 = sbr.rel (%p6191) target = $region56
    $region55: #{unet_up_forward.1} parent=5 // pred_region
      %s6194 = ssub.s32 %s13, 2
      // Predicated region
      $region57: #{unet_up_forward.1} parent=55 // pred_check
        %p6195 = pneg %p213
      $region58: #{unet_up_forward.1} parent=55 // pred_check_branch
        %6197 = sbr.rel (%p6195) target = $region60
      $region59: #{unet_up_forward.1} parent=55 // pred_region
        %s6198 = smul.u32 16, %s25
        %p6199 = scmp.lt.s32.totalorder %s24, 1
        %s6200 = scalar_select %p6199, %s24, 1
        %p6201 = scmp.lt.s32.totalorder %s6198, 15
        %s6202 = scalar_select %p6201, %s6198, 15
        %s6203 = smul.addr %s6202, 2
        %s6204 = smul.addr %s6200, 32
        %s6205 = sadd.s32 %s6203, %s6204
        %s6206 = smul.addr %s6205, 8
        %s6207 = scalar_lea.vmem %s7, %s6206
      $region60: #{unet_up_forward.1} parent=55 // pred_fallthru
        _
    $region56: #{unet_up_forward.1} parent=5 // pred_fallthru
      _
  $region6: #{unet_up_forward.1} parent=0 // loop_footer
    %s17 = sadd.s32 1, %s13
  $region7: #{unet_up_forward.1} parent=0 // loop_footer_branch
    %12 = sbr.rel target = $region3
  $region8: #{unet_up_forward.1} parent=0 // loop_exit
    _

</llo_original>
